<compile_context>
chip_gen: v5e
topology: v5e:2x2
jax: 0.10.0
libtpu: 0.0.40
codegen_flags: <defaults>
</compile_context>

<pallas_src>
import jax
import jax.numpy as jnp
from jax.experimental import pallas as pl
from jax.experimental.pallas import tpu as pltpu

BN_EPS = 1e-5


def _round_up(v, m):
    return (v + m - 1) // m * m


def _conv_geometry(config):
    """Static per-conv-layer geometry of the flattened padded-grid layout."""
    geom = []
    c_in = config['in_channels']
    h, w = config['img_size']
    for (c_out, k, pad), pool in zip(config['conv_layers'], config['pool_layers']):
        hp, wp = h + 2 * pad, w + 2 * pad
        ho, wo = hp - k + 1, wp - k + 1                  # stride-1 conv
        m_rows = _round_up((ho - 1) * wp + wo, 8)        # conv-output buffer rows
        s_max = (k - 1) * wp + (k - 1)                   # largest shifted-slice offset
        r_in = _round_up(max(hp * wp, s_max + m_rows), 8)  # input buffer rows
        if pool:
            # TODO(synk): generalize to pool sizes other than 2 / odd maps.
            assert pool == 2 and ho % 2 == 0 and wo % 2 == 0
            h_out, w_out = ho // 2, wo // 2
        else:
            h_out, w_out = ho, wo
        geom.append(dict(c_in=c_in, c_out=c_out, k=k, pad=pad, pool=pool,
                         hp=hp, wp=wp, ho=ho, wo=wo,
                         m_rows=m_rows, r_in=r_in, h_out=h_out, w_out=w_out))
        c_in, h, w = c_out, h_out, w_out
    feature_dim = c_in * h * w
    return geom, feature_dim


def _make_kernel(config, geom):
    leak = config['leak']
    n_conv = len(geom)
    n_lstm = config['lstm_layers']
    n_fc = len(config['fc_layers'])

    def kernel(*refs):
        it = iter(refs)
        x_ref = next(it)
        conv_p = [(next(it), next(it), next(it)) for _ in range(n_conv)]
        lstm_p = [tuple(next(it) for _ in range(6)) for _ in range(n_lstm)]
        fc_p = [(next(it), next(it), next(it)) for _ in range(n_fc)]
        w_out_ref, b_out_ref = next(it), next(it)
        out_ref = next(it)
        y_bufs = [next(it) for _ in range(n_conv)]
        x_bufs = [next(it) for _ in range(n_conv - 1)]
        xl_ref = next(it)

        # ---------------- conv + BN + LeakyReLU (+ 2x2 max-pool) stack --------
        cur = x_ref                              # current layer's padded input
        for li, g in enumerate(geom):
            w_ref, sc_ref, sh_ref = conv_p[li]
            y_ref = y_bufs[li]
            k, wp, m = g['k'], g['wp'], g['m_rows']

            # conv = sum over k*k taps of shifted (rows, Cin) x (Cin, Cout)
            # matmuls; MXU inputs in bf16, accumulation in f32.
            acc = None
            for di in range(k):
                for dj in range(k):
                    a = cur[pl.ds(di * wp + dj, m), :].astype(jnp.bfloat16)
                    d = jnp.dot(a, w_ref[di * k + dj],
                                preferred_element_type=jnp.float32)
                    acc = d if acc is None else acc + d
            y = acc * sc_ref[...] + sh_ref[...]          # folded BN + conv bias
            y_ref[...] = jnp.where(y >= 0, y, leak * y)  # LeakyReLU (f32)

            if li < n_conv - 1:
                # Build next layer's zero-padded flattened input in VMEM.
                ng = geom[li + 1]
                nxt = x_bufs[li]
                nxt[...] = jnp.zeros(nxt.shape, nxt.dtype)
                if g['pool']:
                    wo_, hh, wh = g['wo'], g['h_out'], g['w_out']
                    # 0/1 matrix selecting every other column-max: the 2x2-pool
                    # compaction is linear once the elementwise maxes are taken.
                    rr = jax.lax.broadcasted_iota(jnp.int32, (wh, wo_ - 1), 0)
                    cc = jax.lax.broadcasted_iota(jnp.int32, (wh, wo_ - 1), 1)
                    sel = (cc == 2 * rr).astype(jnp.float32)
                    for ip in range(hh):
                        r0 = (2 * ip) * wp
                        r1 = (2 * ip + 1) * wp
                        v = jnp.maximum(
                            jnp.maximum(y_ref[r0:r0 + wo_ - 1, :],
                                        y_ref[r0 + 1:r0 + wo_, :]),
                            jnp.maximum(y_ref[r1:r1 + wo_ - 1, :],
                                        y_ref[r1 + 1:r1 + wo_, :]))
                        pooled = jnp.dot(sel, v, preferred_element_type=jnp.float32)
                        dst = (ip + ng['pad']) * ng['wp'] + ng['pad']
                        nxt[dst:dst + wh, :] = pooled
                else:
                    for i in range(g['ho']):
                        dst = (i + ng['pad']) * ng['wp'] + ng['pad']
                        nxt[dst:dst + g['wo'], :] = y_ref[i * wp:i * wp + g['wo'], :]
                cur = nxt
            else:
                # Flatten (spatial-major, channel-minor) into the LSTM input row.
                c_out, wflat = g['c_out'], g['w_out']
                for ip in range(g['h_out']):
                    for jp in range(wflat):
                        if g['pool']:
                            b0 = (2 * ip) * wp + 2 * jp
                            v = jnp.maximum(
                                jnp.maximum(y_ref[b0:b0 + 1, :],
                                            y_ref[b0 + 1:b0 + 2, :]),
                                jnp.maximum(y_ref[b0 + wp:b0 + wp + 1, :],
                                            y_ref[b0 + wp + 1:b0 + wp + 2, :]))
                        else:
                            b0 = ip * wp + jp
                            v = y_ref[b0:b0 + 1, :]
                        s = ip * wflat + jp
                        xl_ref[:, s * c_out:(s + 1) * c_out] = v

        # ---------------- single-step LSTM stack (h0 = c0 = 0) ----------------
        # gates = x @ W_ih^T + (b_ih + b_hh); W_hh and the forget gate are dead.
        h = xl_ref[...]                                   # (1, feature_dim) f32
        for (w_i, w_g, w_o, b_i, b_g, b_o) in lstm_p:
            hb = h.astype(jnp.bfloat16)
            gi = jnp.dot(hb, w_i[...], preferred_element_type=jnp.float32) + b_i[...]
            gg = jnp.dot(hb, w_g[...], preferred_element_type=jnp.float32) + b_g[...]
            go = jnp.dot(hb, w_o[...], preferred_element_type=jnp.float32) + b_o[...]
            c = jax.nn.sigmoid(gi) * jnp.tanh(gg)
            h = jax.nn.sigmoid(go) * jnp.tanh(c)

        # -------- FC (+folded BN + LeakyReLU) stack; Dropout == identity ------
        z = h
        for (wfc_ref, sc_ref, sh_ref) in fc_p:
            zz = jnp.dot(z.astype(jnp.bfloat16), wfc_ref[...],
                         preferred_element_type=jnp.float32)
            zz = zz * sc_ref[...] + sh_ref[...]
            z = jnp.where(zz >= 0, zz, leak * zz)

        # ---------------- output head + log_softmax ---------------------------
        y = jnp.dot(z.astype(jnp.bfloat16), w_out_ref[...],
                    preferred_element_type=jnp.float32) + b_out_ref[...]
        y = y - jnp.max(y, axis=-1, keepdims=True)
        out_ref[0] = y - jnp.log(jnp.sum(jnp.exp(y), axis=-1, keepdims=True))

    return kernel


def make_forward(config):
    geom, feature_dim = _conv_geometry(config)
    kernel = _make_kernel(config, geom)
    n_class = config['output_size']

    def forward(x, operands):
        n, c, _, _ = x.shape
        g0 = geom[0]
        # One-time NCHW -> flattened zero-padded grid (rows = i*Wp+j, lanes = C).
        xp = jnp.pad(x, ((0, 0), (0, 0), (g0['pad'],) * 2, (g0['pad'],) * 2))
        xp = xp.transpose(0, 2, 3, 1).reshape(n, g0['hp'] * g0['wp'], c)
        xp = jnp.pad(xp, ((0, 0), (0, g0['r_in'] - g0['hp'] * g0['wp']), (0, 0)))
        xp = xp.reshape(n * g0['r_in'], c)

        in_specs = [pl.BlockSpec((g0['r_in'], c), lambda b: (b, 0))]
        for op in operands:
            in_specs.append(pl.BlockSpec(op.shape, lambda b, nd=op.ndim: (0,) * nd))

        scratch = [pltpu.VMEM((g['m_rows'], g['c_out']), jnp.float32) for g in geom]
        scratch += [pltpu.VMEM((geom[i + 1]['r_in'], geom[i + 1]['c_in']), jnp.float32)
                    for i in range(len(geom) - 1)]
        scratch += [pltpu.VMEM((1, feature_dim), jnp.float32)]

        out = pl.pallas_call(
            kernel,
            out_shape=jax.ShapeDtypeStruct((n, 1, n_class), jnp.float32),
            grid=(n,),
            in_specs=in_specs,
            out_specs=pl.BlockSpec((1, 1, n_class), lambda b: (b, 0, 0)),
            scratch_shapes=scratch,
            compiler_params=pltpu.CompilerParams(
                dimension_semantics=("parallel",)),
        )(xp, *operands)
        return out.reshape(n, n_class)

    return jax.jit(forward), geom, feature_dim


# ----------------------------- parameters -----------------------------------

def make_params(config, key):
    keys = iter(jax.random.split(key, 128))

    def nrm(shape, scale=0.1):
        return (scale * jax.random.normal(next(keys), shape)).astype(jnp.float32)

    params = {'conv': []}
    in_c = config['in_channels']
    for (out_c, k, _pad), _pool in zip(config['conv_layers'], config['pool_layers']):
        params['conv'].append(dict(
            w=nrm((out_c, in_c, k, k)), b=nrm((out_c,)),
            gamma=jnp.ones((out_c,), jnp.float32), beta=jnp.zeros((out_c,), jnp.float32),
            mean=jnp.zeros((out_c,), jnp.float32), var=jnp.ones((out_c,), jnp.float32)))
        in_c = out_c

    _geom, feature_dim = _conv_geometry(config)
    hidden = config['lstm_hidden_size']
    params['lstm'] = []
    lstm_in = feature_dim
    for _ in range(config['lstm_layers']):
        # W_hh is never materialized: with seq_len == 1 and zero initial state
        # it does not contribute to the forward pass.
        params['lstm'].append(dict(w_ih=nrm((4 * hidden, lstm_in)),
                                   b_ih=nrm((4 * hidden,)), b_hh=nrm((4 * hidden,))))
        lstm_in = hidden

    params['fc'] = []
    in_dim = hidden
    for out_dim in config['fc_layers']:
        params['fc'].append(dict(
            w=nrm((out_dim, in_dim)), b=nrm((out_dim,)),
            gamma=jnp.ones((out_dim,), jnp.float32), beta=jnp.zeros((out_dim,), jnp.float32),
            mean=jnp.zeros((out_dim,), jnp.float32), var=jnp.ones((out_dim,), jnp.float32)))
        in_dim = out_dim
    params['out'] = dict(w=nrm((config['output_size'], in_dim)),
                         b=nrm((config['output_size'],)))
    return params


def prepare_operands(params, config):
    """Fold BN into scale/shift, reshape conv weights to per-tap (Cin, Cout)
    matrices, drop the dead LSTM forget gate, permute W_ih to the kernel's
    spatial-major flatten order, and cast all matmul weights to bf16."""
    geom, _ = _conv_geometry(config)
    hidden = config['lstm_hidden_size']

    def bn_fold(b, gamma, beta, mean, var):
        scale = gamma / jnp.sqrt(var + BN_EPS)
        shift = scale * (b - mean) + beta
        return (scale.reshape(1, -1).astype(jnp.float32),
                shift.reshape(1, -1).astype(jnp.float32))

    ops = []
    for cp, g in zip(params['conv'], geom):
        wk = jnp.transpose(cp['w'], (2, 3, 1, 0))          # (k, k, Cin, Cout)
        wk = wk.reshape(g['k'] * g['k'], g['c_in'], g['c_out']).astype(jnp.bfloat16)
        scale, shift = bn_fold(cp['b'], cp['gamma'], cp['beta'], cp['mean'], cp['var'])
        ops += [wk, scale, shift]

    g_last = geom[-1]
    c_last, hf, wf = g_last['c_out'], g_last['h_out'], g_last['w_out']
    for idx, lp in enumerate(params['lstm']):
        w_ih = lp['w_ih']
        if idx == 0:
            # PyTorch flattens channel-major; kernel flattens spatial-major.
            w_ih = (w_ih.reshape(4 * hidden, c_last, hf * wf)
                    .transpose(0, 2, 1).reshape(4 * hidden, c_last * hf * wf))
        b = lp['b_ih'] + lp['b_hh']
        # PyTorch gate order in W_ih is (i, f, g, o); f is dead (c0 == 0).
        for lo in (0, 2, 3):
            ops.append(w_ih[lo * hidden:(lo + 1) * hidden].T.astype(jnp.bfloat16))
        for lo in (0, 2, 3):
            ops.append(b[lo * hidden:(lo + 1) * hidden].reshape(1, -1).astype(jnp.float32))

    for fp in params['fc']:
        scale, shift = bn_fold(fp['b'], fp['gamma'], fp['beta'], fp['mean'], fp['var'])
        ops += [fp['w'].T.astype(jnp.bfloat16), scale, shift]

    ops += [params['out']['w'].T.astype(jnp.bfloat16),
            params['out']['b'].reshape(1, -1).astype(jnp.float32)]
    return ops


# --------------------------------- main --------------------------------------

if __name__ == "__main__":
    config = dict(
        in_channels=4,
        conv_layers=[(8, 3, 1), (16, 3, 1)],   # (out_channels, kernel_size, padding)
        pool_layers=[2, 2],
        img_size=(16, 16),
        leak=0.01,
        lstm_hidden_size=32,
        lstm_layers=1,
        fc_layers=[32],
        dropout=0.1,        # Dropout is identity at inference
        output_size=10,
    )

    key = jax.random.PRNGKey(0)
    pkey, xkey = jax.random.split(key)
    params = make_params(config, pkey)
    operands = prepare_operands(params, config)
    forward, _, _ = make_forward(config)

    x = jax.random.normal(xkey, (2, config['in_channels'], *config['img_size']),
                          dtype=jnp.float32)

    out = jax.block_until_ready(forward(x, operands))
    assert out.shape == (2, config['output_size'])
    assert bool(jnp.all(jnp.isfinite(out)))
    print("KERNEL_OK")
</pallas_src>

<mosaic_0001>
module attributes {stable_mosaic.version = 11 : i64} {
  func.func @kernel(%arg0: i32, %arg1: memref<328x4xf32, #tpu.memory_space<vmem>>, %arg2: memref<9x4x8xbf16, #tpu.memory_space<vmem>>, %arg3: memref<1x8xf32, #tpu.memory_space<vmem>>, %arg4: memref<1x8xf32, #tpu.memory_space<vmem>>, %arg5: memref<9x8x16xbf16, #tpu.memory_space<vmem>>, %arg6: memref<1x16xf32, #tpu.memory_space<vmem>>, %arg7: memref<1x16xf32, #tpu.memory_space<vmem>>, %arg8: memref<256x32xbf16, #tpu.memory_space<vmem>>, %arg9: memref<256x32xbf16, #tpu.memory_space<vmem>>, %arg10: memref<256x32xbf16, #tpu.memory_space<vmem>>, %arg11: memref<1x32xf32, #tpu.memory_space<vmem>>, %arg12: memref<1x32xf32, #tpu.memory_space<vmem>>, %arg13: memref<1x32xf32, #tpu.memory_space<vmem>>, %arg14: memref<32x32xbf16, #tpu.memory_space<vmem>>, %arg15: memref<1x32xf32, #tpu.memory_space<vmem>>, %arg16: memref<1x32xf32, #tpu.memory_space<vmem>>, %arg17: memref<32x10xbf16, #tpu.memory_space<vmem>>, %arg18: memref<1x10xf32, #tpu.memory_space<vmem>>, %arg19: memref<1x1x10xf32, #tpu.memory_space<vmem>>, %arg20: memref<288x8xf32, #tpu.memory_space<vmem>>, %arg21: memref<80x16xf32, #tpu.memory_space<vmem>>, %arg22: memref<104x8xf32, #tpu.memory_space<vmem>>, %arg23: memref<1x256xf32, #tpu.memory_space<vmem>>) attributes {dimension_semantics = [#tpu.dimension_semantics<parallel>], iteration_bounds = array<i64: 2>, scalar_prefetch = 0 : i64, scratch_operands = 4 : i64, tpu.core_type = #tpu.core_type<tc>, window_params = [{transform_indices = @transform_0, window_bounds = array<i64: 328, 4>}, {pipeline_mode = #tpu.pipeline_mode<synchronous>, transform_indices = @transform_1, window_bounds = array<i64: 9, 4, 8>}, {pipeline_mode = #tpu.pipeline_mode<synchronous>, transform_indices = @transform_2, window_bounds = array<i64: 1, 8>}, {pipeline_mode = #tpu.pipeline_mode<synchronous>, transform_indices = @transform_3, window_bounds = array<i64: 1, 8>}, {pipeline_mode = #tpu.pipeline_mode<synchronous>, transform_indices = @transform_4, window_bounds = array<i64: 9, 8, 16>}, {pipeline_mode = #tpu.pipeline_mode<synchronous>, transform_indices = @transform_5, window_bounds = array<i64: 1, 16>}, {pipeline_mode = #tpu.pipeline_mode<synchronous>, transform_indices = @transform_6, window_bounds = array<i64: 1, 16>}, {pipeline_mode = #tpu.pipeline_mode<synchronous>, transform_indices = @transform_7, window_bounds = array<i64: 256, 32>}, {pipeline_mode = #tpu.pipeline_mode<synchronous>, transform_indices = @transform_8, window_bounds = array<i64: 256, 32>}, {pipeline_mode = #tpu.pipeline_mode<synchronous>, transform_indices = @transform_9, window_bounds = array<i64: 256, 32>}, {pipeline_mode = #tpu.pipeline_mode<synchronous>, transform_indices = @transform_10, window_bounds = array<i64: 1, 32>}, {pipeline_mode = #tpu.pipeline_mode<synchronous>, transform_indices = @transform_11, window_bounds = array<i64: 1, 32>}, {pipeline_mode = #tpu.pipeline_mode<synchronous>, transform_indices = @transform_12, window_bounds = array<i64: 1, 32>}, {pipeline_mode = #tpu.pipeline_mode<synchronous>, transform_indices = @transform_13, window_bounds = array<i64: 32, 32>}, {pipeline_mode = #tpu.pipeline_mode<synchronous>, transform_indices = @transform_14, window_bounds = array<i64: 1, 32>}, {pipeline_mode = #tpu.pipeline_mode<synchronous>, transform_indices = @transform_15, window_bounds = array<i64: 1, 32>}, {pipeline_mode = #tpu.pipeline_mode<synchronous>, transform_indices = @transform_16, window_bounds = array<i64: 32, 10>}, {pipeline_mode = #tpu.pipeline_mode<synchronous>, transform_indices = @transform_17, window_bounds = array<i64: 1, 10>}, {transform_indices = @transform_18, window_bounds = array<i64: 1, 1, 10>}]} {
    %c0 = arith.constant 0 : index
    %c0_0 = arith.constant 0 : index
    %0 = vector.load %arg1[%c0, %c0_0] : memref<328x4xf32, #tpu.memory_space<vmem>>, vector<288x4xf32>
    %1 = arith.truncf %0 : vector<288x4xf32> to vector<288x4xbf16>
    %c0_1 = arith.constant 0 : index
    %c0_2 = arith.constant 0 : index
    %c0_3 = arith.constant 0 : index
    %2 = vector.load %arg2[%c0_1, %c0_2, %c0_3] : memref<9x4x8xbf16, #tpu.memory_space<vmem>>, vector<1x4x8xbf16>
    %3 = vector.shape_cast %2 : vector<1x4x8xbf16> to vector<4x8xbf16>
    %cst = arith.constant dense<0.000000e+00> : vector<288x8xf32>
    %4 = tpu.matmul %1, %3, %cst {dimension_numbers = #tpu.dot_dimension_numbers<[1], [0], [0], [1], [0, 0, 1, 1], [], []>} : vector<288x4xbf16>, vector<4x8xbf16>, vector<288x8xf32> -> vector<288x8xf32>
    %c1 = arith.constant 1 : index
    %c0_4 = arith.constant 0 : index
    %5 = vector.load %arg1[%c1, %c0_4] : memref<328x4xf32, #tpu.memory_space<vmem>>, vector<288x4xf32>
    %6 = arith.truncf %5 : vector<288x4xf32> to vector<288x4xbf16>
    %c1_5 = arith.constant 1 : index
    %c0_6 = arith.constant 0 : index
    %c0_7 = arith.constant 0 : index
    %7 = vector.load %arg2[%c1_5, %c0_6, %c0_7] : memref<9x4x8xbf16, #tpu.memory_space<vmem>>, vector<1x4x8xbf16>
    %8 = vector.shape_cast %7 : vector<1x4x8xbf16> to vector<4x8xbf16>
    %cst_8 = arith.constant dense<0.000000e+00> : vector<288x8xf32>
    %9 = tpu.matmul %6, %8, %cst_8 {dimension_numbers = #tpu.dot_dimension_numbers<[1], [0], [0], [1], [0, 0, 1, 1], [], []>} : vector<288x4xbf16>, vector<4x8xbf16>, vector<288x8xf32> -> vector<288x8xf32>
    %10 = arith.addf %4, %9 : vector<288x8xf32>
    %c2 = arith.constant 2 : index
    %c0_9 = arith.constant 0 : index
    %11 = vector.load %arg1[%c2, %c0_9] : memref<328x4xf32, #tpu.memory_space<vmem>>, vector<288x4xf32>
    %12 = arith.truncf %11 : vector<288x4xf32> to vector<288x4xbf16>
    %c2_10 = arith.constant 2 : index
    %c0_11 = arith.constant 0 : index
    %c0_12 = arith.constant 0 : index
    %13 = vector.load %arg2[%c2_10, %c0_11, %c0_12] : memref<9x4x8xbf16, #tpu.memory_space<vmem>>, vector<1x4x8xbf16>
    %14 = vector.shape_cast %13 : vector<1x4x8xbf16> to vector<4x8xbf16>
    %cst_13 = arith.constant dense<0.000000e+00> : vector<288x8xf32>
    %15 = tpu.matmul %12, %14, %cst_13 {dimension_numbers = #tpu.dot_dimension_numbers<[1], [0], [0], [1], [0, 0, 1, 1], [], []>} : vector<288x4xbf16>, vector<4x8xbf16>, vector<288x8xf32> -> vector<288x8xf32>
    %16 = arith.addf %10, %15 : vector<288x8xf32>
    %c18 = arith.constant 18 : index
    %c0_14 = arith.constant 0 : index
    %17 = vector.load %arg1[%c18, %c0_14] : memref<328x4xf32, #tpu.memory_space<vmem>>, vector<288x4xf32>
    %18 = arith.truncf %17 : vector<288x4xf32> to vector<288x4xbf16>
    %c3 = arith.constant 3 : index
    %c0_15 = arith.constant 0 : index
    %c0_16 = arith.constant 0 : index
    %19 = vector.load %arg2[%c3, %c0_15, %c0_16] : memref<9x4x8xbf16, #tpu.memory_space<vmem>>, vector<1x4x8xbf16>
    %20 = vector.shape_cast %19 : vector<1x4x8xbf16> to vector<4x8xbf16>
    %cst_17 = arith.constant dense<0.000000e+00> : vector<288x8xf32>
    %21 = tpu.matmul %18, %20, %cst_17 {dimension_numbers = #tpu.dot_dimension_numbers<[1], [0], [0], [1], [0, 0, 1, 1], [], []>} : vector<288x4xbf16>, vector<4x8xbf16>, vector<288x8xf32> -> vector<288x8xf32>
    %22 = arith.addf %16, %21 : vector<288x8xf32>
    %c19 = arith.constant 19 : index
    %c0_18 = arith.constant 0 : index
    %23 = vector.load %arg1[%c19, %c0_18] : memref<328x4xf32, #tpu.memory_space<vmem>>, vector<288x4xf32>
    %24 = arith.truncf %23 : vector<288x4xf32> to vector<288x4xbf16>
    %c4 = arith.constant 4 : index
    %c0_19 = arith.constant 0 : index
    %c0_20 = arith.constant 0 : index
    %25 = vector.load %arg2[%c4, %c0_19, %c0_20] : memref<9x4x8xbf16, #tpu.memory_space<vmem>>, vector<1x4x8xbf16>
    %26 = vector.shape_cast %25 : vector<1x4x8xbf16> to vector<4x8xbf16>
    %cst_21 = arith.constant dense<0.000000e+00> : vector<288x8xf32>
    %27 = tpu.matmul %24, %26, %cst_21 {dimension_numbers = #tpu.dot_dimension_numbers<[1], [0], [0], [1], [0, 0, 1, 1], [], []>} : vector<288x4xbf16>, vector<4x8xbf16>, vector<288x8xf32> -> vector<288x8xf32>
    %28 = arith.addf %22, %27 : vector<288x8xf32>
    %c20 = arith.constant 20 : index
    %c0_22 = arith.constant 0 : index
    %29 = vector.load %arg1[%c20, %c0_22] : memref<328x4xf32, #tpu.memory_space<vmem>>, vector<288x4xf32>
    %30 = arith.truncf %29 : vector<288x4xf32> to vector<288x4xbf16>
    %c5 = arith.constant 5 : index
    %c0_23 = arith.constant 0 : index
    %c0_24 = arith.constant 0 : index
    %31 = vector.load %arg2[%c5, %c0_23, %c0_24] : memref<9x4x8xbf16, #tpu.memory_space<vmem>>, vector<1x4x8xbf16>
    %32 = vector.shape_cast %31 : vector<1x4x8xbf16> to vector<4x8xbf16>
    %cst_25 = arith.constant dense<0.000000e+00> : vector<288x8xf32>
    %33 = tpu.matmul %30, %32, %cst_25 {dimension_numbers = #tpu.dot_dimension_numbers<[1], [0], [0], [1], [0, 0, 1, 1], [], []>} : vector<288x4xbf16>, vector<4x8xbf16>, vector<288x8xf32> -> vector<288x8xf32>
    %34 = arith.addf %28, %33 : vector<288x8xf32>
    %c36 = arith.constant 36 : index
    %c0_26 = arith.constant 0 : index
    %35 = vector.load %arg1[%c36, %c0_26] : memref<328x4xf32, #tpu.memory_space<vmem>>, vector<288x4xf32>
    %36 = arith.truncf %35 : vector<288x4xf32> to vector<288x4xbf16>
    %c6 = arith.constant 6 : index
    %c0_27 = arith.constant 0 : index
    %c0_28 = arith.constant 0 : index
    %37 = vector.load %arg2[%c6, %c0_27, %c0_28] : memref<9x4x8xbf16, #tpu.memory_space<vmem>>, vector<1x4x8xbf16>
    %38 = vector.shape_cast %37 : vector<1x4x8xbf16> to vector<4x8xbf16>
    %cst_29 = arith.constant dense<0.000000e+00> : vector<288x8xf32>
    %39 = tpu.matmul %36, %38, %cst_29 {dimension_numbers = #tpu.dot_dimension_numbers<[1], [0], [0], [1], [0, 0, 1, 1], [], []>} : vector<288x4xbf16>, vector<4x8xbf16>, vector<288x8xf32> -> vector<288x8xf32>
    %40 = arith.addf %34, %39 : vector<288x8xf32>
    %c37 = arith.constant 37 : index
    %c0_30 = arith.constant 0 : index
    %41 = vector.load %arg1[%c37, %c0_30] : memref<328x4xf32, #tpu.memory_space<vmem>>, vector<288x4xf32>
    %42 = arith.truncf %41 : vector<288x4xf32> to vector<288x4xbf16>
    %c7 = arith.constant 7 : index
    %c0_31 = arith.constant 0 : index
    %c0_32 = arith.constant 0 : index
    %43 = vector.load %arg2[%c7, %c0_31, %c0_32] : memref<9x4x8xbf16, #tpu.memory_space<vmem>>, vector<1x4x8xbf16>
    %44 = vector.shape_cast %43 : vector<1x4x8xbf16> to vector<4x8xbf16>
    %cst_33 = arith.constant dense<0.000000e+00> : vector<288x8xf32>
    %45 = tpu.matmul %42, %44, %cst_33 {dimension_numbers = #tpu.dot_dimension_numbers<[1], [0], [0], [1], [0, 0, 1, 1], [], []>} : vector<288x4xbf16>, vector<4x8xbf16>, vector<288x8xf32> -> vector<288x8xf32>
    %46 = arith.addf %40, %45 : vector<288x8xf32>
    %c38 = arith.constant 38 : index
    %c0_34 = arith.constant 0 : index
    %47 = vector.load %arg1[%c38, %c0_34] : memref<328x4xf32, #tpu.memory_space<vmem>>, vector<288x4xf32>
    %48 = arith.truncf %47 : vector<288x4xf32> to vector<288x4xbf16>
    %c8 = arith.constant 8 : index
    %c0_35 = arith.constant 0 : index
    %c0_36 = arith.constant 0 : index
    %49 = vector.load %arg2[%c8, %c0_35, %c0_36] : memref<9x4x8xbf16, #tpu.memory_space<vmem>>, vector<1x4x8xbf16>
    %50 = vector.shape_cast %49 : vector<1x4x8xbf16> to vector<4x8xbf16>
    %cst_37 = arith.constant dense<0.000000e+00> : vector<288x8xf32>
    %51 = tpu.matmul %48, %50, %cst_37 {dimension_numbers = #tpu.dot_dimension_numbers<[1], [0], [0], [1], [0, 0, 1, 1], [], []>} : vector<288x4xbf16>, vector<4x8xbf16>, vector<288x8xf32> -> vector<288x8xf32>
    %52 = arith.addf %46, %51 : vector<288x8xf32>
    %c0_38 = arith.constant 0 : index
    %c0_39 = arith.constant 0 : index
    %53 = vector.load %arg3[%c0_38, %c0_39] : memref<1x8xf32, #tpu.memory_space<vmem>>, vector<1x8xf32>
    %54 = vector.broadcast %53 : vector<1x8xf32> to vector<288x8xf32>
    %55 = arith.mulf %52, %54 : vector<288x8xf32>
    %c0_40 = arith.constant 0 : index
    %c0_41 = arith.constant 0 : index
    %56 = vector.load %arg4[%c0_40, %c0_41] : memref<1x8xf32, #tpu.memory_space<vmem>>, vector<1x8xf32>
    %57 = vector.broadcast %56 : vector<1x8xf32> to vector<288x8xf32>
    %58 = arith.addf %55, %57 : vector<288x8xf32>
    %cst_42 = arith.constant 0.000000e+00 : f32
    %59 = vector.broadcast %cst_42 : f32 to vector<288x8xf32>
    %60 = arith.cmpf oge, %58, %59 : vector<288x8xf32>
    %cst_43 = arith.constant 0.00999999977 : f32
    %61 = vector.broadcast %cst_43 : f32 to vector<288x8xf32>
    %62 = arith.mulf %61, %58 : vector<288x8xf32>
    %63 = arith.select %60, %58, %62 : vector<288x8xi1>, vector<288x8xf32>
    %c0_44 = arith.constant 0 : index
    %c0_45 = arith.constant 0 : index
    %64 = vector.load %arg20[%c0_44, %c0_45] : memref<288x8xf32, #tpu.memory_space<vmem>>, vector<288x8xf32>
    tpu.vector_store %arg20[%c0_44, %c0_45], %63 {strides = array<i32>} : memref<288x8xf32, #tpu.memory_space<vmem>>, vector<288x8xf32>,
    %cst_46 = arith.constant 0.000000e+00 : f32
    %65 = vector.broadcast %cst_46 : f32 to vector<104x8xf32>
    %c0_47 = arith.constant 0 : index
    %c0_48 = arith.constant 0 : index
    %66 = vector.load %arg22[%c0_47, %c0_48] : memref<104x8xf32, #tpu.memory_space<vmem>>, vector<104x8xf32>
    tpu.vector_store %arg22[%c0_47, %c0_48], %65 {strides = array<i32>} : memref<104x8xf32, #tpu.memory_space<vmem>>, vector<104x8xf32>,
    %67 = tpu.iota {dimensions = array<i32: 0>} : vector<8x15xi32>
    %68 = tpu.iota {dimensions = array<i32: 1>} : vector<8x15xi32>
    %c2_i32 = arith.constant 2 : i32
    %69 = vector.broadcast %c2_i32 : i32 to vector<8x15xi32>
    %70 = arith.muli %69, %67 : vector<8x15xi32>
    %71 = arith.cmpi eq, %68, %70 : vector<8x15xi32>
    %72 = arith.extui %71 : vector<8x15xi1> to vector<8x15xi32>
    %73 = arith.sitofp %72 : vector<8x15xi32> to vector<8x15xf32>
    %c0_49 = arith.constant 0 : index
    %c0_50 = arith.constant 0 : index
    %74 = vector.load %arg20[%c0_49, %c0_50] : memref<288x8xf32, #tpu.memory_space<vmem>>, vector<15x8xf32>
    %c1_51 = arith.constant 1 : index
    %c0_52 = arith.constant 0 : index
    %75 = vector.load %arg20[%c1_51, %c0_52] : memref<288x8xf32, #tpu.memory_space<vmem>>, vector<15x8xf32>
    %76 = arith.maximumf %74, %75 : vector<15x8xf32>
    %c18_53 = arith.constant 18 : index
    %c0_54 = arith.constant 0 : index
    %77 = vector.load %arg20[%c18_53, %c0_54] : memref<288x8xf32, #tpu.memory_space<vmem>>, vector<15x8xf32>
    %c19_55 = arith.constant 19 : index
    %c0_56 = arith.constant 0 : index
    %78 = vector.load %arg20[%c19_55, %c0_56] : memref<288x8xf32, #tpu.memory_space<vmem>>, vector<15x8xf32>
    %79 = arith.maximumf %77, %78 : vector<15x8xf32>
    %80 = arith.maximumf %76, %79 : vector<15x8xf32>
    %cst_57 = arith.constant dense<0.000000e+00> : vector<8x8xf32>
    %81 = tpu.matmul %73, %80, %cst_57 {dimension_numbers = #tpu.dot_dimension_numbers<[1], [0], [0], [1], [0, 0, 1, 1], [], []>} : vector<8x15xf32>, vector<15x8xf32>, vector<8x8xf32> -> vector<8x8xf32>
    %c11 = arith.constant 11 : index
    %c0_58 = arith.constant 0 : index
    %82 = vector.load %arg22[%c11, %c0_58] : memref<104x8xf32, #tpu.memory_space<vmem>>, vector<8x8xf32>
    tpu.vector_store %arg22[%c11, %c0_58], %81 {strides = array<i32>} : memref<104x8xf32, #tpu.memory_space<vmem>>, vector<8x8xf32>,
    %c36_59 = arith.constant 36 : index
    %c0_60 = arith.constant 0 : index
    %83 = vector.load %arg20[%c36_59, %c0_60] : memref<288x8xf32, #tpu.memory_space<vmem>>, vector<15x8xf32>
    %c37_61 = arith.constant 37 : index
    %c0_62 = arith.constant 0 : index
    %84 = vector.load %arg20[%c37_61, %c0_62] : memref<288x8xf32, #tpu.memory_space<vmem>>, vector<15x8xf32>
    %85 = arith.maximumf %83, %84 : vector<15x8xf32>
    %c54 = arith.constant 54 : index
    %c0_63 = arith.constant 0 : index
    %86 = vector.load %arg20[%c54, %c0_63] : memref<288x8xf32, #tpu.memory_space<vmem>>, vector<15x8xf32>
    %c55 = arith.constant 55 : index
    %c0_64 = arith.constant 0 : index
    %87 = vector.load %arg20[%c55, %c0_64] : memref<288x8xf32, #tpu.memory_space<vmem>>, vector<15x8xf32>
    %88 = arith.maximumf %86, %87 : vector<15x8xf32>
    %89 = arith.maximumf %85, %88 : vector<15x8xf32>
    %cst_65 = arith.constant dense<0.000000e+00> : vector<8x8xf32>
    %90 = tpu.matmul %73, %89, %cst_65 {dimension_numbers = #tpu.dot_dimension_numbers<[1], [0], [0], [1], [0, 0, 1, 1], [], []>} : vector<8x15xf32>, vector<15x8xf32>, vector<8x8xf32> -> vector<8x8xf32>
    %c21 = arith.constant 21 : index
    %c0_66 = arith.constant 0 : index
    %91 = vector.load %arg22[%c21, %c0_66] : memref<104x8xf32, #tpu.memory_space<vmem>>, vector<8x8xf32>
    tpu.vector_store %arg22[%c21, %c0_66], %90 {strides = array<i32>} : memref<104x8xf32, #tpu.memory_space<vmem>>, vector<8x8xf32>,
    %c72 = arith.constant 72 : index
    %c0_67 = arith.constant 0 : index
    %92 = vector.load %arg20[%c72, %c0_67] : memref<288x8xf32, #tpu.memory_space<vmem>>, vector<15x8xf32>
    %c73 = arith.constant 73 : index
    %c0_68 = arith.constant 0 : index
    %93 = vector.load %arg20[%c73, %c0_68] : memref<288x8xf32, #tpu.memory_space<vmem>>, vector<15x8xf32>
    %94 = arith.maximumf %92, %93 : vector<15x8xf32>
    %c90 = arith.constant 90 : index
    %c0_69 = arith.constant 0 : index
    %95 = vector.load %arg20[%c90, %c0_69] : memref<288x8xf32, #tpu.memory_space<vmem>>, vector<15x8xf32>
    %c91 = arith.constant 91 : index
    %c0_70 = arith.constant 0 : index
    %96 = vector.load %arg20[%c91, %c0_70] : memref<288x8xf32, #tpu.memory_space<vmem>>, vector<15x8xf32>
    %97 = arith.maximumf %95, %96 : vector<15x8xf32>
    %98 = arith.maximumf %94, %97 : vector<15x8xf32>
    %cst_71 = arith.constant dense<0.000000e+00> : vector<8x8xf32>
    %99 = tpu.matmul %73, %98, %cst_71 {dimension_numbers = #tpu.dot_dimension_numbers<[1], [0], [0], [1], [0, 0, 1, 1], [], []>} : vector<8x15xf32>, vector<15x8xf32>, vector<8x8xf32> -> vector<8x8xf32>
    %c31 = arith.constant 31 : index
    %c0_72 = arith.constant 0 : index
    %100 = vector.load %arg22[%c31, %c0_72] : memref<104x8xf32, #tpu.memory_space<vmem>>, vector<8x8xf32>
    tpu.vector_store %arg22[%c31, %c0_72], %99 {strides = array<i32>} : memref<104x8xf32, #tpu.memory_space<vmem>>, vector<8x8xf32>,
    %c108 = arith.constant 108 : index
    %c0_73 = arith.constant 0 : index
    %101 = vector.load %arg20[%c108, %c0_73] : memref<288x8xf32, #tpu.memory_space<vmem>>, vector<15x8xf32>
    %c109 = arith.constant 109 : index
    %c0_74 = arith.constant 0 : index
    %102 = vector.load %arg20[%c109, %c0_74] : memref<288x8xf32, #tpu.memory_space<vmem>>, vector<15x8xf32>
    %103 = arith.maximumf %101, %102 : vector<15x8xf32>
    %c126 = arith.constant 126 : index
    %c0_75 = arith.constant 0 : index
    %104 = vector.load %arg20[%c126, %c0_75] : memref<288x8xf32, #tpu.memory_space<vmem>>, vector<15x8xf32>
    %c127 = arith.constant 127 : index
    %c0_76 = arith.constant 0 : index
    %105 = vector.load %arg20[%c127, %c0_76] : memref<288x8xf32, #tpu.memory_space<vmem>>, vector<15x8xf32>
    %106 = arith.maximumf %104, %105 : vector<15x8xf32>
    %107 = arith.maximumf %103, %106 : vector<15x8xf32>
    %cst_77 = arith.constant dense<0.000000e+00> : vector<8x8xf32>
    %108 = tpu.matmul %73, %107, %cst_77 {dimension_numbers = #tpu.dot_dimension_numbers<[1], [0], [0], [1], [0, 0, 1, 1], [], []>} : vector<8x15xf32>, vector<15x8xf32>, vector<8x8xf32> -> vector<8x8xf32>
    %c41 = arith.constant 41 : index
    %c0_78 = arith.constant 0 : index
    %109 = vector.load %arg22[%c41, %c0_78] : memref<104x8xf32, #tpu.memory_space<vmem>>, vector<8x8xf32>
    tpu.vector_store %arg22[%c41, %c0_78], %108 {strides = array<i32>} : memref<104x8xf32, #tpu.memory_space<vmem>>, vector<8x8xf32>,
    %c144 = arith.constant 144 : index
    %c0_79 = arith.constant 0 : index
    %110 = vector.load %arg20[%c144, %c0_79] : memref<288x8xf32, #tpu.memory_space<vmem>>, vector<15x8xf32>
    %c145 = arith.constant 145 : index
    %c0_80 = arith.constant 0 : index
    %111 = vector.load %arg20[%c145, %c0_80] : memref<288x8xf32, #tpu.memory_space<vmem>>, vector<15x8xf32>
    %112 = arith.maximumf %110, %111 : vector<15x8xf32>
    %c162 = arith.constant 162 : index
    %c0_81 = arith.constant 0 : index
    %113 = vector.load %arg20[%c162, %c0_81] : memref<288x8xf32, #tpu.memory_space<vmem>>, vector<15x8xf32>
    %c163 = arith.constant 163 : index
    %c0_82 = arith.constant 0 : index
    %114 = vector.load %arg20[%c163, %c0_82] : memref<288x8xf32, #tpu.memory_space<vmem>>, vector<15x8xf32>
    %115 = arith.maximumf %113, %114 : vector<15x8xf32>
    %116 = arith.maximumf %112, %115 : vector<15x8xf32>
    %cst_83 = arith.constant dense<0.000000e+00> : vector<8x8xf32>
    %117 = tpu.matmul %73, %116, %cst_83 {dimension_numbers = #tpu.dot_dimension_numbers<[1], [0], [0], [1], [0, 0, 1, 1], [], []>} : vector<8x15xf32>, vector<15x8xf32>, vector<8x8xf32> -> vector<8x8xf32>
    %c51 = arith.constant 51 : index
    %c0_84 = arith.constant 0 : index
    %118 = vector.load %arg22[%c51, %c0_84] : memref<104x8xf32, #tpu.memory_space<vmem>>, vector<8x8xf32>
    tpu.vector_store %arg22[%c51, %c0_84], %117 {strides = array<i32>} : memref<104x8xf32, #tpu.memory_space<vmem>>, vector<8x8xf32>,
    %c180 = arith.constant 180 : index
    %c0_85 = arith.constant 0 : index
    %119 = vector.load %arg20[%c180, %c0_85] : memref<288x8xf32, #tpu.memory_space<vmem>>, vector<15x8xf32>
    %c181 = arith.constant 181 : index
    %c0_86 = arith.constant 0 : index
    %120 = vector.load %arg20[%c181, %c0_86] : memref<288x8xf32, #tpu.memory_space<vmem>>, vector<15x8xf32>
    %121 = arith.maximumf %119, %120 : vector<15x8xf32>
    %c198 = arith.constant 198 : index
    %c0_87 = arith.constant 0 : index
    %122 = vector.load %arg20[%c198, %c0_87] : memref<288x8xf32, #tpu.memory_space<vmem>>, vector<15x8xf32>
    %c199 = arith.constant 199 : index
    %c0_88 = arith.constant 0 : index
    %123 = vector.load %arg20[%c199, %c0_88] : memref<288x8xf32, #tpu.memory_space<vmem>>, vector<15x8xf32>
    %124 = arith.maximumf %122, %123 : vector<15x8xf32>
    %125 = arith.maximumf %121, %124 : vector<15x8xf32>
    %cst_89 = arith.constant dense<0.000000e+00> : vector<8x8xf32>
    %126 = tpu.matmul %73, %125, %cst_89 {dimension_numbers = #tpu.dot_dimension_numbers<[1], [0], [0], [1], [0, 0, 1, 1], [], []>} : vector<8x15xf32>, vector<15x8xf32>, vector<8x8xf32> -> vector<8x8xf32>
    %c61 = arith.constant 61 : index
    %c0_90 = arith.constant 0 : index
    %127 = vector.load %arg22[%c61, %c0_90] : memref<104x8xf32, #tpu.memory_space<vmem>>, vector<8x8xf32>
    tpu.vector_store %arg22[%c61, %c0_90], %126 {strides = array<i32>} : memref<104x8xf32, #tpu.memory_space<vmem>>, vector<8x8xf32>,
    %c216 = arith.constant 216 : index
    %c0_91 = arith.constant 0 : index
    %128 = vector.load %arg20[%c216, %c0_91] : memref<288x8xf32, #tpu.memory_space<vmem>>, vector<15x8xf32>
    %c217 = arith.constant 217 : index
    %c0_92 = arith.constant 0 : index
    %129 = vector.load %arg20[%c217, %c0_92] : memref<288x8xf32, #tpu.memory_space<vmem>>, vector<15x8xf32>
    %130 = arith.maximumf %128, %129 : vector<15x8xf32>
    %c234 = arith.constant 234 : index
    %c0_93 = arith.constant 0 : index
    %131 = vector.load %arg20[%c234, %c0_93] : memref<288x8xf32, #tpu.memory_space<vmem>>, vector<15x8xf32>
    %c235 = arith.constant 235 : index
    %c0_94 = arith.constant 0 : index
    %132 = vector.load %arg20[%c235, %c0_94] : memref<288x8xf32, #tpu.memory_space<vmem>>, vector<15x8xf32>
    %133 = arith.maximumf %131, %132 : vector<15x8xf32>
    %134 = arith.maximumf %130, %133 : vector<15x8xf32>
    %cst_95 = arith.constant dense<0.000000e+00> : vector<8x8xf32>
    %135 = tpu.matmul %73, %134, %cst_95 {dimension_numbers = #tpu.dot_dimension_numbers<[1], [0], [0], [1], [0, 0, 1, 1], [], []>} : vector<8x15xf32>, vector<15x8xf32>, vector<8x8xf32> -> vector<8x8xf32>
    %c71 = arith.constant 71 : index
    %c0_96 = arith.constant 0 : index
    %136 = vector.load %arg22[%c71, %c0_96] : memref<104x8xf32, #tpu.memory_space<vmem>>, vector<8x8xf32>
    tpu.vector_store %arg22[%c71, %c0_96], %135 {strides = array<i32>} : memref<104x8xf32, #tpu.memory_space<vmem>>, vector<8x8xf32>,
    %c252 = arith.constant 252 : index
    %c0_97 = arith.constant 0 : index
    %137 = vector.load %arg20[%c252, %c0_97] : memref<288x8xf32, #tpu.memory_space<vmem>>, vector<15x8xf32>
    %c253 = arith.constant 253 : index
    %c0_98 = arith.constant 0 : index
    %138 = vector.load %arg20[%c253, %c0_98] : memref<288x8xf32, #tpu.memory_space<vmem>>, vector<15x8xf32>
    %139 = arith.maximumf %137, %138 : vector<15x8xf32>
    %c270 = arith.constant 270 : index
    %c0_99 = arith.constant 0 : index
    %140 = vector.load %arg20[%c270, %c0_99] : memref<288x8xf32, #tpu.memory_space<vmem>>, vector<15x8xf32>
    %c271 = arith.constant 271 : index
    %c0_100 = arith.constant 0 : index
    %141 = vector.load %arg20[%c271, %c0_100] : memref<288x8xf32, #tpu.memory_space<vmem>>, vector<15x8xf32>
    %142 = arith.maximumf %140, %141 : vector<15x8xf32>
    %143 = arith.maximumf %139, %142 : vector<15x8xf32>
    %cst_101 = arith.constant dense<0.000000e+00> : vector<8x8xf32>
    %144 = tpu.matmul %73, %143, %cst_101 {dimension_numbers = #tpu.dot_dimension_numbers<[1], [0], [0], [1], [0, 0, 1, 1], [], []>} : vector<8x15xf32>, vector<15x8xf32>, vector<8x8xf32> -> vector<8x8xf32>
    %c81 = arith.constant 81 : index
    %c0_102 = arith.constant 0 : index
    %145 = vector.load %arg22[%c81, %c0_102] : memref<104x8xf32, #tpu.memory_space<vmem>>, vector<8x8xf32>
    tpu.vector_store %arg22[%c81, %c0_102], %144 {strides = array<i32>} : memref<104x8xf32, #tpu.memory_space<vmem>>, vector<8x8xf32>,
    %c0_103 = arith.constant 0 : index
    %c0_104 = arith.constant 0 : index
    %146 = vector.load %arg22[%c0_103, %c0_104] : memref<104x8xf32, #tpu.memory_space<vmem>>, vector<80x8xf32>
    %147 = arith.truncf %146 : vector<80x8xf32> to vector<80x8xbf16>
    %c0_105 = arith.constant 0 : index
    %c0_106 = arith.constant 0 : index
    %c0_107 = arith.constant 0 : index
    %148 = vector.load %arg5[%c0_105, %c0_106, %c0_107] : memref<9x8x16xbf16, #tpu.memory_space<vmem>>, vector<1x8x16xbf16>
    %149 = vector.shape_cast %148 : vector<1x8x16xbf16> to vector<8x16xbf16>
    %cst_108 = arith.constant dense<0.000000e+00> : vector<80x16xf32>
    %150 = tpu.matmul %147, %149, %cst_108 {dimension_numbers = #tpu.dot_dimension_numbers<[1], [0], [0], [1], [0, 0, 1, 1], [], []>} : vector<80x8xbf16>, vector<8x16xbf16>, vector<80x16xf32> -> vector<80x16xf32>
    %c1_109 = arith.constant 1 : index
    %c0_110 = arith.constant 0 : index
    %151 = vector.load %arg22[%c1_109, %c0_110] : memref<104x8xf32, #tpu.memory_space<vmem>>, vector<80x8xf32>
    %152 = arith.truncf %151 : vector<80x8xf32> to vector<80x8xbf16>
    %c1_111 = arith.constant 1 : index
    %c0_112 = arith.constant 0 : index
    %c0_113 = arith.constant 0 : index
    %153 = vector.load %arg5[%c1_111, %c0_112, %c0_113] : memref<9x8x16xbf16, #tpu.memory_space<vmem>>, vector<1x8x16xbf16>
    %154 = vector.shape_cast %153 : vector<1x8x16xbf16> to vector<8x16xbf16>
    %cst_114 = arith.constant dense<0.000000e+00> : vector<80x16xf32>
    %155 = tpu.matmul %152, %154, %cst_114 {dimension_numbers = #tpu.dot_dimension_numbers<[1], [0], [0], [1], [0, 0, 1, 1], [], []>} : vector<80x8xbf16>, vector<8x16xbf16>, vector<80x16xf32> -> vector<80x16xf32>
    %156 = arith.addf %150, %155 : vector<80x16xf32>
    %c2_115 = arith.constant 2 : index
    %c0_116 = arith.constant 0 : index
    %157 = vector.load %arg22[%c2_115, %c0_116] : memref<104x8xf32, #tpu.memory_space<vmem>>, vector<80x8xf32>
    %158 = arith.truncf %157 : vector<80x8xf32> to vector<80x8xbf16>
    %c2_117 = arith.constant 2 : index
    %c0_118 = arith.constant 0 : index
    %c0_119 = arith.constant 0 : index
    %159 = vector.load %arg5[%c2_117, %c0_118, %c0_119] : memref<9x8x16xbf16, #tpu.memory_space<vmem>>, vector<1x8x16xbf16>
    %160 = vector.shape_cast %159 : vector<1x8x16xbf16> to vector<8x16xbf16>
    %cst_120 = arith.constant dense<0.000000e+00> : vector<80x16xf32>
    %161 = tpu.matmul %158, %160, %cst_120 {dimension_numbers = #tpu.dot_dimension_numbers<[1], [0], [0], [1], [0, 0, 1, 1], [], []>} : vector<80x8xbf16>, vector<8x16xbf16>, vector<80x16xf32> -> vector<80x16xf32>
    %162 = arith.addf %156, %161 : vector<80x16xf32>
    %c10 = arith.constant 10 : index
    %c0_121 = arith.constant 0 : index
    %163 = vector.load %arg22[%c10, %c0_121] : memref<104x8xf32, #tpu.memory_space<vmem>>, vector<80x8xf32>
    %164 = arith.truncf %163 : vector<80x8xf32> to vector<80x8xbf16>
    %c3_122 = arith.constant 3 : index
    %c0_123 = arith.constant 0 : index
    %c0_124 = arith.constant 0 : index
    %165 = vector.load %arg5[%c3_122, %c0_123, %c0_124] : memref<9x8x16xbf16, #tpu.memory_space<vmem>>, vector<1x8x16xbf16>
    %166 = vector.shape_cast %165 : vector<1x8x16xbf16> to vector<8x16xbf16>
    %cst_125 = arith.constant dense<0.000000e+00> : vector<80x16xf32>
    %167 = tpu.matmul %164, %166, %cst_125 {dimension_numbers = #tpu.dot_dimension_numbers<[1], [0], [0], [1], [0, 0, 1, 1], [], []>} : vector<80x8xbf16>, vector<8x16xbf16>, vector<80x16xf32> -> vector<80x16xf32>
    %168 = arith.addf %162, %167 : vector<80x16xf32>
    %c11_126 = arith.constant 11 : index
    %c0_127 = arith.constant 0 : index
    %169 = vector.load %arg22[%c11_126, %c0_127] : memref<104x8xf32, #tpu.memory_space<vmem>>, vector<80x8xf32>
    %170 = arith.truncf %169 : vector<80x8xf32> to vector<80x8xbf16>
    %c4_128 = arith.constant 4 : index
    %c0_129 = arith.constant 0 : index
    %c0_130 = arith.constant 0 : index
    %171 = vector.load %arg5[%c4_128, %c0_129, %c0_130] : memref<9x8x16xbf16, #tpu.memory_space<vmem>>, vector<1x8x16xbf16>
    %172 = vector.shape_cast %171 : vector<1x8x16xbf16> to vector<8x16xbf16>
    %cst_131 = arith.constant dense<0.000000e+00> : vector<80x16xf32>
    %173 = tpu.matmul %170, %172, %cst_131 {dimension_numbers = #tpu.dot_dimension_numbers<[1], [0], [0], [1], [0, 0, 1, 1], [], []>} : vector<80x8xbf16>, vector<8x16xbf16>, vector<80x16xf32> -> vector<80x16xf32>
    %174 = arith.addf %168, %173 : vector<80x16xf32>
    %c12 = arith.constant 12 : index
    %c0_132 = arith.constant 0 : index
    %175 = vector.load %arg22[%c12, %c0_132] : memref<104x8xf32, #tpu.memory_space<vmem>>, vector<80x8xf32>
    %176 = arith.truncf %175 : vector<80x8xf32> to vector<80x8xbf16>
    %c5_133 = arith.constant 5 : index
    %c0_134 = arith.constant 0 : index
    %c0_135 = arith.constant 0 : index
    %177 = vector.load %arg5[%c5_133, %c0_134, %c0_135] : memref<9x8x16xbf16, #tpu.memory_space<vmem>>, vector<1x8x16xbf16>
    %178 = vector.shape_cast %177 : vector<1x8x16xbf16> to vector<8x16xbf16>
    %cst_136 = arith.constant dense<0.000000e+00> : vector<80x16xf32>
    %179 = tpu.matmul %176, %178, %cst_136 {dimension_numbers = #tpu.dot_dimension_numbers<[1], [0], [0], [1], [0, 0, 1, 1], [], []>} : vector<80x8xbf16>, vector<8x16xbf16>, vector<80x16xf32> -> vector<80x16xf32>
    %180 = arith.addf %174, %179 : vector<80x16xf32>
    %c20_137 = arith.constant 20 : index
    %c0_138 = arith.constant 0 : index
    %181 = vector.load %arg22[%c20_137, %c0_138] : memref<104x8xf32, #tpu.memory_space<vmem>>, vector<80x8xf32>
    %182 = arith.truncf %181 : vector<80x8xf32> to vector<80x8xbf16>
    %c6_139 = arith.constant 6 : index
    %c0_140 = arith.constant 0 : index
    %c0_141 = arith.constant 0 : index
    %183 = vector.load %arg5[%c6_139, %c0_140, %c0_141] : memref<9x8x16xbf16, #tpu.memory_space<vmem>>, vector<1x8x16xbf16>
    %184 = vector.shape_cast %183 : vector<1x8x16xbf16> to vector<8x16xbf16>
    %cst_142 = arith.constant dense<0.000000e+00> : vector<80x16xf32>
    %185 = tpu.matmul %182, %184, %cst_142 {dimension_numbers = #tpu.dot_dimension_numbers<[1], [0], [0], [1], [0, 0, 1, 1], [], []>} : vector<80x8xbf16>, vector<8x16xbf16>, vector<80x16xf32> -> vector<80x16xf32>
    %186 = arith.addf %180, %185 : vector<80x16xf32>
    %c21_143 = arith.constant 21 : index
    %c0_144 = arith.constant 0 : index
    %187 = vector.load %arg22[%c21_143, %c0_144] : memref<104x8xf32, #tpu.memory_space<vmem>>, vector<80x8xf32>
    %188 = arith.truncf %187 : vector<80x8xf32> to vector<80x8xbf16>
    %c7_145 = arith.constant 7 : index
    %c0_146 = arith.constant 0 : index
    %c0_147 = arith.constant 0 : index
    %189 = vector.load %arg5[%c7_145, %c0_146, %c0_147] : memref<9x8x16xbf16, #tpu.memory_space<vmem>>, vector<1x8x16xbf16>
    %190 = vector.shape_cast %189 : vector<1x8x16xbf16> to vector<8x16xbf16>
    %cst_148 = arith.constant dense<0.000000e+00> : vector<80x16xf32>
    %191 = tpu.matmul %188, %190, %cst_148 {dimension_numbers = #tpu.dot_dimension_numbers<[1], [0], [0], [1], [0, 0, 1, 1], [], []>} : vector<80x8xbf16>, vector<8x16xbf16>, vector<80x16xf32> -> vector<80x16xf32>
    %192 = arith.addf %186, %191 : vector<80x16xf32>
    %c22 = arith.constant 22 : index
    %c0_149 = arith.constant 0 : index
    %193 = vector.load %arg22[%c22, %c0_149] : memref<104x8xf32, #tpu.memory_space<vmem>>, vector<80x8xf32>
    %194 = arith.truncf %193 : vector<80x8xf32> to vector<80x8xbf16>
    %c8_150 = arith.constant 8 : index
    %c0_151 = arith.constant 0 : index
    %c0_152 = arith.constant 0 : index
    %195 = vector.load %arg5[%c8_150, %c0_151, %c0_152] : memref<9x8x16xbf16, #tpu.memory_space<vmem>>, vector<1x8x16xbf16>
    %196 = vector.shape_cast %195 : vector<1x8x16xbf16> to vector<8x16xbf16>
    %cst_153 = arith.constant dense<0.000000e+00> : vector<80x16xf32>
    %197 = tpu.matmul %194, %196, %cst_153 {dimension_numbers = #tpu.dot_dimension_numbers<[1], [0], [0], [1], [0, 0, 1, 1], [], []>} : vector<80x8xbf16>, vector<8x16xbf16>, vector<80x16xf32> -> vector<80x16xf32>
    %198 = arith.addf %192, %197 : vector<80x16xf32>
    %c0_154 = arith.constant 0 : index
    %c0_155 = arith.constant 0 : index
    %199 = vector.load %arg6[%c0_154, %c0_155] : memref<1x16xf32, #tpu.memory_space<vmem>>, vector<1x16xf32>
    %200 = vector.broadcast %199 : vector<1x16xf32> to vector<80x16xf32>
    %201 = arith.mulf %198, %200 : vector<80x16xf32>
    %c0_156 = arith.constant 0 : index
    %c0_157 = arith.constant 0 : index
    %202 = vector.load %arg7[%c0_156, %c0_157] : memref<1x16xf32, #tpu.memory_space<vmem>>, vector<1x16xf32>
    %203 = vector.broadcast %202 : vector<1x16xf32> to vector<80x16xf32>
    %204 = arith.addf %201, %203 : vector<80x16xf32>
    %cst_158 = arith.constant 0.000000e+00 : f32
    %205 = vector.broadcast %cst_158 : f32 to vector<80x16xf32>
    %206 = arith.cmpf oge, %204, %205 : vector<80x16xf32>
    %cst_159 = arith.constant 0.00999999977 : f32
    %207 = vector.broadcast %cst_159 : f32 to vector<80x16xf32>
    %208 = arith.mulf %207, %204 : vector<80x16xf32>
    %209 = arith.select %206, %204, %208 : vector<80x16xi1>, vector<80x16xf32>
    %c0_160 = arith.constant 0 : index
    %c0_161 = arith.constant 0 : index
    %210 = vector.load %arg21[%c0_160, %c0_161] : memref<80x16xf32, #tpu.memory_space<vmem>>, vector<80x16xf32>
    tpu.vector_store %arg21[%c0_160, %c0_161], %209 {strides = array<i32>} : memref<80x16xf32, #tpu.memory_space<vmem>>, vector<80x16xf32>,
    %c0_162 = arith.constant 0 : index
    %c0_163 = arith.constant 0 : index
    %211 = vector.load %arg21[%c0_162, %c0_163] : memref<80x16xf32, #tpu.memory_space<vmem>>, vector<1x16xf32>
    %c1_164 = arith.constant 1 : index
    %c0_165 = arith.constant 0 : index
    %212 = vector.load %arg21[%c1_164, %c0_165] : memref<80x16xf32, #tpu.memory_space<vmem>>, vector<1x16xf32>
    %213 = arith.maximumf %211, %212 : vector<1x16xf32>
    %c10_166 = arith.constant 10 : index
    %c0_167 = arith.constant 0 : index
    %214 = vector.load %arg21[%c10_166, %c0_167] : memref<80x16xf32, #tpu.memory_space<vmem>>, vector<1x16xf32>
    %c11_168 = arith.constant 11 : index
    %c0_169 = arith.constant 0 : index
    %215 = vector.load %arg21[%c11_168, %c0_169] : memref<80x16xf32, #tpu.memory_space<vmem>>, vector<1x16xf32>
    %216 = arith.maximumf %214, %215 : vector<1x16xf32>
    %217 = arith.maximumf %213, %216 : vector<1x16xf32>
    %c0_170 = arith.constant 0 : index
    %c0_171 = arith.constant 0 : index
    %218 = vector.load %arg23[%c0_170, %c0_171] : memref<1x256xf32, #tpu.memory_space<vmem>>, vector<1x16xf32>
    tpu.vector_store %arg23[%c0_170, %c0_171], %217 {strides = array<i32>} : memref<1x256xf32, #tpu.memory_space<vmem>>, vector<1x16xf32>,
    %c2_172 = arith.constant 2 : index
    %c0_173 = arith.constant 0 : index
    %219 = vector.load %arg21[%c2_172, %c0_173] : memref<80x16xf32, #tpu.memory_space<vmem>>, vector<1x16xf32>
    %c3_174 = arith.constant 3 : index
    %c0_175 = arith.constant 0 : index
    %220 = vector.load %arg21[%c3_174, %c0_175] : memref<80x16xf32, #tpu.memory_space<vmem>>, vector<1x16xf32>
    %221 = arith.maximumf %219, %220 : vector<1x16xf32>
    %c12_176 = arith.constant 12 : index
    %c0_177 = arith.constant 0 : index
    %222 = vector.load %arg21[%c12_176, %c0_177] : memref<80x16xf32, #tpu.memory_space<vmem>>, vector<1x16xf32>
    %c13 = arith.constant 13 : index
    %c0_178 = arith.constant 0 : index
    %223 = vector.load %arg21[%c13, %c0_178] : memref<80x16xf32, #tpu.memory_space<vmem>>, vector<1x16xf32>
    %224 = arith.maximumf %222, %223 : vector<1x16xf32>
    %225 = arith.maximumf %221, %224 : vector<1x16xf32>
    %c0_179 = arith.constant 0 : index
    %c16 = arith.constant 16 : index
    %226 = vector.load %arg23[%c0_179, %c16] : memref<1x256xf32, #tpu.memory_space<vmem>>, vector<1x16xf32>
    tpu.vector_store %arg23[%c0_179, %c16], %225 {strides = array<i32>} : memref<1x256xf32, #tpu.memory_space<vmem>>, vector<1x16xf32>,
    %c4_180 = arith.constant 4 : index
    %c0_181 = arith.constant 0 : index
    %227 = vector.load %arg21[%c4_180, %c0_181] : memref<80x16xf32, #tpu.memory_space<vmem>>, vector<1x16xf32>
    %c5_182 = arith.constant 5 : index
    %c0_183 = arith.constant 0 : index
    %228 = vector.load %arg21[%c5_182, %c0_183] : memref<80x16xf32, #tpu.memory_space<vmem>>, vector<1x16xf32>
    %229 = arith.maximumf %227, %228 : vector<1x16xf32>
    %c14 = arith.constant 14 : index
    %c0_184 = arith.constant 0 : index
    %230 = vector.load %arg21[%c14, %c0_184] : memref<80x16xf32, #tpu.memory_space<vmem>>, vector<1x16xf32>
    %c15 = arith.constant 15 : index
    %c0_185 = arith.constant 0 : index
    %231 = vector.load %arg21[%c15, %c0_185] : memref<80x16xf32, #tpu.memory_space<vmem>>, vector<1x16xf32>
    %232 = arith.maximumf %230, %231 : vector<1x16xf32>
    %233 = arith.maximumf %229, %232 : vector<1x16xf32>
    %c0_186 = arith.constant 0 : index
    %c32 = arith.constant 32 : index
    %234 = vector.load %arg23[%c0_186, %c32] : memref<1x256xf32, #tpu.memory_space<vmem>>, vector<1x16xf32>
    tpu.vector_store %arg23[%c0_186, %c32], %233 {strides = array<i32>} : memref<1x256xf32, #tpu.memory_space<vmem>>, vector<1x16xf32>,
    %c6_187 = arith.constant 6 : index
    %c0_188 = arith.constant 0 : index
    %235 = vector.load %arg21[%c6_187, %c0_188] : memref<80x16xf32, #tpu.memory_space<vmem>>, vector<1x16xf32>
    %c7_189 = arith.constant 7 : index
    %c0_190 = arith.constant 0 : index
    %236 = vector.load %arg21[%c7_189, %c0_190] : memref<80x16xf32, #tpu.memory_space<vmem>>, vector<1x16xf32>
    %237 = arith.maximumf %235, %236 : vector<1x16xf32>
    %c16_191 = arith.constant 16 : index
    %c0_192 = arith.constant 0 : index
    %238 = vector.load %arg21[%c16_191, %c0_192] : memref<80x16xf32, #tpu.memory_space<vmem>>, vector<1x16xf32>
    %c17 = arith.constant 17 : index
    %c0_193 = arith.constant 0 : index
    %239 = vector.load %arg21[%c17, %c0_193] : memref<80x16xf32, #tpu.memory_space<vmem>>, vector<1x16xf32>
    %240 = arith.maximumf %238, %239 : vector<1x16xf32>
    %241 = arith.maximumf %237, %240 : vector<1x16xf32>
    %c0_194 = arith.constant 0 : index
    %c48 = arith.constant 48 : index
    %242 = vector.load %arg23[%c0_194, %c48] : memref<1x256xf32, #tpu.memory_space<vmem>>, vector<1x16xf32>
    tpu.vector_store %arg23[%c0_194, %c48], %241 {strides = array<i32>} : memref<1x256xf32, #tpu.memory_space<vmem>>, vector<1x16xf32>,
    %c20_195 = arith.constant 20 : index
    %c0_196 = arith.constant 0 : index
    %243 = vector.load %arg21[%c20_195, %c0_196] : memref<80x16xf32, #tpu.memory_space<vmem>>, vector<1x16xf32>
    %c21_197 = arith.constant 21 : index
    %c0_198 = arith.constant 0 : index
    %244 = vector.load %arg21[%c21_197, %c0_198] : memref<80x16xf32, #tpu.memory_space<vmem>>, vector<1x16xf32>
    %245 = arith.maximumf %243, %244 : vector<1x16xf32>
    %c30 = arith.constant 30 : index
    %c0_199 = arith.constant 0 : index
    %246 = vector.load %arg21[%c30, %c0_199] : memref<80x16xf32, #tpu.memory_space<vmem>>, vector<1x16xf32>
    %c31_200 = arith.constant 31 : index
    %c0_201 = arith.constant 0 : index
    %247 = vector.load %arg21[%c31_200, %c0_201] : memref<80x16xf32, #tpu.memory_space<vmem>>, vector<1x16xf32>
    %248 = arith.maximumf %246, %247 : vector<1x16xf32>
    %249 = arith.maximumf %245, %248 : vector<1x16xf32>
    %c0_202 = arith.constant 0 : index
    %c64 = arith.constant 64 : index
    %250 = vector.load %arg23[%c0_202, %c64] : memref<1x256xf32, #tpu.memory_space<vmem>>, vector<1x16xf32>
    tpu.vector_store %arg23[%c0_202, %c64], %249 {strides = array<i32>} : memref<1x256xf32, #tpu.memory_space<vmem>>, vector<1x16xf32>,
    %c22_203 = arith.constant 22 : index
    %c0_204 = arith.constant 0 : index
    %251 = vector.load %arg21[%c22_203, %c0_204] : memref<80x16xf32, #tpu.memory_space<vmem>>, vector<1x16xf32>
    %c23 = arith.constant 23 : index
    %c0_205 = arith.constant 0 : index
    %252 = vector.load %arg21[%c23, %c0_205] : memref<80x16xf32, #tpu.memory_space<vmem>>, vector<1x16xf32>
    %253 = arith.maximumf %251, %252 : vector<1x16xf32>
    %c32_206 = arith.constant 32 : index
    %c0_207 = arith.constant 0 : index
    %254 = vector.load %arg21[%c32_206, %c0_207] : memref<80x16xf32, #tpu.memory_space<vmem>>, vector<1x16xf32>
    %c33 = arith.constant 33 : index
    %c0_208 = arith.constant 0 : index
    %255 = vector.load %arg21[%c33, %c0_208] : memref<80x16xf32, #tpu.memory_space<vmem>>, vector<1x16xf32>
    %256 = arith.maximumf %254, %255 : vector<1x16xf32>
    %257 = arith.maximumf %253, %256 : vector<1x16xf32>
    %c0_209 = arith.constant 0 : index
    %c80 = arith.constant 80 : index
    %258 = vector.load %arg23[%c0_209, %c80] : memref<1x256xf32, #tpu.memory_space<vmem>>, vector<1x16xf32>
    tpu.vector_store %arg23[%c0_209, %c80], %257 {strides = array<i32>} : memref<1x256xf32, #tpu.memory_space<vmem>>, vector<1x16xf32>,
    %c24 = arith.constant 24 : index
    %c0_210 = arith.constant 0 : index
    %259 = vector.load %arg21[%c24, %c0_210] : memref<80x16xf32, #tpu.memory_space<vmem>>, vector<1x16xf32>
    %c25 = arith.constant 25 : index
    %c0_211 = arith.constant 0 : index
    %260 = vector.load %arg21[%c25, %c0_211] : memref<80x16xf32, #tpu.memory_space<vmem>>, vector<1x16xf32>
    %261 = arith.maximumf %259, %260 : vector<1x16xf32>
    %c34 = arith.constant 34 : index
    %c0_212 = arith.constant 0 : index
    %262 = vector.load %arg21[%c34, %c0_212] : memref<80x16xf32, #tpu.memory_space<vmem>>, vector<1x16xf32>
    %c35 = arith.constant 35 : index
    %c0_213 = arith.constant 0 : index
    %263 = vector.load %arg21[%c35, %c0_213] : memref<80x16xf32, #tpu.memory_space<vmem>>, vector<1x16xf32>
    %264 = arith.maximumf %262, %263 : vector<1x16xf32>
    %265 = arith.maximumf %261, %264 : vector<1x16xf32>
    %c0_214 = arith.constant 0 : index
    %c96 = arith.constant 96 : index
    %266 = vector.load %arg23[%c0_214, %c96] : memref<1x256xf32, #tpu.memory_space<vmem>>, vector<1x16xf32>
    tpu.vector_store %arg23[%c0_214, %c96], %265 {strides = array<i32>} : memref<1x256xf32, #tpu.memory_space<vmem>>, vector<1x16xf32>,
    %c26 = arith.constant 26 : index
    %c0_215 = arith.constant 0 : index
    %267 = vector.load %arg21[%c26, %c0_215] : memref<80x16xf32, #tpu.memory_space<vmem>>, vector<1x16xf32>
    %c27 = arith.constant 27 : index
    %c0_216 = arith.constant 0 : index
    %268 = vector.load %arg21[%c27, %c0_216] : memref<80x16xf32, #tpu.memory_space<vmem>>, vector<1x16xf32>
    %269 = arith.maximumf %267, %268 : vector<1x16xf32>
    %c36_217 = arith.constant 36 : index
    %c0_218 = arith.constant 0 : index
    %270 = vector.load %arg21[%c36_217, %c0_218] : memref<80x16xf32, #tpu.memory_space<vmem>>, vector<1x16xf32>
    %c37_219 = arith.constant 37 : index
    %c0_220 = arith.constant 0 : index
    %271 = vector.load %arg21[%c37_219, %c0_220] : memref<80x16xf32, #tpu.memory_space<vmem>>, vector<1x16xf32>
    %272 = arith.maximumf %270, %271 : vector<1x16xf32>
    %273 = arith.maximumf %269, %272 : vector<1x16xf32>
    %c0_221 = arith.constant 0 : index
    %c112 = arith.constant 112 : index
    %274 = vector.load %arg23[%c0_221, %c112] : memref<1x256xf32, #tpu.memory_space<vmem>>, vector<1x16xf32>
    tpu.vector_store %arg23[%c0_221, %c112], %273 {strides = array<i32>} : memref<1x256xf32, #tpu.memory_space<vmem>>, vector<1x16xf32>,
    %c40 = arith.constant 40 : index
    %c0_222 = arith.constant 0 : index
    %275 = vector.load %arg21[%c40, %c0_222] : memref<80x16xf32, #tpu.memory_space<vmem>>, vector<1x16xf32>
    %c41_223 = arith.constant 41 : index
    %c0_224 = arith.constant 0 : index
    %276 = vector.load %arg21[%c41_223, %c0_224] : memref<80x16xf32, #tpu.memory_space<vmem>>, vector<1x16xf32>
    %277 = arith.maximumf %275, %276 : vector<1x16xf32>
    %c50 = arith.constant 50 : index
    %c0_225 = arith.constant 0 : index
    %278 = vector.load %arg21[%c50, %c0_225] : memref<80x16xf32, #tpu.memory_space<vmem>>, vector<1x16xf32>
    %c51_226 = arith.constant 51 : index
    %c0_227 = arith.constant 0 : index
    %279 = vector.load %arg21[%c51_226, %c0_227] : memref<80x16xf32, #tpu.memory_space<vmem>>, vector<1x16xf32>
    %280 = arith.maximumf %278, %279 : vector<1x16xf32>
    %281 = arith.maximumf %277, %280 : vector<1x16xf32>
    %c0_228 = arith.constant 0 : index
    %c128 = arith.constant 128 : index
    %282 = vector.load %arg23[%c0_228, %c128] : memref<1x256xf32, #tpu.memory_space<vmem>>, vector<1x16xf32>
    tpu.vector_store %arg23[%c0_228, %c128], %281 {strides = array<i32>} : memref<1x256xf32, #tpu.memory_space<vmem>>, vector<1x16xf32>,
    %c42 = arith.constant 42 : index
    %c0_229 = arith.constant 0 : index
    %283 = vector.load %arg21[%c42, %c0_229] : memref<80x16xf32, #tpu.memory_space<vmem>>, vector<1x16xf32>
    %c43 = arith.constant 43 : index
    %c0_230 = arith.constant 0 : index
    %284 = vector.load %arg21[%c43, %c0_230] : memref<80x16xf32, #tpu.memory_space<vmem>>, vector<1x16xf32>
    %285 = arith.maximumf %283, %284 : vector<1x16xf32>
    %c52 = arith.constant 52 : index
    %c0_231 = arith.constant 0 : index
    %286 = vector.load %arg21[%c52, %c0_231] : memref<80x16xf32, #tpu.memory_space<vmem>>, vector<1x16xf32>
    %c53 = arith.constant 53 : index
    %c0_232 = arith.constant 0 : index
    %287 = vector.load %arg21[%c53, %c0_232] : memref<80x16xf32, #tpu.memory_space<vmem>>, vector<1x16xf32>
    %288 = arith.maximumf %286, %287 : vector<1x16xf32>
    %289 = arith.maximumf %285, %288 : vector<1x16xf32>
    %c0_233 = arith.constant 0 : index
    %c144_234 = arith.constant 144 : index
    %290 = vector.load %arg23[%c0_233, %c144_234] : memref<1x256xf32, #tpu.memory_space<vmem>>, vector<1x16xf32>
    tpu.vector_store %arg23[%c0_233, %c144_234], %289 {strides = array<i32>} : memref<1x256xf32, #tpu.memory_space<vmem>>, vector<1x16xf32>,
    %c44 = arith.constant 44 : index
    %c0_235 = arith.constant 0 : index
    %291 = vector.load %arg21[%c44, %c0_235] : memref<80x16xf32, #tpu.memory_space<vmem>>, vector<1x16xf32>
    %c45 = arith.constant 45 : index
    %c0_236 = arith.constant 0 : index
    %292 = vector.load %arg21[%c45, %c0_236] : memref<80x16xf32, #tpu.memory_space<vmem>>, vector<1x16xf32>
    %293 = arith.maximumf %291, %292 : vector<1x16xf32>
    %c54_237 = arith.constant 54 : index
    %c0_238 = arith.constant 0 : index
    %294 = vector.load %arg21[%c54_237, %c0_238] : memref<80x16xf32, #tpu.memory_space<vmem>>, vector<1x16xf32>
    %c55_239 = arith.constant 55 : index
    %c0_240 = arith.constant 0 : index
    %295 = vector.load %arg21[%c55_239, %c0_240] : memref<80x16xf32, #tpu.memory_space<vmem>>, vector<1x16xf32>
    %296 = arith.maximumf %294, %295 : vector<1x16xf32>
    %297 = arith.maximumf %293, %296 : vector<1x16xf32>
    %c0_241 = arith.constant 0 : index
    %c160 = arith.constant 160 : index
    %298 = vector.load %arg23[%c0_241, %c160] : memref<1x256xf32, #tpu.memory_space<vmem>>, vector<1x16xf32>
    tpu.vector_store %arg23[%c0_241, %c160], %297 {strides = array<i32>} : memref<1x256xf32, #tpu.memory_space<vmem>>, vector<1x16xf32>,
    %c46 = arith.constant 46 : index
    %c0_242 = arith.constant 0 : index
    %299 = vector.load %arg21[%c46, %c0_242] : memref<80x16xf32, #tpu.memory_space<vmem>>, vector<1x16xf32>
    %c47 = arith.constant 47 : index
    %c0_243 = arith.constant 0 : index
    %300 = vector.load %arg21[%c47, %c0_243] : memref<80x16xf32, #tpu.memory_space<vmem>>, vector<1x16xf32>
    %301 = arith.maximumf %299, %300 : vector<1x16xf32>
    %c56 = arith.constant 56 : index
    %c0_244 = arith.constant 0 : index
    %302 = vector.load %arg21[%c56, %c0_244] : memref<80x16xf32, #tpu.memory_space<vmem>>, vector<1x16xf32>
    %c57 = arith.constant 57 : index
    %c0_245 = arith.constant 0 : index
    %303 = vector.load %arg21[%c57, %c0_245] : memref<80x16xf32, #tpu.memory_space<vmem>>, vector<1x16xf32>
    %304 = arith.maximumf %302, %303 : vector<1x16xf32>
    %305 = arith.maximumf %301, %304 : vector<1x16xf32>
    %c0_246 = arith.constant 0 : index
    %c176 = arith.constant 176 : index
    %306 = vector.load %arg23[%c0_246, %c176] : memref<1x256xf32, #tpu.memory_space<vmem>>, vector<1x16xf32>
    tpu.vector_store %arg23[%c0_246, %c176], %305 {strides = array<i32>} : memref<1x256xf32, #tpu.memory_space<vmem>>, vector<1x16xf32>,
    %c60 = arith.constant 60 : index
    %c0_247 = arith.constant 0 : index
    %307 = vector.load %arg21[%c60, %c0_247] : memref<80x16xf32, #tpu.memory_space<vmem>>, vector<1x16xf32>
    %c61_248 = arith.constant 61 : index
    %c0_249 = arith.constant 0 : index
    %308 = vector.load %arg21[%c61_248, %c0_249] : memref<80x16xf32, #tpu.memory_space<vmem>>, vector<1x16xf32>
    %309 = arith.maximumf %307, %308 : vector<1x16xf32>
    %c70 = arith.constant 70 : index
    %c0_250 = arith.constant 0 : index
    %310 = vector.load %arg21[%c70, %c0_250] : memref<80x16xf32, #tpu.memory_space<vmem>>, vector<1x16xf32>
    %c71_251 = arith.constant 71 : index
    %c0_252 = arith.constant 0 : index
    %311 = vector.load %arg21[%c71_251, %c0_252] : memref<80x16xf32, #tpu.memory_space<vmem>>, vector<1x16xf32>
    %312 = arith.maximumf %310, %311 : vector<1x16xf32>
    %313 = arith.maximumf %309, %312 : vector<1x16xf32>
    %c0_253 = arith.constant 0 : index
    %c192 = arith.constant 192 : index
    %314 = vector.load %arg23[%c0_253, %c192] : memref<1x256xf32, #tpu.memory_space<vmem>>, vector<1x16xf32>
    tpu.vector_store %arg23[%c0_253, %c192], %313 {strides = array<i32>} : memref<1x256xf32, #tpu.memory_space<vmem>>, vector<1x16xf32>,
    %c62 = arith.constant 62 : index
    %c0_254 = arith.constant 0 : index
    %315 = vector.load %arg21[%c62, %c0_254] : memref<80x16xf32, #tpu.memory_space<vmem>>, vector<1x16xf32>
    %c63 = arith.constant 63 : index
    %c0_255 = arith.constant 0 : index
    %316 = vector.load %arg21[%c63, %c0_255] : memref<80x16xf32, #tpu.memory_space<vmem>>, vector<1x16xf32>
    %317 = arith.maximumf %315, %316 : vector<1x16xf32>
    %c72_256 = arith.constant 72 : index
    %c0_257 = arith.constant 0 : index
    %318 = vector.load %arg21[%c72_256, %c0_257] : memref<80x16xf32, #tpu.memory_space<vmem>>, vector<1x16xf32>
    %c73_258 = arith.constant 73 : index
    %c0_259 = arith.constant 0 : index
    %319 = vector.load %arg21[%c73_258, %c0_259] : memref<80x16xf32, #tpu.memory_space<vmem>>, vector<1x16xf32>
    %320 = arith.maximumf %318, %319 : vector<1x16xf32>
    %321 = arith.maximumf %317, %320 : vector<1x16xf32>
    %c0_260 = arith.constant 0 : index
    %c208 = arith.constant 208 : index
    %322 = vector.load %arg23[%c0_260, %c208] : memref<1x256xf32, #tpu.memory_space<vmem>>, vector<1x16xf32>
    tpu.vector_store %arg23[%c0_260, %c208], %321 {strides = array<i32>} : memref<1x256xf32, #tpu.memory_space<vmem>>, vector<1x16xf32>,
    %c64_261 = arith.constant 64 : index
    %c0_262 = arith.constant 0 : index
    %323 = vector.load %arg21[%c64_261, %c0_262] : memref<80x16xf32, #tpu.memory_space<vmem>>, vector<1x16xf32>
    %c65 = arith.constant 65 : index
    %c0_263 = arith.constant 0 : index
    %324 = vector.load %arg21[%c65, %c0_263] : memref<80x16xf32, #tpu.memory_space<vmem>>, vector<1x16xf32>
    %325 = arith.maximumf %323, %324 : vector<1x16xf32>
    %c74 = arith.constant 74 : index
    %c0_264 = arith.constant 0 : index
    %326 = vector.load %arg21[%c74, %c0_264] : memref<80x16xf32, #tpu.memory_space<vmem>>, vector<1x16xf32>
    %c75 = arith.constant 75 : index
    %c0_265 = arith.constant 0 : index
    %327 = vector.load %arg21[%c75, %c0_265] : memref<80x16xf32, #tpu.memory_space<vmem>>, vector<1x16xf32>
    %328 = arith.maximumf %326, %327 : vector<1x16xf32>
    %329 = arith.maximumf %325, %328 : vector<1x16xf32>
    %c0_266 = arith.constant 0 : index
    %c224 = arith.constant 224 : index
    %330 = vector.load %arg23[%c0_266, %c224] : memref<1x256xf32, #tpu.memory_space<vmem>>, vector<1x16xf32>
    tpu.vector_store %arg23[%c0_266, %c224], %329 {strides = array<i32>} : memref<1x256xf32, #tpu.memory_space<vmem>>, vector<1x16xf32>,
    %c66 = arith.constant 66 : index
    %c0_267 = arith.constant 0 : index
    %331 = vector.load %arg21[%c66, %c0_267] : memref<80x16xf32, #tpu.memory_space<vmem>>, vector<1x16xf32>
    %c67 = arith.constant 67 : index
    %c0_268 = arith.constant 0 : index
    %332 = vector.load %arg21[%c67, %c0_268] : memref<80x16xf32, #tpu.memory_space<vmem>>, vector<1x16xf32>
    %333 = arith.maximumf %331, %332 : vector<1x16xf32>
    %c76 = arith.constant 76 : index
    %c0_269 = arith.constant 0 : index
    %334 = vector.load %arg21[%c76, %c0_269] : memref<80x16xf32, #tpu.memory_space<vmem>>, vector<1x16xf32>
    %c77 = arith.constant 77 : index
    %c0_270 = arith.constant 0 : index
    %335 = vector.load %arg21[%c77, %c0_270] : memref<80x16xf32, #tpu.memory_space<vmem>>, vector<1x16xf32>
    %336 = arith.maximumf %334, %335 : vector<1x16xf32>
    %337 = arith.maximumf %333, %336 : vector<1x16xf32>
    %c0_271 = arith.constant 0 : index
    %c240 = arith.constant 240 : index
    %338 = vector.load %arg23[%c0_271, %c240] : memref<1x256xf32, #tpu.memory_space<vmem>>, vector<1x16xf32>
    tpu.vector_store %arg23[%c0_271, %c240], %337 {strides = array<i32>} : memref<1x256xf32, #tpu.memory_space<vmem>>, vector<1x16xf32>,
    %c0_272 = arith.constant 0 : index
    %c0_273 = arith.constant 0 : index
    %339 = vector.load %arg23[%c0_272, %c0_273] : memref<1x256xf32, #tpu.memory_space<vmem>>, vector<1x256xf32>
    %340 = arith.truncf %339 : vector<1x256xf32> to vector<1x256xbf16>
    %c0_274 = arith.constant 0 : index
    %c0_275 = arith.constant 0 : index
    %341 = vector.load %arg8[%c0_274, %c0_275] : memref<256x32xbf16, #tpu.memory_space<vmem>>, vector<256x32xbf16>
    %cst_276 = arith.constant dense<0.000000e+00> : vector<1x32xf32>
    %342 = tpu.matmul %340, %341, %cst_276 {dimension_numbers = #tpu.dot_dimension_numbers<[1], [0], [0], [1], [0, 0, 1, 1], [], []>} : vector<1x256xbf16>, vector<256x32xbf16>, vector<1x32xf32> -> vector<1x32xf32>
    %c0_277 = arith.constant 0 : index
    %c0_278 = arith.constant 0 : index
    %343 = vector.load %arg11[%c0_277, %c0_278] : memref<1x32xf32, #tpu.memory_space<vmem>>, vector<1x32xf32>
    %344 = arith.addf %342, %343 : vector<1x32xf32>
    %c0_279 = arith.constant 0 : index
    %c0_280 = arith.constant 0 : index
    %345 = vector.load %arg9[%c0_279, %c0_280] : memref<256x32xbf16, #tpu.memory_space<vmem>>, vector<256x32xbf16>
    %cst_281 = arith.constant dense<0.000000e+00> : vector<1x32xf32>
    %346 = tpu.matmul %340, %345, %cst_281 {dimension_numbers = #tpu.dot_dimension_numbers<[1], [0], [0], [1], [0, 0, 1, 1], [], []>} : vector<1x256xbf16>, vector<256x32xbf16>, vector<1x32xf32> -> vector<1x32xf32>
    %c0_282 = arith.constant 0 : index
    %c0_283 = arith.constant 0 : index
    %347 = vector.load %arg12[%c0_282, %c0_283] : memref<1x32xf32, #tpu.memory_space<vmem>>, vector<1x32xf32>
    %348 = arith.addf %346, %347 : vector<1x32xf32>
    %c0_284 = arith.constant 0 : index
    %c0_285 = arith.constant 0 : index
    %349 = vector.load %arg10[%c0_284, %c0_285] : memref<256x32xbf16, #tpu.memory_space<vmem>>, vector<256x32xbf16>
    %cst_286 = arith.constant dense<0.000000e+00> : vector<1x32xf32>
    %350 = tpu.matmul %340, %349, %cst_286 {dimension_numbers = #tpu.dot_dimension_numbers<[1], [0], [0], [1], [0, 0, 1, 1], [], []>} : vector<1x256xbf16>, vector<256x32xbf16>, vector<1x32xf32> -> vector<1x32xf32>
    %c0_287 = arith.constant 0 : index
    %c0_288 = arith.constant 0 : index
    %351 = vector.load %arg13[%c0_287, %c0_288] : memref<1x32xf32, #tpu.memory_space<vmem>>, vector<1x32xf32>
    %352 = arith.addf %350, %351 : vector<1x32xf32>
    %353 = arith.negf %344 : vector<1x32xf32>
    %354 = math.exp %353 : vector<1x32xf32>
    %cst_289 = arith.constant 1.000000e+00 : f32
    %355 = vector.broadcast %cst_289 : f32 to vector<1x32xf32>
    %356 = arith.addf %355, %354 : vector<1x32xf32>
    %357 = arith.divf %355, %356 : vector<1x32xf32>
    %358 = math.tanh %348 : vector<1x32xf32>
    %359 = arith.mulf %357, %358 : vector<1x32xf32>
    %360 = arith.negf %352 : vector<1x32xf32>
    %361 = math.exp %360 : vector<1x32xf32>
    %cst_290 = arith.constant 1.000000e+00 : f32
    %362 = vector.broadcast %cst_290 : f32 to vector<1x32xf32>
    %363 = arith.addf %362, %361 : vector<1x32xf32>
    %364 = arith.divf %362, %363 : vector<1x32xf32>
    %365 = math.tanh %359 : vector<1x32xf32>
    %366 = arith.mulf %364, %365 : vector<1x32xf32>
    %367 = arith.truncf %366 : vector<1x32xf32> to vector<1x32xbf16>
    %c0_291 = arith.constant 0 : index
    %c0_292 = arith.constant 0 : index
    %368 = vector.load %arg14[%c0_291, %c0_292] : memref<32x32xbf16, #tpu.memory_space<vmem>>, vector<32x32xbf16>
    %cst_293 = arith.constant dense<0.000000e+00> : vector<1x32xf32>
    %369 = tpu.matmul %367, %368, %cst_293 {dimension_numbers = #tpu.dot_dimension_numbers<[1], [0], [0], [1], [0, 0, 1, 1], [], []>} : vector<1x32xbf16>, vector<32x32xbf16>, vector<1x32xf32> -> vector<1x32xf32>
    %c0_294 = arith.constant 0 : index
    %c0_295 = arith.constant 0 : index
    %370 = vector.load %arg15[%c0_294, %c0_295] : memref<1x32xf32, #tpu.memory_space<vmem>>, vector<1x32xf32>
    %371 = arith.mulf %369, %370 : vector<1x32xf32>
    %c0_296 = arith.constant 0 : index
    %c0_297 = arith.constant 0 : index
    %372 = vector.load %arg16[%c0_296, %c0_297] : memref<1x32xf32, #tpu.memory_space<vmem>>, vector<1x32xf32>
    %373 = arith.addf %371, %372 : vector<1x32xf32>
    %cst_298 = arith.constant 0.000000e+00 : f32
    %374 = vector.broadcast %cst_298 : f32 to vector<1x32xf32>
    %375 = arith.cmpf oge, %373, %374 : vector<1x32xf32>
    %cst_299 = arith.constant 0.00999999977 : f32
    %376 = vector.broadcast %cst_299 : f32 to vector<1x32xf32>
    %377 = arith.mulf %376, %373 : vector<1x32xf32>
    %378 = arith.select %375, %373, %377 : vector<1x32xi1>, vector<1x32xf32>
    %379 = arith.truncf %378 : vector<1x32xf32> to vector<1x32xbf16>
    %c0_300 = arith.constant 0 : index
    %c0_301 = arith.constant 0 : index
    %380 = vector.load %arg17[%c0_300, %c0_301] : memref<32x10xbf16, #tpu.memory_space<vmem>>, vector<32x10xbf16>
    %cst_302 = arith.constant dense<0.000000e+00> : vector<1x10xf32>
    %381 = tpu.matmul %379, %380, %cst_302 {dimension_numbers = #tpu.dot_dimension_numbers<[1], [0], [0], [1], [0, 0, 1, 1], [], []>} : vector<1x32xbf16>, vector<32x10xbf16>, vector<1x10xf32> -> vector<1x10xf32>
    %c0_303 = arith.constant 0 : index
    %c0_304 = arith.constant 0 : index
    %382 = vector.load %arg18[%c0_303, %c0_304] : memref<1x10xf32, #tpu.memory_space<vmem>>, vector<1x10xf32>
    %383 = arith.addf %381, %382 : vector<1x10xf32>
    %cst_305 = arith.constant dense<0xFF800000> : vector<1xf32>
    %384 = vector.multi_reduction <maximumf>, %383, %cst_305 [1] : vector<1x10xf32> to vector<1xf32>
    %385 = vector.shape_cast %384 : vector<1xf32> to vector<1x1xf32>
    %386 = vector.broadcast %385 : vector<1x1xf32> to vector<1x10xf32>
    %387 = arith.subf %383, %386 : vector<1x10xf32>
    %388 = math.exp %387 : vector<1x10xf32>
    %cst_306 = arith.constant dense<0.000000e+00> : vector<1xf32>
    %389 = vector.multi_reduction <add>, %388, %cst_306 [1] : vector<1x10xf32> to vector<1xf32>
    %390 = vector.shape_cast %389 : vector<1xf32> to vector<1x1xf32>
    %391 = math.log %390 : vector<1x1xf32>
    %392 = vector.broadcast %391 : vector<1x1xf32> to vector<1x10xf32>
    %393 = arith.subf %387, %392 : vector<1x10xf32>
    %c0_307 = arith.constant 0 : index
    %c0_308 = arith.constant 0 : index
    %c0_309 = arith.constant 0 : index
    %394 = vector.load %arg19[%c0_307, %c0_308, %c0_309] : memref<1x1x10xf32, #tpu.memory_space<vmem>>, vector<1x1x10xf32>
    %395 = vector.shape_cast %394 : vector<1x1x10xf32> to vector<1x10xf32>
    %396 = vector.shape_cast %393 : vector<1x10xf32> to vector<1x1x10xf32>
    tpu.vector_store %arg19[%c0_307, %c0_308, %c0_309], %396 {strides = array<i32>} : memref<1x1x10xf32, #tpu.memory_space<vmem>>, vector<1x1x10xf32>,
    return
  }
  func.func @transform_0(%arg0: i32) -> (i32, i32) {
    %c0_i32 = arith.constant 0 : i32
    %c0_i32_0 = arith.constant 0 : i32
    return %arg0, %c0_i32 : i32, i32
  }
  func.func @transform_1(%arg0: i32) -> (i32, i32, i32) {
    %c0_i32 = arith.constant 0 : i32
    %c0_i32_0 = arith.constant 0 : i32
    %c0_i32_1 = arith.constant 0 : i32
    %c0_i32_2 = arith.constant 0 : i32
    return %c0_i32, %c0_i32_0, %c0_i32_1 : i32, i32, i32
  }
  func.func @transform_2(%arg0: i32) -> (i32, i32) {
    %c0_i32 = arith.constant 0 : i32
    %c0_i32_0 = arith.constant 0 : i32
    %c0_i32_1 = arith.constant 0 : i32
    return %c0_i32, %c0_i32_0 : i32, i32
  }
  func.func @transform_3(%arg0: i32) -> (i32, i32) {
    %c0_i32 = arith.constant 0 : i32
    %c0_i32_0 = arith.constant 0 : i32
    %c0_i32_1 = arith.constant 0 : i32
    return %c0_i32, %c0_i32_0 : i32, i32
  }
  func.func @transform_4(%arg0: i32) -> (i32, i32, i32) {
    %c0_i32 = arith.constant 0 : i32
    %c0_i32_0 = arith.constant 0 : i32
    %c0_i32_1 = arith.constant 0 : i32
    %c0_i32_2 = arith.constant 0 : i32
    return %c0_i32, %c0_i32_0, %c0_i32_1 : i32, i32, i32
  }
  func.func @transform_5(%arg0: i32) -> (i32, i32) {
    %c0_i32 = arith.constant 0 : i32
    %c0_i32_0 = arith.constant 0 : i32
    %c0_i32_1 = arith.constant 0 : i32
    return %c0_i32, %c0_i32_0 : i32, i32
  }
  func.func @transform_6(%arg0: i32) -> (i32, i32) {
    %c0_i32 = arith.constant 0 : i32
    %c0_i32_0 = arith.constant 0 : i32
    %c0_i32_1 = arith.constant 0 : i32
    return %c0_i32, %c0_i32_0 : i32, i32
  }
  func.func @transform_7(%arg0: i32) -> (i32, i32) {
    %c0_i32 = arith.constant 0 : i32
    %c0_i32_0 = arith.constant 0 : i32
    %c0_i32_1 = arith.constant 0 : i32
    return %c0_i32, %c0_i32_0 : i32, i32
  }
  func.func @transform_8(%arg0: i32) -> (i32, i32) {
    %c0_i32 = arith.constant 0 : i32
    %c0_i32_0 = arith.constant 0 : i32
    %c0_i32_1 = arith.constant 0 : i32
    return %c0_i32, %c0_i32_0 : i32, i32
  }
  func.func @transform_9(%arg0: i32) -> (i32, i32) {
    %c0_i32 = arith.constant 0 : i32
    %c0_i32_0 = arith.constant 0 : i32
    %c0_i32_1 = arith.constant 0 : i32
    return %c0_i32, %c0_i32_0 : i32, i32
  }
  func.func @transform_10(%arg0: i32) -> (i32, i32) {
    %c0_i32 = arith.constant 0 : i32
    %c0_i32_0 = arith.constant 0 : i32
    %c0_i32_1 = arith.constant 0 : i32
    return %c0_i32, %c0_i32_0 : i32, i32
  }
  func.func @transform_11(%arg0: i32) -> (i32, i32) {
    %c0_i32 = arith.constant 0 : i32
    %c0_i32_0 = arith.constant 0 : i32
    %c0_i32_1 = arith.constant 0 : i32
    return %c0_i32, %c0_i32_0 : i32, i32
  }
  func.func @transform_12(%arg0: i32) -> (i32, i32) {
    %c0_i32 = arith.constant 0 : i32
    %c0_i32_0 = arith.constant 0 : i32
    %c0_i32_1 = arith.constant 0 : i32
    return %c0_i32, %c0_i32_0 : i32, i32
  }
  func.func @transform_13(%arg0: i32) -> (i32, i32) {
    %c0_i32 = arith.constant 0 : i32
    %c0_i32_0 = arith.constant 0 : i32
    %c0_i32_1 = arith.constant 0 : i32
    return %c0_i32, %c0_i32_0 : i32, i32
  }
  func.func @transform_14(%arg0: i32) -> (i32, i32) {
    %c0_i32 = arith.constant 0 : i32
    %c0_i32_0 = arith.constant 0 : i32
    %c0_i32_1 = arith.constant 0 : i32
    return %c0_i32, %c0_i32_0 : i32, i32
  }
  func.func @transform_15(%arg0: i32) -> (i32, i32) {
    %c0_i32 = arith.constant 0 : i32
    %c0_i32_0 = arith.constant 0 : i32
    %c0_i32_1 = arith.constant 0 : i32
    return %c0_i32, %c0_i32_0 : i32, i32
  }
  func.func @transform_16(%arg0: i32) -> (i32, i32) {
    %c0_i32 = arith.constant 0 : i32
    %c0_i32_0 = arith.constant 0 : i32
    %c0_i32_1 = arith.constant 0 : i32
    return %c0_i32, %c0_i32_0 : i32, i32
  }
  func.func @transform_17(%arg0: i32) -> (i32, i32) {
    %c0_i32 = arith.constant 0 : i32
    %c0_i32_0 = arith.constant 0 : i32
    %c0_i32_1 = arith.constant 0 : i32
    return %c0_i32, %c0_i32_0 : i32, i32
  }
  func.func @transform_18(%arg0: i32) -> (i32, i32, i32) {
    %c0_i32 = arith.constant 0 : i32
    %c0_i32_0 = arith.constant 0 : i32
    %c0_i32_1 = arith.constant 0 : i32
    return %arg0, %c0_i32, %c0_i32_0 : i32, i32, i32
  }
}

</mosaic_0001>

<llo_original>
// kernel: forward.1
$region0: #{forward.1}
  #allocation0 [shape = 'u32[]', space=smem, size = 0x4, offset = 0x4, fixed_abs, tag = 'smem constant byte address 0x4 - core index']
  #allocation1 [shape = 'u32[72,128]{1,0:T(1,128)}', space=vmem, size = 0x9000, scoped, tag = 'internal scratch']
  #allocation2 [shape = 'f32[288,8]{1,0:T(8,128)}', space=vmem, size = 0x24000, scoped, tag = 'scratch operand']
  #allocation3 [shape = 'f32[80,16]{1,0:T(8,128)}', space=vmem, size = 0xa000, scoped, tag = 'scratch operand']
  #allocation4 [shape = 'f32[104,8]{1,0:T(8,128)}', space=vmem, size = 0xd000, scoped, tag = 'scratch operand']
  #allocation5 [shape = 'f32[1,256]{1,0:T(1,128)}', space=vmem, size = 0x400, scoped, tag = 'scratch operand']
  %s0 = inlined_call_operand.vmem [shape: f32[656,4], index: 0, kind: input, shape index: {}]
  %s1 = inlined_call_operand.vmem [shape: bf16[9,4,8], index: 1, kind: input, shape index: {}]
  %s2 = inlined_call_operand.vmem [shape: f32[1,8], index: 2, kind: input, shape index: {}]
  %s3 = inlined_call_operand.vmem [shape: f32[1,8], index: 3, kind: input, shape index: {}]
  %s4 = inlined_call_operand.vmem [shape: bf16[9,8,16], index: 4, kind: input, shape index: {}]
  %s5 = inlined_call_operand.vmem [shape: f32[1,16], index: 5, kind: input, shape index: {}]
  %s6 = inlined_call_operand.vmem [shape: f32[1,16], index: 6, kind: input, shape index: {}]
  %s7 = inlined_call_operand.vmem [shape: bf16[256,32], index: 7, kind: input, shape index: {}]
  %s8 = inlined_call_operand.vmem [shape: bf16[256,32], index: 8, kind: input, shape index: {}]
  %s9 = inlined_call_operand.vmem [shape: bf16[256,32], index: 9, kind: input, shape index: {}]
  %s10 = inlined_call_operand.vmem [shape: f32[1,32], index: 10, kind: input, shape index: {}]
  %s11 = inlined_call_operand.vmem [shape: f32[1,32], index: 11, kind: input, shape index: {}]
  %s12 = inlined_call_operand.vmem [shape: f32[1,32], index: 12, kind: input, shape index: {}]
  %s13 = inlined_call_operand.vmem [shape: bf16[32,32], index: 13, kind: input, shape index: {}]
  %s14 = inlined_call_operand.vmem [shape: f32[1,32], index: 14, kind: input, shape index: {}]
  %s15 = inlined_call_operand.vmem [shape: f32[1,32], index: 15, kind: input, shape index: {}]
  %s16 = inlined_call_operand.vmem [shape: bf16[32,10], index: 16, kind: input, shape index: {}]
  %s17 = inlined_call_operand.vmem [shape: f32[1,10], index: 17, kind: input, shape index: {}]
  %s18 = inlined_call_operand.hbm [shape: f32[2,1,10], index: 18, kind: output, shape index: {}]
  %s19 = sld [smem:[#allocation0]]
  $region105: #{forward.1} parent=0
    _
  %s21 = ssub.s32 1, %s19
  %s22 = scalar_select 0, %s21, %s19
  $region1: #{forward.1} parent=0
    #allocation6 [shape = 'u8[1024]{0}', space=vmem, size = 0x400, scoped, tag = 'output window, operand 0']
    #allocation7 [shape = 's32[2]{0}', space=sflag, size = 0x8, scoped, tag = 'scoped memory for forward.1']
    %23 = vsyncpa [#allocation7], 0
    %s24 = scalar_lea.sflag [#allocation7], 1
    %25 = vsyncpa %s24, 0
    loop: start=0, step=1, limit=4
    $region2: #{forward.1} parent=1 // loop_pre_header
      _
    $region3: #{forward.1} parent=1 // loop_header
      %s27 = sphi 0, %s31
      %p28 = scmp.ge.s32.totalorder %s27, 4
      %s37 = sphi 0, %s39
      %s40 = sphi 0, %s37
      %s41 = sphi 0, %s40
      %s57 = sphi 0, %s41
      %s61 = sphi 0, %s61
      %s63 = sphi 0, %s61
      %s64 = sphi 0, %s63
      %s78 = sphi 0, %s64
      %s82 = sphi 0, %s82
      %s84 = sphi 0, %s82
      %s85 = sphi 0, %s84
      %s99 = sphi 0, %s85
      %s103 = sphi 0, %s103
      %s105 = sphi 0, %s103
      %s106 = sphi 0, %s105
      %s120 = sphi 0, %s106
      %s124 = sphi 0, %s124
      %s126 = sphi 0, %s124
      %s127 = sphi 0, %s126
      %s141 = sphi 0, %s127
      %s145 = sphi 0, %s145
      %s147 = sphi 0, %s145
      %s148 = sphi 0, %s147
      %s162 = sphi 0, %s148
      %s166 = sphi 0, %s166
      %s168 = sphi 0, %s166
      %s169 = sphi 0, %s168
      %s183 = sphi 0, %s169
      %s187 = sphi 0, %s187
      %s189 = sphi 0, %s187
      %s190 = sphi 0, %s189
      %s204 = sphi 0, %s190
      %s208 = sphi 0, %s208
      %s210 = sphi 0, %s208
      %s211 = sphi 0, %s210
      %s225 = sphi 0, %s211
      %s229 = sphi 0, %s229
      %s231 = sphi 0, %s229
      %s232 = sphi 0, %s231
      %s246 = sphi 0, %s232
      %s250 = sphi 0, %s250
      %s252 = sphi 0, %s250
      %s253 = sphi 0, %s252
      %s267 = sphi 0, %s253
      %s271 = sphi 0, %s271
      %s273 = sphi 0, %s271
      %s274 = sphi 0, %s273
      %s288 = sphi 0, %s274
      %s292 = sphi 0, %s292
      %s294 = sphi 0, %s292
      %s295 = sphi 0, %s294
      %s309 = sphi 0, %s295
      %s313 = sphi 0, %s313
      %s315 = sphi 0, %s313
      %s316 = sphi 0, %s315
      %s330 = sphi 0, %s316
      %s334 = sphi 0, %s334
      %s336 = sphi 0, %s334
      %s337 = sphi 0, %s336
      %s351 = sphi 0, %s337
      %s355 = sphi 0, %s355
      %s357 = sphi 0, %s355
      %s358 = sphi 0, %s357
      %s372 = sphi 0, %s358
      %s376 = sphi 0, %s376
      %s378 = sphi 0, %s376
      %s379 = sphi 0, %s378
      %s393 = sphi 0, %s379
      %s397 = sphi 0, %s397
      %s399 = sphi 0, %s397
      %s400 = sphi 0, %s399
      %s414 = sphi 0, %s400
      %s420 = sphi 0, %s422
      %s423 = sphi 0, %s420
      %s424 = sphi 0, %s423
      %s440 = sphi 0, %s424
    $region4: #{forward.1} parent=1 // loop_header_branch
      %30 = sbr.rel (%p28) target = $region8
    $region5: #{forward.1} parent=1 // loop_body
      %s32 = ssub.s32 %s27, 1
      %s33 = ssub.s32 %s27, 2
      %s34 = sadd.s32 %s27, 1
      %s35 = ssub.s32 %s27, %s34
      %p36 = scmp.eq.s32.totalorder %s35, 0
      %s38 = sadd.s32 %s37, 1
      %s39 = scalar_select %p36, %s37, %s38
      %p42 = pneg %p36
      %p43 = scmp.eq.s32.totalorder %s27, 1
      %p44 = por %p42, %p43
      %p45 = scmp.ne.s32.totalorder %s37, %s40
      %p46 = scmp.eq.s32.totalorder %s27, 0
      %p47 = por %p45, %p46
      %p48 = scmp.ne.s32.totalorder %s37, %s40
      %p49 = scmp.eq.s32.totalorder %s32, 1
      %p50 = por %p48, %p49
      %p51 = scmp.ne.s32.totalorder %s40, %s41
      %p52 = scmp.eq.s32.totalorder %s32, 0
      %p53 = por %p51, %p52
      %p54 = scmp.ne.s32.totalorder %s40, %s41
      %p55 = scmp.eq.s32.totalorder %s33, 1
      %p56 = por %p54, %p55
      %p58 = scmp.ne.s32.totalorder %s41, %s57
      %p59 = scmp.eq.s32.totalorder %s33, 0
      %p60 = por %p58, %p59
      %s62 = sadd.s32 %s61, 1
      %p65 = scmp.eq.s32.totalorder %s27, 1
      %p66 = scmp.ne.s32.totalorder %s61, %s63
      %p67 = scmp.eq.s32.totalorder %s27, 0
      %p68 = por %p66, %p67
      %p69 = scmp.ne.s32.totalorder %s61, %s63
      %p70 = scmp.eq.s32.totalorder %s32, 1
      %p71 = por %p69, %p70
      %p72 = scmp.ne.s32.totalorder %s63, %s64
      %p73 = scmp.eq.s32.totalorder %s32, 0
      %p74 = por %p72, %p73
      %p75 = scmp.ne.s32.totalorder %s63, %s64
      %p76 = scmp.eq.s32.totalorder %s33, 1
      %p77 = por %p75, %p76
      %p79 = scmp.ne.s32.totalorder %s64, %s78
      %p80 = scmp.eq.s32.totalorder %s33, 0
      %p81 = por %p79, %p80
      %s83 = sadd.s32 %s82, 1
      %p86 = scmp.eq.s32.totalorder %s27, 1
      %p87 = scmp.ne.s32.totalorder %s82, %s84
      %p88 = scmp.eq.s32.totalorder %s27, 0
      %p89 = por %p87, %p88
      %p90 = scmp.ne.s32.totalorder %s82, %s84
      %p91 = scmp.eq.s32.totalorder %s32, 1
      %p92 = por %p90, %p91
      %p93 = scmp.ne.s32.totalorder %s84, %s85
      %p94 = scmp.eq.s32.totalorder %s32, 0
      %p95 = por %p93, %p94
      %p96 = scmp.ne.s32.totalorder %s84, %s85
      %p97 = scmp.eq.s32.totalorder %s33, 1
      %p98 = por %p96, %p97
      %p100 = scmp.ne.s32.totalorder %s85, %s99
      %p101 = scmp.eq.s32.totalorder %s33, 0
      %p102 = por %p100, %p101
      %s104 = sadd.s32 %s103, 1
      %p107 = scmp.eq.s32.totalorder %s27, 1
      %p108 = scmp.ne.s32.totalorder %s103, %s105
      %p109 = scmp.eq.s32.totalorder %s27, 0
      %p110 = por %p108, %p109
      %p111 = scmp.ne.s32.totalorder %s103, %s105
      %p112 = scmp.eq.s32.totalorder %s32, 1
      %p113 = por %p111, %p112
      %p114 = scmp.ne.s32.totalorder %s105, %s106
      %p115 = scmp.eq.s32.totalorder %s32, 0
      %p116 = por %p114, %p115
      %p117 = scmp.ne.s32.totalorder %s105, %s106
      %p118 = scmp.eq.s32.totalorder %s33, 1
      %p119 = por %p117, %p118
      %p121 = scmp.ne.s32.totalorder %s106, %s120
      %p122 = scmp.eq.s32.totalorder %s33, 0
      %p123 = por %p121, %p122
      %s125 = sadd.s32 %s124, 1
      %p128 = scmp.eq.s32.totalorder %s27, 1
      %p129 = scmp.ne.s32.totalorder %s124, %s126
      %p130 = scmp.eq.s32.totalorder %s27, 0
      %p131 = por %p129, %p130
      %p132 = scmp.ne.s32.totalorder %s124, %s126
      %p133 = scmp.eq.s32.totalorder %s32, 1
      %p134 = por %p132, %p133
      %p135 = scmp.ne.s32.totalorder %s126, %s127
      %p136 = scmp.eq.s32.totalorder %s32, 0
      %p137 = por %p135, %p136
      %p138 = scmp.ne.s32.totalorder %s126, %s127
      %p139 = scmp.eq.s32.totalorder %s33, 1
      %p140 = por %p138, %p139
      %p142 = scmp.ne.s32.totalorder %s127, %s141
      %p143 = scmp.eq.s32.totalorder %s33, 0
      %p144 = por %p142, %p143
      %s146 = sadd.s32 %s145, 1
      %p149 = scmp.eq.s32.totalorder %s27, 1
      %p150 = scmp.ne.s32.totalorder %s145, %s147
      %p151 = scmp.eq.s32.totalorder %s27, 0
      %p152 = por %p150, %p151
      %p153 = scmp.ne.s32.totalorder %s145, %s147
      %p154 = scmp.eq.s32.totalorder %s32, 1
      %p155 = por %p153, %p154
      %p156 = scmp.ne.s32.totalorder %s147, %s148
      %p157 = scmp.eq.s32.totalorder %s32, 0
      %p158 = por %p156, %p157
      %p159 = scmp.ne.s32.totalorder %s147, %s148
      %p160 = scmp.eq.s32.totalorder %s33, 1
      %p161 = por %p159, %p160
      %p163 = scmp.ne.s32.totalorder %s148, %s162
      %p164 = scmp.eq.s32.totalorder %s33, 0
      %p165 = por %p163, %p164
      %s167 = sadd.s32 %s166, 1
      %p170 = scmp.eq.s32.totalorder %s27, 1
      %p171 = scmp.ne.s32.totalorder %s166, %s168
      %p172 = scmp.eq.s32.totalorder %s27, 0
      %p173 = por %p171, %p172
      %p174 = scmp.ne.s32.totalorder %s166, %s168
      %p175 = scmp.eq.s32.totalorder %s32, 1
      %p176 = por %p174, %p175
      %p177 = scmp.ne.s32.totalorder %s168, %s169
      %p178 = scmp.eq.s32.totalorder %s32, 0
      %p179 = por %p177, %p178
      %p180 = scmp.ne.s32.totalorder %s168, %s169
      %p181 = scmp.eq.s32.totalorder %s33, 1
      %p182 = por %p180, %p181
      %p184 = scmp.ne.s32.totalorder %s169, %s183
      %p185 = scmp.eq.s32.totalorder %s33, 0
      %p186 = por %p184, %p185
      %s188 = sadd.s32 %s187, 1
      %p191 = scmp.eq.s32.totalorder %s27, 1
      %p192 = scmp.ne.s32.totalorder %s187, %s189
      %p193 = scmp.eq.s32.totalorder %s27, 0
      %p194 = por %p192, %p193
      %p195 = scmp.ne.s32.totalorder %s187, %s189
      %p196 = scmp.eq.s32.totalorder %s32, 1
      %p197 = por %p195, %p196
      %p198 = scmp.ne.s32.totalorder %s189, %s190
      %p199 = scmp.eq.s32.totalorder %s32, 0
      %p200 = por %p198, %p199
      %p201 = scmp.ne.s32.totalorder %s189, %s190
      %p202 = scmp.eq.s32.totalorder %s33, 1
      %p203 = por %p201, %p202
      %p205 = scmp.ne.s32.totalorder %s190, %s204
      %p206 = scmp.eq.s32.totalorder %s33, 0
      %p207 = por %p205, %p206
      %s209 = sadd.s32 %s208, 1
      %p212 = scmp.eq.s32.totalorder %s27, 1
      %p213 = scmp.ne.s32.totalorder %s208, %s210
      %p214 = scmp.eq.s32.totalorder %s27, 0
      %p215 = por %p213, %p214
      %p216 = scmp.ne.s32.totalorder %s208, %s210
      %p217 = scmp.eq.s32.totalorder %s32, 1
      %p218 = por %p216, %p217
      %p219 = scmp.ne.s32.totalorder %s210, %s211
      %p220 = scmp.eq.s32.totalorder %s32, 0
      %p221 = por %p219, %p220
      %p222 = scmp.ne.s32.totalorder %s210, %s211
      %p223 = scmp.eq.s32.totalorder %s33, 1
      %p224 = por %p222, %p223
      %p226 = scmp.ne.s32.totalorder %s211, %s225
      %p227 = scmp.eq.s32.totalorder %s33, 0
      %p228 = por %p226, %p227
      %s230 = sadd.s32 %s229, 1
      %p233 = scmp.eq.s32.totalorder %s27, 1
      %p234 = scmp.ne.s32.totalorder %s229, %s231
      %p235 = scmp.eq.s32.totalorder %s27, 0
      %p236 = por %p234, %p235
      %p237 = scmp.ne.s32.totalorder %s229, %s231
      %p238 = scmp.eq.s32.totalorder %s32, 1
      %p239 = por %p237, %p238
      %p240 = scmp.ne.s32.totalorder %s231, %s232
      %p241 = scmp.eq.s32.totalorder %s32, 0
      %p242 = por %p240, %p241
      %p243 = scmp.ne.s32.totalorder %s231, %s232
      %p244 = scmp.eq.s32.totalorder %s33, 1
      %p245 = por %p243, %p244
      %p247 = scmp.ne.s32.totalorder %s232, %s246
      %p248 = scmp.eq.s32.totalorder %s33, 0
      %p249 = por %p247, %p248
      %s251 = sadd.s32 %s250, 1
      %p254 = scmp.eq.s32.totalorder %s27, 1
      %p255 = scmp.ne.s32.totalorder %s250, %s252
      %p256 = scmp.eq.s32.totalorder %s27, 0
      %p257 = por %p255, %p256
      %p258 = scmp.ne.s32.totalorder %s250, %s252
      %p259 = scmp.eq.s32.totalorder %s32, 1
      %p260 = por %p258, %p259
      %p261 = scmp.ne.s32.totalorder %s252, %s253
      %p262 = scmp.eq.s32.totalorder %s32, 0
      %p263 = por %p261, %p262
      %p264 = scmp.ne.s32.totalorder %s252, %s253
      %p265 = scmp.eq.s32.totalorder %s33, 1
      %p266 = por %p264, %p265
      %p268 = scmp.ne.s32.totalorder %s253, %s267
      %p269 = scmp.eq.s32.totalorder %s33, 0
      %p270 = por %p268, %p269
      %s272 = sadd.s32 %s271, 1
      %p275 = scmp.eq.s32.totalorder %s27, 1
      %p276 = scmp.ne.s32.totalorder %s271, %s273
      %p277 = scmp.eq.s32.totalorder %s27, 0
      %p278 = por %p276, %p277
      %p279 = scmp.ne.s32.totalorder %s271, %s273
      %p280 = scmp.eq.s32.totalorder %s32, 1
      %p281 = por %p279, %p280
      %p282 = scmp.ne.s32.totalorder %s273, %s274
      %p283 = scmp.eq.s32.totalorder %s32, 0
      %p284 = por %p282, %p283
      %p285 = scmp.ne.s32.totalorder %s273, %s274
      %p286 = scmp.eq.s32.totalorder %s33, 1
      %p287 = por %p285, %p286
      %p289 = scmp.ne.s32.totalorder %s274, %s288
      %p290 = scmp.eq.s32.totalorder %s33, 0
      %p291 = por %p289, %p290
      %s293 = sadd.s32 %s292, 1
      %p296 = scmp.eq.s32.totalorder %s27, 1
      %p297 = scmp.ne.s32.totalorder %s292, %s294
      %p298 = scmp.eq.s32.totalorder %s27, 0
      %p299 = por %p297, %p298
      %p300 = scmp.ne.s32.totalorder %s292, %s294
      %p301 = scmp.eq.s32.totalorder %s32, 1
      %p302 = por %p300, %p301
      %p303 = scmp.ne.s32.totalorder %s294, %s295
      %p304 = scmp.eq.s32.totalorder %s32, 0
      %p305 = por %p303, %p304
      %p306 = scmp.ne.s32.totalorder %s294, %s295
      %p307 = scmp.eq.s32.totalorder %s33, 1
      %p308 = por %p306, %p307
      %p310 = scmp.ne.s32.totalorder %s295, %s309
      %p311 = scmp.eq.s32.totalorder %s33, 0
      %p312 = por %p310, %p311
      %s314 = sadd.s32 %s313, 1
      %p317 = scmp.eq.s32.totalorder %s27, 1
      %p318 = scmp.ne.s32.totalorder %s313, %s315
      %p319 = scmp.eq.s32.totalorder %s27, 0
      %p320 = por %p318, %p319
      %p321 = scmp.ne.s32.totalorder %s313, %s315
      %p322 = scmp.eq.s32.totalorder %s32, 1
      %p323 = por %p321, %p322
      %p324 = scmp.ne.s32.totalorder %s315, %s316
      %p325 = scmp.eq.s32.totalorder %s32, 0
      %p326 = por %p324, %p325
      %p327 = scmp.ne.s32.totalorder %s315, %s316
      %p328 = scmp.eq.s32.totalorder %s33, 1
      %p329 = por %p327, %p328
      %p331 = scmp.ne.s32.totalorder %s316, %s330
      %p332 = scmp.eq.s32.totalorder %s33, 0
      %p333 = por %p331, %p332
      %s335 = sadd.s32 %s334, 1
      %p338 = scmp.eq.s32.totalorder %s27, 1
      %p339 = scmp.ne.s32.totalorder %s334, %s336
      %p340 = scmp.eq.s32.totalorder %s27, 0
      %p341 = por %p339, %p340
      %p342 = scmp.ne.s32.totalorder %s334, %s336
      %p343 = scmp.eq.s32.totalorder %s32, 1
      %p344 = por %p342, %p343
      %p345 = scmp.ne.s32.totalorder %s336, %s337
      %p346 = scmp.eq.s32.totalorder %s32, 0
      %p347 = por %p345, %p346
      %p348 = scmp.ne.s32.totalorder %s336, %s337
      %p349 = scmp.eq.s32.totalorder %s33, 1
      %p350 = por %p348, %p349
      %p352 = scmp.ne.s32.totalorder %s337, %s351
      %p353 = scmp.eq.s32.totalorder %s33, 0
      %p354 = por %p352, %p353
      %s356 = sadd.s32 %s355, 1
      %p359 = scmp.eq.s32.totalorder %s27, 1
      %p360 = scmp.ne.s32.totalorder %s355, %s357
      %p361 = scmp.eq.s32.totalorder %s27, 0
      %p362 = por %p360, %p361
      %p363 = scmp.ne.s32.totalorder %s355, %s357
      %p364 = scmp.eq.s32.totalorder %s32, 1
      %p365 = por %p363, %p364
      %p366 = scmp.ne.s32.totalorder %s357, %s358
      %p367 = scmp.eq.s32.totalorder %s32, 0
      %p368 = por %p366, %p367
      %p369 = scmp.ne.s32.totalorder %s357, %s358
      %p370 = scmp.eq.s32.totalorder %s33, 1
      %p371 = por %p369, %p370
      %p373 = scmp.ne.s32.totalorder %s358, %s372
      %p374 = scmp.eq.s32.totalorder %s33, 0
      %p375 = por %p373, %p374
      %s377 = sadd.s32 %s376, 1
      %p380 = scmp.eq.s32.totalorder %s27, 1
      %p381 = scmp.ne.s32.totalorder %s376, %s378
      %p382 = scmp.eq.s32.totalorder %s27, 0
      %p383 = por %p381, %p382
      %p384 = scmp.ne.s32.totalorder %s376, %s378
      %p385 = scmp.eq.s32.totalorder %s32, 1
      %p386 = por %p384, %p385
      %p387 = scmp.ne.s32.totalorder %s378, %s379
      %p388 = scmp.eq.s32.totalorder %s32, 0
      %p389 = por %p387, %p388
      %p390 = scmp.ne.s32.totalorder %s378, %s379
      %p391 = scmp.eq.s32.totalorder %s33, 1
      %p392 = por %p390, %p391
      %p394 = scmp.ne.s32.totalorder %s379, %s393
      %p395 = scmp.eq.s32.totalorder %s33, 0
      %p396 = por %p394, %p395
      %s398 = sadd.s32 %s397, 1
      %p401 = scmp.eq.s32.totalorder %s27, 1
      %p402 = scmp.ne.s32.totalorder %s397, %s399
      %p403 = scmp.eq.s32.totalorder %s27, 0
      %p404 = por %p402, %p403
      %p405 = scmp.ne.s32.totalorder %s397, %s399
      %p406 = scmp.eq.s32.totalorder %s32, 1
      %p407 = por %p405, %p406
      %p408 = scmp.ne.s32.totalorder %s399, %s400
      %p409 = scmp.eq.s32.totalorder %s32, 0
      %p410 = por %p408, %p409
      %p411 = scmp.ne.s32.totalorder %s399, %s400
      %p412 = scmp.eq.s32.totalorder %s33, 1
      %p413 = por %p411, %p412
      %p415 = scmp.ne.s32.totalorder %s400, %s414
      %p416 = scmp.eq.s32.totalorder %s33, 0
      %p417 = por %p415, %p416
      %s418 = ssub.s32 %s27, %s34
      %p419 = scmp.eq.s32.totalorder %s418, 0
      %s421 = sadd.s32 %s420, 1
      %s422 = scalar_select %p419, %s420, %s421
      %p425 = pneg %p419
      %p426 = scmp.eq.s32.totalorder %s27, 1
      %p427 = por %p425, %p426
      %p428 = scmp.ne.s32.totalorder %s420, %s423
      %p429 = scmp.eq.s32.totalorder %s27, 0
      %p430 = por %p428, %p429
      %p431 = scmp.ne.s32.totalorder %s420, %s423
      %p432 = scmp.eq.s32.totalorder %s32, 1
      %p433 = por %p431, %p432
      %p434 = scmp.ne.s32.totalorder %s423, %s424
      %p435 = scmp.eq.s32.totalorder %s32, 0
      %p436 = por %p434, %p435
      %p437 = scmp.ne.s32.totalorder %s423, %s424
      %p438 = scmp.eq.s32.totalorder %s33, 1
      %p439 = por %p437, %p438
      %p441 = scmp.ne.s32.totalorder %s424, %s440
      %p442 = scmp.eq.s32.totalorder %s33, 0
      %p443 = por %p441, %p442
      %p444 = scmp.le.s32.totalorder 1, %s27
      %p445 = scmp.lt.s32.totalorder %s27, 3
      %p446 = pnand %p444, %p445
      %p447 = pneg %p446
      // Predicated region
      $region9: #{forward.1} parent=5 // pred_check
        _
      $region10: #{forward.1} parent=5 // pred_check_branch
        %449 = sbr.rel (%p446) target = $region12
      $region11: #{forward.1} parent=5 // pred_region
        %s450 = ssub.s32 %s27, 1
        // Predicated region
        $region13: #{forward.1} parent=11 // pred_check
          %p451 = pneg %p74
        $region14: #{forward.1} parent=11 // pred_check_branch
          %453 = sbr.rel (%p451) target = $region16
        $region15: #{forward.1} parent=11 // pred_region
          _
        $region16: #{forward.1} parent=11 // pred_fallthru
          _
        // Predicated region
        $region17: #{forward.1} parent=11 // pred_check
          %p454 = pneg %p95
        $region18: #{forward.1} parent=11 // pred_check_branch
          %456 = sbr.rel (%p454) target = $region20
        $region19: #{forward.1} parent=11 // pred_region
          _
        $region20: #{forward.1} parent=11 // pred_fallthru
          _
        // Predicated region
        $region21: #{forward.1} parent=11 // pred_check
          %p457 = pneg %p116
        $region22: #{forward.1} parent=11 // pred_check_branch
          %459 = sbr.rel (%p457) target = $region24
        $region23: #{forward.1} parent=11 // pred_region
          _
        $region24: #{forward.1} parent=11 // pred_fallthru
          _
        // Predicated region
        $region25: #{forward.1} parent=11 // pred_check
          %p460 = pneg %p137
        $region26: #{forward.1} parent=11 // pred_check_branch
          %462 = sbr.rel (%p460) target = $region28
        $region27: #{forward.1} parent=11 // pred_region
          _
        $region28: #{forward.1} parent=11 // pred_fallthru
          _
        // Predicated region
        $region29: #{forward.1} parent=11 // pred_check
          %p463 = pneg %p158
        $region30: #{forward.1} parent=11 // pred_check_branch
          %465 = sbr.rel (%p463) target = $region32
        $region31: #{forward.1} parent=11 // pred_region
          _
        $region32: #{forward.1} parent=11 // pred_fallthru
          _
        // Predicated region
        $region33: #{forward.1} parent=11 // pred_check
          %p466 = pneg %p179
        $region34: #{forward.1} parent=11 // pred_check_branch
          %468 = sbr.rel (%p466) target = $region36
        $region35: #{forward.1} parent=11 // pred_region
          _
        $region36: #{forward.1} parent=11 // pred_fallthru
          _
        // Predicated region
        $region37: #{forward.1} parent=11 // pred_check
          %p469 = pneg %p200
        $region38: #{forward.1} parent=11 // pred_check_branch
          %471 = sbr.rel (%p469) target = $region40
        $region39: #{forward.1} parent=11 // pred_region
          _
        $region40: #{forward.1} parent=11 // pred_fallthru
          _
        // Predicated region
        $region41: #{forward.1} parent=11 // pred_check
          %p472 = pneg %p221
        $region42: #{forward.1} parent=11 // pred_check_branch
          %474 = sbr.rel (%p472) target = $region44
        $region43: #{forward.1} parent=11 // pred_region
          _
        $region44: #{forward.1} parent=11 // pred_fallthru
          _
        // Predicated region
        $region45: #{forward.1} parent=11 // pred_check
          %p475 = pneg %p242
        $region46: #{forward.1} parent=11 // pred_check_branch
          %477 = sbr.rel (%p475) target = $region48
        $region47: #{forward.1} parent=11 // pred_region
          _
        $region48: #{forward.1} parent=11 // pred_fallthru
          _
        // Predicated region
        $region49: #{forward.1} parent=11 // pred_check
          %p478 = pneg %p263
        $region50: #{forward.1} parent=11 // pred_check_branch
          %480 = sbr.rel (%p478) target = $region52
        $region51: #{forward.1} parent=11 // pred_region
          _
        $region52: #{forward.1} parent=11 // pred_fallthru
          _
        // Predicated region
        $region53: #{forward.1} parent=11 // pred_check
          %p481 = pneg %p284
        $region54: #{forward.1} parent=11 // pred_check_branch
          %483 = sbr.rel (%p481) target = $region56
        $region55: #{forward.1} parent=11 // pred_region
          _
        $region56: #{forward.1} parent=11 // pred_fallthru
          _
        // Predicated region
        $region57: #{forward.1} parent=11 // pred_check
          %p484 = pneg %p305
        $region58: #{forward.1} parent=11 // pred_check_branch
          %486 = sbr.rel (%p484) target = $region60
        $region59: #{forward.1} parent=11 // pred_region
          _
        $region60: #{forward.1} parent=11 // pred_fallthru
          _
        // Predicated region
        $region61: #{forward.1} parent=11 // pred_check
          %p487 = pneg %p326
        $region62: #{forward.1} parent=11 // pred_check_branch
          %489 = sbr.rel (%p487) target = $region64
        $region63: #{forward.1} parent=11 // pred_region
          _
        $region64: #{forward.1} parent=11 // pred_fallthru
          _
        // Predicated region
        $region65: #{forward.1} parent=11 // pred_check
          %p490 = pneg %p347
        $region66: #{forward.1} parent=11 // pred_check_branch
          %492 = sbr.rel (%p490) target = $region68
        $region67: #{forward.1} parent=11 // pred_region
          _
        $region68: #{forward.1} parent=11 // pred_fallthru
          _
        // Predicated region
        $region69: #{forward.1} parent=11 // pred_check
          %p493 = pneg %p368
        $region70: #{forward.1} parent=11 // pred_check_branch
          %495 = sbr.rel (%p493) target = $region72
        $region71: #{forward.1} parent=11 // pred_region
          _
        $region72: #{forward.1} parent=11 // pred_fallthru
          _
        // Predicated region
        $region73: #{forward.1} parent=11 // pred_check
          %p496 = pneg %p389
        $region74: #{forward.1} parent=11 // pred_check_branch
          %498 = sbr.rel (%p496) target = $region76
        $region75: #{forward.1} parent=11 // pred_region
          _
        $region76: #{forward.1} parent=11 // pred_fallthru
          _
        // Predicated region
        $region77: #{forward.1} parent=11 // pred_check
          %p499 = pneg %p410
        $region78: #{forward.1} parent=11 // pred_check_branch
          %501 = sbr.rel (%p499) target = $region80
        $region79: #{forward.1} parent=11 // pred_region
          _
        $region80: #{forward.1} parent=11 // pred_fallthru
          _
      $region12: #{forward.1} parent=5 // pred_fallthru
        _
      %p502 = scmp.lt.s32.totalorder %s27, 2
      // Predicated region
      $region81: #{forward.1} parent=5 // pred_check
        %p503 = pneg %p502
      $region82: #{forward.1} parent=5 // pred_check_branch
        %505 = sbr.rel (%p503) target = $region84
      $region83: #{forward.1} parent=5 // pred_region
        // Predicated region
        $region85: #{forward.1} parent=83 // pred_check
          %p506 = pneg %p47
        $region86: #{forward.1} parent=83 // pred_check_branch
          %508 = sbr.rel (%p506) target = $region88
        $region87: #{forward.1} parent=83 // pred_region
          %s509 = smul.u32 41, %s27
          %p510 = scmp.lt.s32.totalorder %s509, 81
          %s511 = scalar_select %p510, %s509, 81
          %s512 = smul.addr %s511, 8
          %s513 = scalar_lea.vmem %s0, %s512
          %s514 = smul.u32 41, %s27
        $region88: #{forward.1} parent=83 // pred_fallthru
          _
      $region84: #{forward.1} parent=5 // pred_fallthru
        _
      %p515 = scmp.le.s32.totalorder 1, %s27
      %p516 = scmp.lt.s32.totalorder %s27, 3
      %p517 = pnand %p515, %p516
      %p518 = pneg %p517
      // Predicated region
      $region89: #{forward.1} parent=5 // pred_check
        _
      $region90: #{forward.1} parent=5 // pred_check_branch
        %520 = sbr.rel (%p517) target = $region92
      $region91: #{forward.1} parent=5 // pred_region
        %s521 = ssub.s32 %s27, 1
        %s522 = smul.u32 41, %s32
        %p523 = scmp.lt.s32.totalorder %s522, 81
        %s524 = scalar_select %p523, %s522, 81
        %s525 = smul.addr %s524, 8
        %s526 = scalar_lea.vmem %s0, %s525
        %p527 = pneg %p53
        %p528 = pneg %p50
        %p529 = pneg %p74
        %p530 = pneg %p71
        %p531 = pneg %p95
        %p532 = pneg %p92
        %p533 = pneg %p116
        %p534 = pneg %p113
        %p535 = pneg %p137
        %p536 = pneg %p134
        %p537 = pneg %p158
        %p538 = pneg %p155
        %p539 = pneg %p179
        %p540 = pneg %p176
        %p541 = pneg %p200
        %p542 = pneg %p197
        %p543 = pneg %p221
        %p544 = pneg %p218
        %p545 = pneg %p242
        %p546 = pneg %p239
        %p547 = pneg %p263
        %p548 = pneg %p260
        %p549 = pneg %p284
        %p550 = pneg %p281
        %p551 = pneg %p305
        %p552 = pneg %p302
        %p553 = pneg %p326
        %p554 = pneg %p323
        %p555 = pneg %p347
        %p556 = pneg %p344
        %p557 = pneg %p368
        %p558 = pneg %p365
        %p559 = pneg %p389
        %p560 = pneg %p386
        %p561 = pneg %p410
        %p562 = pneg %p407
        %p563 = pneg %p436
        %p564 = pneg %p433
        %s565 = sand.u32 %s423, 1
        %s566 = scalar_lea.sflag [#allocation7], %s565
        %s567 = sand.u32 %s423, 1
        %s568 = scalar_lea.vmem [#allocation6], %s567
        %s569 = smul.u32 41, %s32
        %p570 = scmp.lt.s32.totalorder %s569, 81
        %s571 = scalar_select %p570, %s569, 81
        %s572 = smul.addr %s571, 8
        %s573 = scalar_lea.vmem %s0, %s572
        %s574 = smul.u32 41, %s32
        %v576 = vld [vmem:[%s573] sm:$0xff]
        %v577 = vld [vmem:[%s573 + $0x8] sm:$0xff]
        %v578 = vld [vmem:[%s573 + $0x10] sm:$0xff]
        %v579 = vld [vmem:[%s573 + $0x18] sm:$0xff]
        %v580 = vld [vmem:[%s573 + $0x20] sm:$0xff]
        %v581 = vld [vmem:[%s573 + $0x28] sm:$0xff]
        %v582 = vld [vmem:[%s573 + $0x30] sm:$0xff]
        %v583 = vld [vmem:[%s573 + $0x38] sm:$0xff]
        %v584 = vld [vmem:[%s573 + $0x40] sm:$0xff]
        %v585 = vld [vmem:[%s573 + $0x48] sm:$0xff]
        %v586 = vld [vmem:[%s573 + $0x50] sm:$0xff]
        %v587 = vld [vmem:[%s573 + $0x58] sm:$0xff]
        %v588 = vld [vmem:[%s573 + $0x60] sm:$0xff]
        %v589 = vld [vmem:[%s573 + $0x68] sm:$0xff]
        %v590 = vld [vmem:[%s573 + $0x70] sm:$0xff]
        %v591 = vld [vmem:[%s573 + $0x78] sm:$0xff]
        %v592 = vld [vmem:[%s573 + $0x80] sm:$0xff]
        %v593 = vld [vmem:[%s573 + $0x88] sm:$0xff]
        %v594 = vld [vmem:[%s573 + $0x90] sm:$0xff]
        %v595 = vld [vmem:[%s573 + $0x98] sm:$0xff]
        %v596 = vld [vmem:[%s573 + $0xa0] sm:$0xff]
        %v597 = vld [vmem:[%s573 + $0xa8] sm:$0xff]
        %v598 = vld [vmem:[%s573 + $0xb0] sm:$0xff]
        %v599 = vld [vmem:[%s573 + $0xb8] sm:$0xff]
        %v600 = vld [vmem:[%s573 + $0xc0] sm:$0xff]
        %v601 = vld [vmem:[%s573 + $0xc8] sm:$0xff]
        %v602 = vld [vmem:[%s573 + $0xd0] sm:$0xff]
        %v603 = vld [vmem:[%s573 + $0xd8] sm:$0xff]
        %v604 = vld [vmem:[%s573 + $0xe0] sm:$0xff]
        %v605 = vld [vmem:[%s573 + $0xe8] sm:$0xff]
        %v606 = vld [vmem:[%s573 + $0xf0] sm:$0xff]
        %v607 = vld [vmem:[%s573 + $0xf8] sm:$0xff]
        %v608 = vld [vmem:[%s573 + $0x100] sm:$0xff]
        %v609 = vld [vmem:[%s573 + $0x108] sm:$0xff]
        %v610 = vld [vmem:[%s573 + $0x110] sm:$0xff]
        %v611 = vld [vmem:[%s573 + $0x118] sm:$0xff]
        %v612 = vpack.c.bf16 %v577, %v576
        %v613 = vpack.c.bf16 %v579, %v578
        %v614 = vpack.c.bf16 %v581, %v580
        %v615 = vpack.c.bf16 %v583, %v582
        %v616 = vpack.c.bf16 %v585, %v584
        %v617 = vpack.c.bf16 %v587, %v586
        %v618 = vpack.c.bf16 %v589, %v588
        %v619 = vpack.c.bf16 %v591, %v590
        %v620 = vpack.c.bf16 %v593, %v592
        %v621 = vpack.c.bf16 %v595, %v594
        %v622 = vpack.c.bf16 %v597, %v596
        %v623 = vpack.c.bf16 %v599, %v598
        %v624 = vpack.c.bf16 %v601, %v600
        %v625 = vpack.c.bf16 %v603, %v602
        %v626 = vpack.c.bf16 %v605, %v604
        %v627 = vpack.c.bf16 %v607, %v606
        %v628 = vpack.c.bf16 %v609, %v608
        %v629 = vpack.c.bf16 %v611, %v610
        %v630 = vld [vmem:[%s1] sm:$0x3]
        %v631 = vld [vmem:[%s573 + $0x1] sm:$0xff]
        %v632 = vld [vmem:[%s573 + $0x9] sm:$0xff]
        %v633 = vld [vmem:[%s573 + $0x11] sm:$0xff]
        %v634 = vld [vmem:[%s573 + $0x19] sm:$0xff]
        %v635 = vld [vmem:[%s573 + $0x21] sm:$0xff]
        %v636 = vld [vmem:[%s573 + $0x29] sm:$0xff]
        %v637 = vld [vmem:[%s573 + $0x31] sm:$0xff]
        %v638 = vld [vmem:[%s573 + $0x39] sm:$0xff]
        %v639 = vld [vmem:[%s573 + $0x41] sm:$0xff]
        %v640 = vld [vmem:[%s573 + $0x49] sm:$0xff]
        %v641 = vld [vmem:[%s573 + $0x51] sm:$0xff]
        %v642 = vld [vmem:[%s573 + $0x59] sm:$0xff]
        %v643 = vld [vmem:[%s573 + $0x61] sm:$0xff]
        %v644 = vld [vmem:[%s573 + $0x69] sm:$0xff]
        %v645 = vld [vmem:[%s573 + $0x71] sm:$0xff]
        %v646 = vld [vmem:[%s573 + $0x79] sm:$0xff]
        %v647 = vld [vmem:[%s573 + $0x81] sm:$0xff]
        %v648 = vld [vmem:[%s573 + $0x89] sm:$0xff]
        %v649 = vld [vmem:[%s573 + $0x91] sm:$0xff]
        %v650 = vld [vmem:[%s573 + $0x99] sm:$0xff]
        %v651 = vld [vmem:[%s573 + $0xa1] sm:$0xff]
        %v652 = vld [vmem:[%s573 + $0xa9] sm:$0xff]
        %v653 = vld [vmem:[%s573 + $0xb1] sm:$0xff]
        %v654 = vld [vmem:[%s573 + $0xb9] sm:$0xff]
        %v655 = vld [vmem:[%s573 + $0xc1] sm:$0xff]
        %v656 = vld [vmem:[%s573 + $0xc9] sm:$0xff]
        %v657 = vld [vmem:[%s573 + $0xd1] sm:$0xff]
        %v658 = vld [vmem:[%s573 + $0xd9] sm:$0xff]
        %v659 = vld [vmem:[%s573 + $0xe1] sm:$0xff]
        %v660 = vld [vmem:[%s573 + $0xe9] sm:$0xff]
        %v661 = vld [vmem:[%s573 + $0xf1] sm:$0xff]
        %v662 = vld [vmem:[%s573 + $0xf9] sm:$0xff]
        %v663 = vld [vmem:[%s573 + $0x101] sm:$0xff]
        %v664 = vld [vmem:[%s573 + $0x109] sm:$0xff]
        %v665 = vld [vmem:[%s573 + $0x111] sm:$0xff]
        %v666 = vld [vmem:[%s573 + $0x119] sm:$0xff]
        %v667 = vpack.c.bf16 %v632, %v631
        %v668 = vpack.c.bf16 %v634, %v633
        %v669 = vpack.c.bf16 %v636, %v635
        %v670 = vpack.c.bf16 %v638, %v637
        %v671 = vpack.c.bf16 %v640, %v639
        %v672 = vpack.c.bf16 %v642, %v641
        %v673 = vpack.c.bf16 %v644, %v643
        %v674 = vpack.c.bf16 %v646, %v645
        %v675 = vpack.c.bf16 %v648, %v647
        %v676 = vpack.c.bf16 %v650, %v649
        %v677 = vpack.c.bf16 %v652, %v651
        %v678 = vpack.c.bf16 %v654, %v653
        %v679 = vpack.c.bf16 %v656, %v655
        %v680 = vpack.c.bf16 %v658, %v657
        %v681 = vpack.c.bf16 %v660, %v659
        %v682 = vpack.c.bf16 %v662, %v661
        %v683 = vpack.c.bf16 %v664, %v663
        %v684 = vpack.c.bf16 %v666, %v665
        %s685 = scalar_lea.vmem %s1, 2
        %v686 = vld [vmem:[%s685] sm:$0x3]
        %vm687 = vcmask 31744
        %v689 = vsel %vm687, %v667, 0
        %v692 = vsel %vm687, %v668, 0
        %v695 = vsel %vm687, %v669, 0
        %v698 = vsel %vm687, %v670, 0
        %v701 = vsel %vm687, %v671, 0
        %v704 = vsel %vm687, %v672, 0
        %v707 = vsel %vm687, %v673, 0
        %v710 = vsel %vm687, %v674, 0
        %v713 = vsel %vm687, %v675, 0
        %v716 = vsel %vm687, %v676, 0
        %v719 = vsel %vm687, %v677, 0
        %v722 = vsel %vm687, %v678, 0
        %v725 = vsel %vm687, %v679, 0
        %v728 = vsel %vm687, %v680, 0
        %v731 = vsel %vm687, %v681, 0
        %v734 = vsel %vm687, %v682, 0
        %v737 = vsel %vm687, %v683, 0
        %v740 = vsel %vm687, %v684, 0
        %vm742 = vcmask 1041408
        %v744 = vsel %vm742, %v686, 0
        %746 = vmatpush.bf16.msra.mxu0 0
        %747 = vmatpush.bf16.msra.mxu0 0
        %748 = vmatpush.bf16.msra.mxu0 0
        %749 = vmatpush.bf16.msra.mxu0 0
        %750 = vmatpush.bf16.msra.mxu0 0
        %751 = vmatpush.bf16.msra.mxu0 0
        %752 = vmatpush.bf16.msra.mxu0 0
        %753 = vmatpush.bf16.msra.mxu0 %v744
        %754 = vmatmul.bf16.gmra.mxu0 %v689
        %v755 = vpop.f32.mrf.mxu0
        %v756 = vadd.f32 0.0, %v755
        %v757 = vpop.f32.mrf.mxu0
        %v758 = vadd.f32 0.0, %v757
        %759 = vmatmul.bf16.gmra.mxu0 %v692
        %v760 = vpop.f32.mrf.mxu0
        %v761 = vadd.f32 0.0, %v760
        %v762 = vpop.f32.mrf.mxu0
        %v763 = vadd.f32 0.0, %v762
        %764 = vmatmul.bf16.gmra.mxu0 %v695
        %v765 = vpop.f32.mrf.mxu0
        %v766 = vadd.f32 0.0, %v765
        %v767 = vpop.f32.mrf.mxu0
        %v768 = vadd.f32 0.0, %v767
        %769 = vmatmul.bf16.gmra.mxu0 %v698
        %v770 = vpop.f32.mrf.mxu0
        %v771 = vadd.f32 0.0, %v770
        %v772 = vpop.f32.mrf.mxu0
        %v773 = vadd.f32 0.0, %v772
        %774 = vmatmul.bf16.gmra.mxu0 %v701
        %v775 = vpop.f32.mrf.mxu0
        %v776 = vadd.f32 0.0, %v775
        %v777 = vpop.f32.mrf.mxu0
        %v778 = vadd.f32 0.0, %v777
        %779 = vmatmul.bf16.gmra.mxu0 %v704
        %v780 = vpop.f32.mrf.mxu0
        %v781 = vadd.f32 0.0, %v780
        %v782 = vpop.f32.mrf.mxu0
        %v783 = vadd.f32 0.0, %v782
        %784 = vmatmul.bf16.gmra.mxu0 %v707
        %v785 = vpop.f32.mrf.mxu0
        %v786 = vadd.f32 0.0, %v785
        %v787 = vpop.f32.mrf.mxu0
        %v788 = vadd.f32 0.0, %v787
        %789 = vmatmul.bf16.gmra.mxu0 %v710
        %v790 = vpop.f32.mrf.mxu0
        %v791 = vadd.f32 0.0, %v790
        %v792 = vpop.f32.mrf.mxu0
        %v793 = vadd.f32 0.0, %v792
        %794 = vmatmul.bf16.gmra.mxu0 %v713
        %v795 = vpop.f32.mrf.mxu0
        %v796 = vadd.f32 0.0, %v795
        %v797 = vpop.f32.mrf.mxu0
        %v798 = vadd.f32 0.0, %v797
        %799 = vmatmul.bf16.gmra.mxu0 %v716
        %v800 = vpop.f32.mrf.mxu0
        %v801 = vadd.f32 0.0, %v800
        %v802 = vpop.f32.mrf.mxu0
        %v803 = vadd.f32 0.0, %v802
        %804 = vmatmul.bf16.gmra.mxu0 %v719
        %v805 = vpop.f32.mrf.mxu0
        %v806 = vadd.f32 0.0, %v805
        %v807 = vpop.f32.mrf.mxu0
        %v808 = vadd.f32 0.0, %v807
        %809 = vmatmul.bf16.gmra.mxu0 %v722
        %v810 = vpop.f32.mrf.mxu0
        %v811 = vadd.f32 0.0, %v810
        %v812 = vpop.f32.mrf.mxu0
        %v813 = vadd.f32 0.0, %v812
        %814 = vmatmul.bf16.gmra.mxu0 %v725
        %v815 = vpop.f32.mrf.mxu0
        %v816 = vadd.f32 0.0, %v815
        %v817 = vpop.f32.mrf.mxu0
        %v818 = vadd.f32 0.0, %v817
        %819 = vmatmul.bf16.gmra.mxu0 %v728
        %v820 = vpop.f32.mrf.mxu0
        %v821 = vadd.f32 0.0, %v820
        %v822 = vpop.f32.mrf.mxu0
        %v823 = vadd.f32 0.0, %v822
        %824 = vmatmul.bf16.gmra.mxu0 %v731
        %v825 = vpop.f32.mrf.mxu0
        %v826 = vadd.f32 0.0, %v825
        %v827 = vpop.f32.mrf.mxu0
        %v828 = vadd.f32 0.0, %v827
        %829 = vmatmul.bf16.gmra.mxu0 %v734
        %v830 = vpop.f32.mrf.mxu0
        %v831 = vadd.f32 0.0, %v830
        %v832 = vpop.f32.mrf.mxu0
        %v833 = vadd.f32 0.0, %v832
        %834 = vmatmul.bf16.gmra.mxu0 %v737
        %v835 = vpop.f32.mrf.mxu0
        %v836 = vadd.f32 0.0, %v835
        %v837 = vpop.f32.mrf.mxu0
        %v838 = vadd.f32 0.0, %v837
        %839 = vmatmul.bf16.gmra.mxu0 %v740
        %v840 = vpop.f32.mrf.mxu0
        %v841 = vadd.f32 0.0, %v840
        %v842 = vpop.f32.mrf.mxu0
        %v843 = vadd.f32 0.0, %v842
        %844 = vdwg.mxu0
        %v846 = vsel %vm687, %v612, 0
        %v849 = vsel %vm687, %v613, 0
        %v852 = vsel %vm687, %v614, 0
        %v855 = vsel %vm687, %v615, 0
        %v858 = vsel %vm687, %v616, 0
        %v861 = vsel %vm687, %v617, 0
        %v864 = vsel %vm687, %v618, 0
        %v867 = vsel %vm687, %v619, 0
        %v870 = vsel %vm687, %v620, 0
        %v873 = vsel %vm687, %v621, 0
        %v876 = vsel %vm687, %v622, 0
        %v879 = vsel %vm687, %v623, 0
        %v882 = vsel %vm687, %v624, 0
        %v885 = vsel %vm687, %v625, 0
        %v888 = vsel %vm687, %v626, 0
        %v891 = vsel %vm687, %v627, 0
        %v894 = vsel %vm687, %v628, 0
        %v897 = vsel %vm687, %v629, 0
        %v900 = vsel %vm742, %v630, 0
        %902 = vmatpush.bf16.msra.mxu0 0
        %903 = vmatpush.bf16.msra.mxu0 0
        %904 = vmatpush.bf16.msra.mxu0 0
        %905 = vmatpush.bf16.msra.mxu0 0
        %906 = vmatpush.bf16.msra.mxu0 0
        %907 = vmatpush.bf16.msra.mxu0 0
        %908 = vmatpush.bf16.msra.mxu0 0
        %909 = vmatpush.bf16.msra.mxu0 %v900
        %910 = vmatmul.bf16.gmra.mxu0 %v846
        %v911 = vpop.f32.mrf.mxu0
        %v912 = vadd.f32 %v756, %v911
        %v913 = vpop.f32.mrf.mxu0
        %v914 = vadd.f32 %v758, %v913
        %915 = vmatmul.bf16.gmra.mxu0 %v849
        %v916 = vpop.f32.mrf.mxu0
        %v917 = vadd.f32 %v761, %v916
        %v918 = vpop.f32.mrf.mxu0
        %v919 = vadd.f32 %v763, %v918
        %920 = vmatmul.bf16.gmra.mxu0 %v852
        %v921 = vpop.f32.mrf.mxu0
        %v922 = vadd.f32 %v766, %v921
        %v923 = vpop.f32.mrf.mxu0
        %v924 = vadd.f32 %v768, %v923
        %925 = vmatmul.bf16.gmra.mxu0 %v855
        %v926 = vpop.f32.mrf.mxu0
        %v927 = vadd.f32 %v771, %v926
        %v928 = vpop.f32.mrf.mxu0
        %v929 = vadd.f32 %v773, %v928
        %930 = vmatmul.bf16.gmra.mxu0 %v858
        %v931 = vpop.f32.mrf.mxu0
        %v932 = vadd.f32 %v776, %v931
        %v933 = vpop.f32.mrf.mxu0
        %v934 = vadd.f32 %v778, %v933
        %935 = vmatmul.bf16.gmra.mxu0 %v861
        %v936 = vpop.f32.mrf.mxu0
        %v937 = vadd.f32 %v781, %v936
        %v938 = vpop.f32.mrf.mxu0
        %v939 = vadd.f32 %v783, %v938
        %940 = vmatmul.bf16.gmra.mxu0 %v864
        %v941 = vpop.f32.mrf.mxu0
        %v942 = vadd.f32 %v786, %v941
        %v943 = vpop.f32.mrf.mxu0
        %v944 = vadd.f32 %v788, %v943
        %945 = vmatmul.bf16.gmra.mxu0 %v867
        %v946 = vpop.f32.mrf.mxu0
        %v947 = vadd.f32 %v791, %v946
        %v948 = vpop.f32.mrf.mxu0
        %v949 = vadd.f32 %v793, %v948
        %950 = vmatmul.bf16.gmra.mxu0 %v870
        %v951 = vpop.f32.mrf.mxu0
        %v952 = vadd.f32 %v796, %v951
        %v953 = vpop.f32.mrf.mxu0
        %v954 = vadd.f32 %v798, %v953
        %955 = vmatmul.bf16.gmra.mxu0 %v873
        %v956 = vpop.f32.mrf.mxu0
        %v957 = vadd.f32 %v801, %v956
        %v958 = vpop.f32.mrf.mxu0
        %v959 = vadd.f32 %v803, %v958
        %960 = vmatmul.bf16.gmra.mxu0 %v876
        %v961 = vpop.f32.mrf.mxu0
        %v962 = vadd.f32 %v806, %v961
        %v963 = vpop.f32.mrf.mxu0
        %v964 = vadd.f32 %v808, %v963
        %965 = vmatmul.bf16.gmra.mxu0 %v879
        %v966 = vpop.f32.mrf.mxu0
        %v967 = vadd.f32 %v811, %v966
        %v968 = vpop.f32.mrf.mxu0
        %v969 = vadd.f32 %v813, %v968
        %970 = vmatmul.bf16.gmra.mxu0 %v882
        %v971 = vpop.f32.mrf.mxu0
        %v972 = vadd.f32 %v816, %v971
        %v973 = vpop.f32.mrf.mxu0
        %v974 = vadd.f32 %v818, %v973
        %975 = vmatmul.bf16.gmra.mxu0 %v885
        %v976 = vpop.f32.mrf.mxu0
        %v977 = vadd.f32 %v821, %v976
        %v978 = vpop.f32.mrf.mxu0
        %v979 = vadd.f32 %v823, %v978
        %980 = vmatmul.bf16.gmra.mxu0 %v888
        %v981 = vpop.f32.mrf.mxu0
        %v982 = vadd.f32 %v826, %v981
        %v983 = vpop.f32.mrf.mxu0
        %v984 = vadd.f32 %v828, %v983
        %985 = vmatmul.bf16.gmra.mxu0 %v891
        %v986 = vpop.f32.mrf.mxu0
        %v987 = vadd.f32 %v831, %v986
        %v988 = vpop.f32.mrf.mxu0
        %v989 = vadd.f32 %v833, %v988
        %990 = vmatmul.bf16.gmra.mxu0 %v894
        %v991 = vpop.f32.mrf.mxu0
        %v992 = vadd.f32 %v836, %v991
        %v993 = vpop.f32.mrf.mxu0
        %v994 = vadd.f32 %v838, %v993
        %995 = vmatmul.bf16.gmra.mxu0 %v897
        %v996 = vpop.f32.mrf.mxu0
        %v997 = vadd.f32 %v841, %v996
        %v998 = vpop.f32.mrf.mxu0
        %v999 = vadd.f32 %v843, %v998
        %1000 = vdwg.mxu0
        %v1001 = vld [vmem:[%s573 + $0x2] sm:$0xff]
        %v1002 = vld [vmem:[%s573 + $0xa] sm:$0xff]
        %v1003 = vld [vmem:[%s573 + $0x12] sm:$0xff]
        %v1004 = vld [vmem:[%s573 + $0x1a] sm:$0xff]
        %v1005 = vld [vmem:[%s573 + $0x22] sm:$0xff]
        %v1006 = vld [vmem:[%s573 + $0x2a] sm:$0xff]
        %v1007 = vld [vmem:[%s573 + $0x32] sm:$0xff]
        %v1008 = vld [vmem:[%s573 + $0x3a] sm:$0xff]
        %v1009 = vld [vmem:[%s573 + $0x42] sm:$0xff]
        %v1010 = vld [vmem:[%s573 + $0x4a] sm:$0xff]
        %v1011 = vld [vmem:[%s573 + $0x52] sm:$0xff]
        %v1012 = vld [vmem:[%s573 + $0x5a] sm:$0xff]
        %v1013 = vld [vmem:[%s573 + $0x62] sm:$0xff]
        %v1014 = vld [vmem:[%s573 + $0x6a] sm:$0xff]
        %v1015 = vld [vmem:[%s573 + $0x72] sm:$0xff]
        %v1016 = vld [vmem:[%s573 + $0x7a] sm:$0xff]
        %v1017 = vld [vmem:[%s573 + $0x82] sm:$0xff]
        %v1018 = vld [vmem:[%s573 + $0x8a] sm:$0xff]
        %v1019 = vld [vmem:[%s573 + $0x92] sm:$0xff]
        %v1020 = vld [vmem:[%s573 + $0x9a] sm:$0xff]
        %v1021 = vld [vmem:[%s573 + $0xa2] sm:$0xff]
        %v1022 = vld [vmem:[%s573 + $0xaa] sm:$0xff]
        %v1023 = vld [vmem:[%s573 + $0xb2] sm:$0xff]
        %v1024 = vld [vmem:[%s573 + $0xba] sm:$0xff]
        %v1025 = vld [vmem:[%s573 + $0xc2] sm:$0xff]
        %v1026 = vld [vmem:[%s573 + $0xca] sm:$0xff]
        %v1027 = vld [vmem:[%s573 + $0xd2] sm:$0xff]
        %v1028 = vld [vmem:[%s573 + $0xda] sm:$0xff]
        %v1029 = vld [vmem:[%s573 + $0xe2] sm:$0xff]
        %v1030 = vld [vmem:[%s573 + $0xea] sm:$0xff]
        %v1031 = vld [vmem:[%s573 + $0xf2] sm:$0xff]
        %v1032 = vld [vmem:[%s573 + $0xfa] sm:$0xff]
        %v1033 = vld [vmem:[%s573 + $0x102] sm:$0xff]
        %v1034 = vld [vmem:[%s573 + $0x10a] sm:$0xff]
        %v1035 = vld [vmem:[%s573 + $0x112] sm:$0xff]
        %v1036 = vld [vmem:[%s573 + $0x11a] sm:$0xff]
        %v1037 = vpack.c.bf16 %v1002, %v1001
        %v1038 = vpack.c.bf16 %v1004, %v1003
        %v1039 = vpack.c.bf16 %v1006, %v1005
        %v1040 = vpack.c.bf16 %v1008, %v1007
        %v1041 = vpack.c.bf16 %v1010, %v1009
        %v1042 = vpack.c.bf16 %v1012, %v1011
        %v1043 = vpack.c.bf16 %v1014, %v1013
        %v1044 = vpack.c.bf16 %v1016, %v1015
        %v1045 = vpack.c.bf16 %v1018, %v1017
        %v1046 = vpack.c.bf16 %v1020, %v1019
        %v1047 = vpack.c.bf16 %v1022, %v1021
        %v1048 = vpack.c.bf16 %v1024, %v1023
        %v1049 = vpack.c.bf16 %v1026, %v1025
        %v1050 = vpack.c.bf16 %v1028, %v1027
        %v1051 = vpack.c.bf16 %v1030, %v1029
        %v1052 = vpack.c.bf16 %v1032, %v1031
        %v1053 = vpack.c.bf16 %v1034, %v1033
        %v1054 = vpack.c.bf16 %v1036, %v1035
        %s1055 = scalar_lea.vmem %s1, 4
        %v1056 = vld [vmem:[%s1055] sm:$0x3]
        %v1058 = vsel %vm687, %v1037, 0
        %v1061 = vsel %vm687, %v1038, 0
        %v1064 = vsel %vm687, %v1039, 0
        %v1067 = vsel %vm687, %v1040, 0
        %v1070 = vsel %vm687, %v1041, 0
        %v1073 = vsel %vm687, %v1042, 0
        %v1076 = vsel %vm687, %v1043, 0
        %v1079 = vsel %vm687, %v1044, 0
        %v1082 = vsel %vm687, %v1045, 0
        %v1085 = vsel %vm687, %v1046, 0
        %v1088 = vsel %vm687, %v1047, 0
        %v1091 = vsel %vm687, %v1048, 0
        %v1094 = vsel %vm687, %v1049, 0
        %v1097 = vsel %vm687, %v1050, 0
        %v1100 = vsel %vm687, %v1051, 0
        %v1103 = vsel %vm687, %v1052, 0
        %v1106 = vsel %vm687, %v1053, 0
        %v1109 = vsel %vm687, %v1054, 0
        %v1112 = vsel %vm742, %v1056, 0
        %1114 = vmatpush.bf16.msra.mxu0 0
        %1115 = vmatpush.bf16.msra.mxu0 0
        %1116 = vmatpush.bf16.msra.mxu0 0
        %1117 = vmatpush.bf16.msra.mxu0 0
        %1118 = vmatpush.bf16.msra.mxu0 0
        %1119 = vmatpush.bf16.msra.mxu0 0
        %1120 = vmatpush.bf16.msra.mxu0 0
        %1121 = vmatpush.bf16.msra.mxu0 %v1112
        %1122 = vmatmul.bf16.gmra.mxu0 %v1058
        %v1123 = vpop.f32.mrf.mxu0
        %v1124 = vadd.f32 0.0, %v1123
        %v1125 = vpop.f32.mrf.mxu0
        %v1126 = vadd.f32 0.0, %v1125
        %1127 = vmatmul.bf16.gmra.mxu0 %v1061
        %v1128 = vpop.f32.mrf.mxu0
        %v1129 = vadd.f32 0.0, %v1128
        %v1130 = vpop.f32.mrf.mxu0
        %v1131 = vadd.f32 0.0, %v1130
        %1132 = vmatmul.bf16.gmra.mxu0 %v1064
        %v1133 = vpop.f32.mrf.mxu0
        %v1134 = vadd.f32 0.0, %v1133
        %v1135 = vpop.f32.mrf.mxu0
        %v1136 = vadd.f32 0.0, %v1135
        %1137 = vmatmul.bf16.gmra.mxu0 %v1067
        %v1138 = vpop.f32.mrf.mxu0
        %v1139 = vadd.f32 0.0, %v1138
        %v1140 = vpop.f32.mrf.mxu0
        %v1141 = vadd.f32 0.0, %v1140
        %1142 = vmatmul.bf16.gmra.mxu0 %v1070
        %v1143 = vpop.f32.mrf.mxu0
        %v1144 = vadd.f32 0.0, %v1143
        %v1145 = vpop.f32.mrf.mxu0
        %v1146 = vadd.f32 0.0, %v1145
        %1147 = vmatmul.bf16.gmra.mxu0 %v1073
        %v1148 = vpop.f32.mrf.mxu0
        %v1149 = vadd.f32 0.0, %v1148
        %v1150 = vpop.f32.mrf.mxu0
        %v1151 = vadd.f32 0.0, %v1150
        %1152 = vmatmul.bf16.gmra.mxu0 %v1076
        %v1153 = vpop.f32.mrf.mxu0
        %v1154 = vadd.f32 0.0, %v1153
        %v1155 = vpop.f32.mrf.mxu0
        %v1156 = vadd.f32 0.0, %v1155
        %1157 = vmatmul.bf16.gmra.mxu0 %v1079
        %v1158 = vpop.f32.mrf.mxu0
        %v1159 = vadd.f32 0.0, %v1158
        %v1160 = vpop.f32.mrf.mxu0
        %v1161 = vadd.f32 0.0, %v1160
        %1162 = vmatmul.bf16.gmra.mxu0 %v1082
        %v1163 = vpop.f32.mrf.mxu0
        %v1164 = vadd.f32 0.0, %v1163
        %v1165 = vpop.f32.mrf.mxu0
        %v1166 = vadd.f32 0.0, %v1165
        %1167 = vmatmul.bf16.gmra.mxu0 %v1085
        %v1168 = vpop.f32.mrf.mxu0
        %v1169 = vadd.f32 0.0, %v1168
        %v1170 = vpop.f32.mrf.mxu0
        %v1171 = vadd.f32 0.0, %v1170
        %1172 = vmatmul.bf16.gmra.mxu0 %v1088
        %v1173 = vpop.f32.mrf.mxu0
        %v1174 = vadd.f32 0.0, %v1173
        %v1175 = vpop.f32.mrf.mxu0
        %v1176 = vadd.f32 0.0, %v1175
        %1177 = vmatmul.bf16.gmra.mxu0 %v1091
        %v1178 = vpop.f32.mrf.mxu0
        %v1179 = vadd.f32 0.0, %v1178
        %v1180 = vpop.f32.mrf.mxu0
        %v1181 = vadd.f32 0.0, %v1180
        %1182 = vmatmul.bf16.gmra.mxu0 %v1094
        %v1183 = vpop.f32.mrf.mxu0
        %v1184 = vadd.f32 0.0, %v1183
        %v1185 = vpop.f32.mrf.mxu0
        %v1186 = vadd.f32 0.0, %v1185
        %1187 = vmatmul.bf16.gmra.mxu0 %v1097
        %v1188 = vpop.f32.mrf.mxu0
        %v1189 = vadd.f32 0.0, %v1188
        %v1190 = vpop.f32.mrf.mxu0
        %v1191 = vadd.f32 0.0, %v1190
        %1192 = vmatmul.bf16.gmra.mxu0 %v1100
        %v1193 = vpop.f32.mrf.mxu0
        %v1194 = vadd.f32 0.0, %v1193
        %v1195 = vpop.f32.mrf.mxu0
        %v1196 = vadd.f32 0.0, %v1195
        %1197 = vmatmul.bf16.gmra.mxu0 %v1103
        %v1198 = vpop.f32.mrf.mxu0
        %v1199 = vadd.f32 0.0, %v1198
        %v1200 = vpop.f32.mrf.mxu0
        %v1201 = vadd.f32 0.0, %v1200
        %1202 = vmatmul.bf16.gmra.mxu0 %v1106
        %v1203 = vpop.f32.mrf.mxu0
        %v1204 = vadd.f32 0.0, %v1203
        %v1205 = vpop.f32.mrf.mxu0
        %v1206 = vadd.f32 0.0, %v1205
        %1207 = vmatmul.bf16.gmra.mxu0 %v1109
        %v1208 = vpop.f32.mrf.mxu0
        %v1209 = vadd.f32 0.0, %v1208
        %v1210 = vpop.f32.mrf.mxu0
        %v1211 = vadd.f32 0.0, %v1210
        %1212 = vdwg.mxu0
        %v1213 = vadd.f32 %v912, %v1124
        %v1214 = vadd.f32 %v914, %v1126
        %v1215 = vadd.f32 %v917, %v1129
        %v1216 = vadd.f32 %v919, %v1131
        %v1217 = vadd.f32 %v922, %v1134
        %v1218 = vadd.f32 %v924, %v1136
        %v1219 = vadd.f32 %v927, %v1139
        %v1220 = vadd.f32 %v929, %v1141
        %v1221 = vadd.f32 %v932, %v1144
        %v1222 = vadd.f32 %v934, %v1146
        %v1223 = vadd.f32 %v937, %v1149
        %v1224 = vadd.f32 %v939, %v1151
        %v1225 = vadd.f32 %v942, %v1154
        %v1226 = vadd.f32 %v944, %v1156
        %v1227 = vadd.f32 %v947, %v1159
        %v1228 = vadd.f32 %v949, %v1161
        %v1229 = vadd.f32 %v952, %v1164
        %v1230 = vadd.f32 %v954, %v1166
        %v1231 = vadd.f32 %v957, %v1169
        %v1232 = vadd.f32 %v959, %v1171
        %v1233 = vadd.f32 %v962, %v1174
        %v1234 = vadd.f32 %v964, %v1176
        %v1235 = vadd.f32 %v967, %v1179
        %v1236 = vadd.f32 %v969, %v1181
        %v1237 = vadd.f32 %v972, %v1184
        %v1238 = vadd.f32 %v974, %v1186
        %v1239 = vadd.f32 %v977, %v1189
        %v1240 = vadd.f32 %v979, %v1191
        %v1241 = vadd.f32 %v982, %v1194
        %v1242 = vadd.f32 %v984, %v1196
        %v1243 = vadd.f32 %v987, %v1199
        %v1244 = vadd.f32 %v989, %v1201
        %v1245 = vadd.f32 %v992, %v1204
        %v1246 = vadd.f32 %v994, %v1206
        %v1247 = vadd.f32 %v997, %v1209
        %v1248 = vadd.f32 %v999, %v1211
        %v1249 = vld [vmem:[%s573 + $0x12] sm:$0xff]
        %v1250 = vld [vmem:[%s573 + $0x1a] sm:$0xff]
        %v1251 = vld [vmem:[%s573 + $0x22] sm:$0xff]
        %v1252 = vld [vmem:[%s573 + $0x2a] sm:$0xff]
        %v1253 = vld [vmem:[%s573 + $0x32] sm:$0xff]
        %v1254 = vld [vmem:[%s573 + $0x3a] sm:$0xff]
        %v1255 = vld [vmem:[%s573 + $0x42] sm:$0xff]
        %v1256 = vld [vmem:[%s573 + $0x4a] sm:$0xff]
        %v1257 = vld [vmem:[%s573 + $0x52] sm:$0xff]
        %v1258 = vld [vmem:[%s573 + $0x5a] sm:$0xff]
        %v1259 = vld [vmem:[%s573 + $0x62] sm:$0xff]
        %v1260 = vld [vmem:[%s573 + $0x6a] sm:$0xff]
        %v1261 = vld [vmem:[%s573 + $0x72] sm:$0xff]
        %v1262 = vld [vmem:[%s573 + $0x7a] sm:$0xff]
        %v1263 = vld [vmem:[%s573 + $0x82] sm:$0xff]
        %v1264 = vld [vmem:[%s573 + $0x8a] sm:$0xff]
        %v1265 = vld [vmem:[%s573 + $0x92] sm:$0xff]
        %v1266 = vld [vmem:[%s573 + $0x9a] sm:$0xff]
        %v1267 = vld [vmem:[%s573 + $0xa2] sm:$0xff]
        %v1268 = vld [vmem:[%s573 + $0xaa] sm:$0xff]
        %v1269 = vld [vmem:[%s573 + $0xb2] sm:$0xff]
        %v1270 = vld [vmem:[%s573 + $0xba] sm:$0xff]
        %v1271 = vld [vmem:[%s573 + $0xc2] sm:$0xff]
        %v1272 = vld [vmem:[%s573 + $0xca] sm:$0xff]
        %v1273 = vld [vmem:[%s573 + $0xd2] sm:$0xff]
        %v1274 = vld [vmem:[%s573 + $0xda] sm:$0xff]
        %v1275 = vld [vmem:[%s573 + $0xe2] sm:$0xff]
        %v1276 = vld [vmem:[%s573 + $0xea] sm:$0xff]
        %v1277 = vld [vmem:[%s573 + $0xf2] sm:$0xff]
        %v1278 = vld [vmem:[%s573 + $0xfa] sm:$0xff]
        %v1279 = vld [vmem:[%s573 + $0x102] sm:$0xff]
        %v1280 = vld [vmem:[%s573 + $0x10a] sm:$0xff]
        %v1281 = vld [vmem:[%s573 + $0x112] sm:$0xff]
        %v1282 = vld [vmem:[%s573 + $0x11a] sm:$0xff]
        %v1283 = vld [vmem:[%s573 + $0x122] sm:$0xff]
        %v1284 = vld [vmem:[%s573 + $0x12a] sm:$0xff]
        %v1285 = vpack.c.bf16 %v1250, %v1249
        %v1286 = vpack.c.bf16 %v1252, %v1251
        %v1287 = vpack.c.bf16 %v1254, %v1253
        %v1288 = vpack.c.bf16 %v1256, %v1255
        %v1289 = vpack.c.bf16 %v1258, %v1257
        %v1290 = vpack.c.bf16 %v1260, %v1259
        %v1291 = vpack.c.bf16 %v1262, %v1261
        %v1292 = vpack.c.bf16 %v1264, %v1263
        %v1293 = vpack.c.bf16 %v1266, %v1265
        %v1294 = vpack.c.bf16 %v1268, %v1267
        %v1295 = vpack.c.bf16 %v1270, %v1269
        %v1296 = vpack.c.bf16 %v1272, %v1271
        %v1297 = vpack.c.bf16 %v1274, %v1273
        %v1298 = vpack.c.bf16 %v1276, %v1275
        %v1299 = vpack.c.bf16 %v1278, %v1277
        %v1300 = vpack.c.bf16 %v1280, %v1279
        %v1301 = vpack.c.bf16 %v1282, %v1281
        %v1302 = vpack.c.bf16 %v1284, %v1283
        %s1303 = scalar_lea.vmem %s1, 6
        %v1304 = vld [vmem:[%s1303] sm:$0x3]
        %v1306 = vsel %vm687, %v1285, 0
        %v1309 = vsel %vm687, %v1286, 0
        %v1312 = vsel %vm687, %v1287, 0
        %v1315 = vsel %vm687, %v1288, 0
        %v1318 = vsel %vm687, %v1289, 0
        %v1321 = vsel %vm687, %v1290, 0
        %v1324 = vsel %vm687, %v1291, 0
        %v1327 = vsel %vm687, %v1292, 0
        %v1330 = vsel %vm687, %v1293, 0
        %v1333 = vsel %vm687, %v1294, 0
        %v1336 = vsel %vm687, %v1295, 0
        %v1339 = vsel %vm687, %v1296, 0
        %v1342 = vsel %vm687, %v1297, 0
        %v1345 = vsel %vm687, %v1298, 0
        %v1348 = vsel %vm687, %v1299, 0
        %v1351 = vsel %vm687, %v1300, 0
        %v1354 = vsel %vm687, %v1301, 0
        %v1357 = vsel %vm687, %v1302, 0
        %v1360 = vsel %vm742, %v1304, 0
        %1362 = vmatpush.bf16.msra.mxu0 0
        %1363 = vmatpush.bf16.msra.mxu0 0
        %1364 = vmatpush.bf16.msra.mxu0 0
        %1365 = vmatpush.bf16.msra.mxu0 0
        %1366 = vmatpush.bf16.msra.mxu0 0
        %1367 = vmatpush.bf16.msra.mxu0 0
        %1368 = vmatpush.bf16.msra.mxu0 0
        %1369 = vmatpush.bf16.msra.mxu0 %v1360
        %1370 = vmatmul.bf16.gmra.mxu0 %v1306
        %v1371 = vpop.f32.mrf.mxu0
        %v1372 = vadd.f32 0.0, %v1371
        %v1373 = vpop.f32.mrf.mxu0
        %v1374 = vadd.f32 0.0, %v1373
        %1375 = vmatmul.bf16.gmra.mxu0 %v1309
        %v1376 = vpop.f32.mrf.mxu0
        %v1377 = vadd.f32 0.0, %v1376
        %v1378 = vpop.f32.mrf.mxu0
        %v1379 = vadd.f32 0.0, %v1378
        %1380 = vmatmul.bf16.gmra.mxu0 %v1312
        %v1381 = vpop.f32.mrf.mxu0
        %v1382 = vadd.f32 0.0, %v1381
        %v1383 = vpop.f32.mrf.mxu0
        %v1384 = vadd.f32 0.0, %v1383
        %1385 = vmatmul.bf16.gmra.mxu0 %v1315
        %v1386 = vpop.f32.mrf.mxu0
        %v1387 = vadd.f32 0.0, %v1386
        %v1388 = vpop.f32.mrf.mxu0
        %v1389 = vadd.f32 0.0, %v1388
        %1390 = vmatmul.bf16.gmra.mxu0 %v1318
        %v1391 = vpop.f32.mrf.mxu0
        %v1392 = vadd.f32 0.0, %v1391
        %v1393 = vpop.f32.mrf.mxu0
        %v1394 = vadd.f32 0.0, %v1393
        %1395 = vmatmul.bf16.gmra.mxu0 %v1321
        %v1396 = vpop.f32.mrf.mxu0
        %v1397 = vadd.f32 0.0, %v1396
        %v1398 = vpop.f32.mrf.mxu0
        %v1399 = vadd.f32 0.0, %v1398
        %1400 = vmatmul.bf16.gmra.mxu0 %v1324
        %v1401 = vpop.f32.mrf.mxu0
        %v1402 = vadd.f32 0.0, %v1401
        %v1403 = vpop.f32.mrf.mxu0
        %v1404 = vadd.f32 0.0, %v1403
        %1405 = vmatmul.bf16.gmra.mxu0 %v1327
        %v1406 = vpop.f32.mrf.mxu0
        %v1407 = vadd.f32 0.0, %v1406
        %v1408 = vpop.f32.mrf.mxu0
        %v1409 = vadd.f32 0.0, %v1408
        %1410 = vmatmul.bf16.gmra.mxu0 %v1330
        %v1411 = vpop.f32.mrf.mxu0
        %v1412 = vadd.f32 0.0, %v1411
        %v1413 = vpop.f32.mrf.mxu0
        %v1414 = vadd.f32 0.0, %v1413
        %1415 = vmatmul.bf16.gmra.mxu0 %v1333
        %v1416 = vpop.f32.mrf.mxu0
        %v1417 = vadd.f32 0.0, %v1416
        %v1418 = vpop.f32.mrf.mxu0
        %v1419 = vadd.f32 0.0, %v1418
        %1420 = vmatmul.bf16.gmra.mxu0 %v1336
        %v1421 = vpop.f32.mrf.mxu0
        %v1422 = vadd.f32 0.0, %v1421
        %v1423 = vpop.f32.mrf.mxu0
        %v1424 = vadd.f32 0.0, %v1423
        %1425 = vmatmul.bf16.gmra.mxu0 %v1339
        %v1426 = vpop.f32.mrf.mxu0
        %v1427 = vadd.f32 0.0, %v1426
        %v1428 = vpop.f32.mrf.mxu0
        %v1429 = vadd.f32 0.0, %v1428
        %1430 = vmatmul.bf16.gmra.mxu0 %v1342
        %v1431 = vpop.f32.mrf.mxu0
        %v1432 = vadd.f32 0.0, %v1431
        %v1433 = vpop.f32.mrf.mxu0
        %v1434 = vadd.f32 0.0, %v1433
        %1435 = vmatmul.bf16.gmra.mxu0 %v1345
        %v1436 = vpop.f32.mrf.mxu0
        %v1437 = vadd.f32 0.0, %v1436
        %v1438 = vpop.f32.mrf.mxu0
        %v1439 = vadd.f32 0.0, %v1438
        %1440 = vmatmul.bf16.gmra.mxu0 %v1348
        %v1441 = vpop.f32.mrf.mxu0
        %v1442 = vadd.f32 0.0, %v1441
        %v1443 = vpop.f32.mrf.mxu0
        %v1444 = vadd.f32 0.0, %v1443
        %1445 = vmatmul.bf16.gmra.mxu0 %v1351
        %v1446 = vpop.f32.mrf.mxu0
        %v1447 = vadd.f32 0.0, %v1446
        %v1448 = vpop.f32.mrf.mxu0
        %v1449 = vadd.f32 0.0, %v1448
        %1450 = vmatmul.bf16.gmra.mxu0 %v1354
        %v1451 = vpop.f32.mrf.mxu0
        %v1452 = vadd.f32 0.0, %v1451
        %v1453 = vpop.f32.mrf.mxu0
        %v1454 = vadd.f32 0.0, %v1453
        %1455 = vmatmul.bf16.gmra.mxu0 %v1357
        %v1456 = vpop.f32.mrf.mxu0
        %v1457 = vadd.f32 0.0, %v1456
        %v1458 = vpop.f32.mrf.mxu0
        %v1459 = vadd.f32 0.0, %v1458
        %1460 = vdwg.mxu0
        %v1461 = vadd.f32 %v1213, %v1372
        %v1462 = vadd.f32 %v1214, %v1374
        %v1463 = vadd.f32 %v1215, %v1377
        %v1464 = vadd.f32 %v1216, %v1379
        %v1465 = vadd.f32 %v1217, %v1382
        %v1466 = vadd.f32 %v1218, %v1384
        %v1467 = vadd.f32 %v1219, %v1387
        %v1468 = vadd.f32 %v1220, %v1389
        %v1469 = vadd.f32 %v1221, %v1392
        %v1470 = vadd.f32 %v1222, %v1394
        %v1471 = vadd.f32 %v1223, %v1397
        %v1472 = vadd.f32 %v1224, %v1399
        %v1473 = vadd.f32 %v1225, %v1402
        %v1474 = vadd.f32 %v1226, %v1404
        %v1475 = vadd.f32 %v1227, %v1407
        %v1476 = vadd.f32 %v1228, %v1409
        %v1477 = vadd.f32 %v1229, %v1412
        %v1478 = vadd.f32 %v1230, %v1414
        %v1479 = vadd.f32 %v1231, %v1417
        %v1480 = vadd.f32 %v1232, %v1419
        %v1481 = vadd.f32 %v1233, %v1422
        %v1482 = vadd.f32 %v1234, %v1424
        %v1483 = vadd.f32 %v1235, %v1427
        %v1484 = vadd.f32 %v1236, %v1429
        %v1485 = vadd.f32 %v1237, %v1432
        %v1486 = vadd.f32 %v1238, %v1434
        %v1487 = vadd.f32 %v1239, %v1437
        %v1488 = vadd.f32 %v1240, %v1439
        %v1489 = vadd.f32 %v1241, %v1442
        %v1490 = vadd.f32 %v1242, %v1444
        %v1491 = vadd.f32 %v1243, %v1447
        %v1492 = vadd.f32 %v1244, %v1449
        %v1493 = vadd.f32 %v1245, %v1452
        %v1494 = vadd.f32 %v1246, %v1454
        %v1495 = vadd.f32 %v1247, %v1457
        %v1496 = vadd.f32 %v1248, %v1459
        %v1497 = vld [vmem:[%s573 + $0x13] sm:$0xff]
        %v1498 = vld [vmem:[%s573 + $0x1b] sm:$0xff]
        %v1499 = vld [vmem:[%s573 + $0x23] sm:$0xff]
        %v1500 = vld [vmem:[%s573 + $0x2b] sm:$0xff]
        %v1501 = vld [vmem:[%s573 + $0x33] sm:$0xff]
        %v1502 = vld [vmem:[%s573 + $0x3b] sm:$0xff]
        %v1503 = vld [vmem:[%s573 + $0x43] sm:$0xff]
        %v1504 = vld [vmem:[%s573 + $0x4b] sm:$0xff]
        %v1505 = vld [vmem:[%s573 + $0x53] sm:$0xff]
        %v1506 = vld [vmem:[%s573 + $0x5b] sm:$0xff]
        %v1507 = vld [vmem:[%s573 + $0x63] sm:$0xff]
        %v1508 = vld [vmem:[%s573 + $0x6b] sm:$0xff]
        %v1509 = vld [vmem:[%s573 + $0x73] sm:$0xff]
        %v1510 = vld [vmem:[%s573 + $0x7b] sm:$0xff]
        %v1511 = vld [vmem:[%s573 + $0x83] sm:$0xff]
        %v1512 = vld [vmem:[%s573 + $0x8b] sm:$0xff]
        %v1513 = vld [vmem:[%s573 + $0x93] sm:$0xff]
        %v1514 = vld [vmem:[%s573 + $0x9b] sm:$0xff]
        %v1515 = vld [vmem:[%s573 + $0xa3] sm:$0xff]
        %v1516 = vld [vmem:[%s573 + $0xab] sm:$0xff]
        %v1517 = vld [vmem:[%s573 + $0xb3] sm:$0xff]
        %v1518 = vld [vmem:[%s573 + $0xbb] sm:$0xff]
        %v1519 = vld [vmem:[%s573 + $0xc3] sm:$0xff]
        %v1520 = vld [vmem:[%s573 + $0xcb] sm:$0xff]
        %v1521 = vld [vmem:[%s573 + $0xd3] sm:$0xff]
        %v1522 = vld [vmem:[%s573 + $0xdb] sm:$0xff]
        %v1523 = vld [vmem:[%s573 + $0xe3] sm:$0xff]
        %v1524 = vld [vmem:[%s573 + $0xeb] sm:$0xff]
        %v1525 = vld [vmem:[%s573 + $0xf3] sm:$0xff]
        %v1526 = vld [vmem:[%s573 + $0xfb] sm:$0xff]
        %v1527 = vld [vmem:[%s573 + $0x103] sm:$0xff]
        %v1528 = vld [vmem:[%s573 + $0x10b] sm:$0xff]
        %v1529 = vld [vmem:[%s573 + $0x113] sm:$0xff]
        %v1530 = vld [vmem:[%s573 + $0x11b] sm:$0xff]
        %v1531 = vld [vmem:[%s573 + $0x123] sm:$0xff]
        %v1532 = vld [vmem:[%s573 + $0x12b] sm:$0xff]
        %v1533 = vpack.c.bf16 %v1498, %v1497
        %v1534 = vpack.c.bf16 %v1500, %v1499
        %v1535 = vpack.c.bf16 %v1502, %v1501
        %v1536 = vpack.c.bf16 %v1504, %v1503
        %v1537 = vpack.c.bf16 %v1506, %v1505
        %v1538 = vpack.c.bf16 %v1508, %v1507
        %v1539 = vpack.c.bf16 %v1510, %v1509
        %v1540 = vpack.c.bf16 %v1512, %v1511
        %v1541 = vpack.c.bf16 %v1514, %v1513
        %v1542 = vpack.c.bf16 %v1516, %v1515
        %v1543 = vpack.c.bf16 %v1518, %v1517
        %v1544 = vpack.c.bf16 %v1520, %v1519
        %v1545 = vpack.c.bf16 %v1522, %v1521
        %v1546 = vpack.c.bf16 %v1524, %v1523
        %v1547 = vpack.c.bf16 %v1526, %v1525
        %v1548 = vpack.c.bf16 %v1528, %v1527
        %v1549 = vpack.c.bf16 %v1530, %v1529
        %v1550 = vpack.c.bf16 %v1532, %v1531
        %s1551 = scalar_lea.vmem %s1, 8
        %v1552 = vld [vmem:[%s1551] sm:$0x3]
        %v1554 = vsel %vm687, %v1533, 0
        %v1557 = vsel %vm687, %v1534, 0
        %v1560 = vsel %vm687, %v1535, 0
        %v1563 = vsel %vm687, %v1536, 0
        %v1566 = vsel %vm687, %v1537, 0
        %v1569 = vsel %vm687, %v1538, 0
        %v1572 = vsel %vm687, %v1539, 0
        %v1575 = vsel %vm687, %v1540, 0
        %v1578 = vsel %vm687, %v1541, 0
        %v1581 = vsel %vm687, %v1542, 0
        %v1584 = vsel %vm687, %v1543, 0
        %v1587 = vsel %vm687, %v1544, 0
        %v1590 = vsel %vm687, %v1545, 0
        %v1593 = vsel %vm687, %v1546, 0
        %v1596 = vsel %vm687, %v1547, 0
        %v1599 = vsel %vm687, %v1548, 0
        %v1602 = vsel %vm687, %v1549, 0
        %v1605 = vsel %vm687, %v1550, 0
        %v1608 = vsel %vm742, %v1552, 0
        %1610 = vmatpush.bf16.msra.mxu0 0
        %1611 = vmatpush.bf16.msra.mxu0 0
        %1612 = vmatpush.bf16.msra.mxu0 0
        %1613 = vmatpush.bf16.msra.mxu0 0
        %1614 = vmatpush.bf16.msra.mxu0 0
        %1615 = vmatpush.bf16.msra.mxu0 0
        %1616 = vmatpush.bf16.msra.mxu0 0
        %1617 = vmatpush.bf16.msra.mxu0 %v1608
        %1618 = vmatmul.bf16.gmra.mxu0 %v1554
        %v1619 = vpop.f32.mrf.mxu0
        %v1620 = vadd.f32 0.0, %v1619
        %v1621 = vpop.f32.mrf.mxu0
        %v1622 = vadd.f32 0.0, %v1621
        %1623 = vmatmul.bf16.gmra.mxu0 %v1557
        %v1624 = vpop.f32.mrf.mxu0
        %v1625 = vadd.f32 0.0, %v1624
        %v1626 = vpop.f32.mrf.mxu0
        %v1627 = vadd.f32 0.0, %v1626
        %1628 = vmatmul.bf16.gmra.mxu0 %v1560
        %v1629 = vpop.f32.mrf.mxu0
        %v1630 = vadd.f32 0.0, %v1629
        %v1631 = vpop.f32.mrf.mxu0
        %v1632 = vadd.f32 0.0, %v1631
        %1633 = vmatmul.bf16.gmra.mxu0 %v1563
        %v1634 = vpop.f32.mrf.mxu0
        %v1635 = vadd.f32 0.0, %v1634
        %v1636 = vpop.f32.mrf.mxu0
        %v1637 = vadd.f32 0.0, %v1636
        %1638 = vmatmul.bf16.gmra.mxu0 %v1566
        %v1639 = vpop.f32.mrf.mxu0
        %v1640 = vadd.f32 0.0, %v1639
        %v1641 = vpop.f32.mrf.mxu0
        %v1642 = vadd.f32 0.0, %v1641
        %1643 = vmatmul.bf16.gmra.mxu0 %v1569
        %v1644 = vpop.f32.mrf.mxu0
        %v1645 = vadd.f32 0.0, %v1644
        %v1646 = vpop.f32.mrf.mxu0
        %v1647 = vadd.f32 0.0, %v1646
        %1648 = vmatmul.bf16.gmra.mxu0 %v1572
        %v1649 = vpop.f32.mrf.mxu0
        %v1650 = vadd.f32 0.0, %v1649
        %v1651 = vpop.f32.mrf.mxu0
        %v1652 = vadd.f32 0.0, %v1651
        %1653 = vmatmul.bf16.gmra.mxu0 %v1575
        %v1654 = vpop.f32.mrf.mxu0
        %v1655 = vadd.f32 0.0, %v1654
        %v1656 = vpop.f32.mrf.mxu0
        %v1657 = vadd.f32 0.0, %v1656
        %1658 = vmatmul.bf16.gmra.mxu0 %v1578
        %v1659 = vpop.f32.mrf.mxu0
        %v1660 = vadd.f32 0.0, %v1659
        %v1661 = vpop.f32.mrf.mxu0
        %v1662 = vadd.f32 0.0, %v1661
        %1663 = vmatmul.bf16.gmra.mxu0 %v1581
        %v1664 = vpop.f32.mrf.mxu0
        %v1665 = vadd.f32 0.0, %v1664
        %v1666 = vpop.f32.mrf.mxu0
        %v1667 = vadd.f32 0.0, %v1666
        %1668 = vmatmul.bf16.gmra.mxu0 %v1584
        %v1669 = vpop.f32.mrf.mxu0
        %v1670 = vadd.f32 0.0, %v1669
        %v1671 = vpop.f32.mrf.mxu0
        %v1672 = vadd.f32 0.0, %v1671
        %1673 = vmatmul.bf16.gmra.mxu0 %v1587
        %v1674 = vpop.f32.mrf.mxu0
        %v1675 = vadd.f32 0.0, %v1674
        %v1676 = vpop.f32.mrf.mxu0
        %v1677 = vadd.f32 0.0, %v1676
        %1678 = vmatmul.bf16.gmra.mxu0 %v1590
        %v1679 = vpop.f32.mrf.mxu0
        %v1680 = vadd.f32 0.0, %v1679
        %v1681 = vpop.f32.mrf.mxu0
        %v1682 = vadd.f32 0.0, %v1681
        %1683 = vmatmul.bf16.gmra.mxu0 %v1593
        %v1684 = vpop.f32.mrf.mxu0
        %v1685 = vadd.f32 0.0, %v1684
        %v1686 = vpop.f32.mrf.mxu0
        %v1687 = vadd.f32 0.0, %v1686
        %1688 = vmatmul.bf16.gmra.mxu0 %v1596
        %v1689 = vpop.f32.mrf.mxu0
        %v1690 = vadd.f32 0.0, %v1689
        %v1691 = vpop.f32.mrf.mxu0
        %v1692 = vadd.f32 0.0, %v1691
        %1693 = vmatmul.bf16.gmra.mxu0 %v1599
        %v1694 = vpop.f32.mrf.mxu0
        %v1695 = vadd.f32 0.0, %v1694
        %v1696 = vpop.f32.mrf.mxu0
        %v1697 = vadd.f32 0.0, %v1696
        %1698 = vmatmul.bf16.gmra.mxu0 %v1602
        %v1699 = vpop.f32.mrf.mxu0
        %v1700 = vadd.f32 0.0, %v1699
        %v1701 = vpop.f32.mrf.mxu0
        %v1702 = vadd.f32 0.0, %v1701
        %1703 = vmatmul.bf16.gmra.mxu0 %v1605
        %v1704 = vpop.f32.mrf.mxu0
        %v1705 = vadd.f32 0.0, %v1704
        %v1706 = vpop.f32.mrf.mxu0
        %v1707 = vadd.f32 0.0, %v1706
        %1708 = vdwg.mxu0
        %v1709 = vadd.f32 %v1461, %v1620
        %v1710 = vadd.f32 %v1462, %v1622
        %v1711 = vadd.f32 %v1463, %v1625
        %v1712 = vadd.f32 %v1464, %v1627
        %v1713 = vadd.f32 %v1465, %v1630
        %v1714 = vadd.f32 %v1466, %v1632
        %v1715 = vadd.f32 %v1467, %v1635
        %v1716 = vadd.f32 %v1468, %v1637
        %v1717 = vadd.f32 %v1469, %v1640
        %v1718 = vadd.f32 %v1470, %v1642
        %v1719 = vadd.f32 %v1471, %v1645
        %v1720 = vadd.f32 %v1472, %v1647
        %v1721 = vadd.f32 %v1473, %v1650
        %v1722 = vadd.f32 %v1474, %v1652
        %v1723 = vadd.f32 %v1475, %v1655
        %v1724 = vadd.f32 %v1476, %v1657
        %v1725 = vadd.f32 %v1477, %v1660
        %v1726 = vadd.f32 %v1478, %v1662
        %v1727 = vadd.f32 %v1479, %v1665
        %v1728 = vadd.f32 %v1480, %v1667
        %v1729 = vadd.f32 %v1481, %v1670
        %v1730 = vadd.f32 %v1482, %v1672
        %v1731 = vadd.f32 %v1483, %v1675
        %v1732 = vadd.f32 %v1484, %v1677
        %v1733 = vadd.f32 %v1485, %v1680
        %v1734 = vadd.f32 %v1486, %v1682
        %v1735 = vadd.f32 %v1487, %v1685
        %v1736 = vadd.f32 %v1488, %v1687
        %v1737 = vadd.f32 %v1489, %v1690
        %v1738 = vadd.f32 %v1490, %v1692
        %v1739 = vadd.f32 %v1491, %v1695
        %v1740 = vadd.f32 %v1492, %v1697
        %v1741 = vadd.f32 %v1493, %v1700
        %v1742 = vadd.f32 %v1494, %v1702
        %v1743 = vadd.f32 %v1495, %v1705
        %v1744 = vadd.f32 %v1496, %v1707
        %v1745 = vld [vmem:[%s573 + $0x14] sm:$0xff]
        %v1746 = vld [vmem:[%s573 + $0x1c] sm:$0xff]
        %v1747 = vld [vmem:[%s573 + $0x24] sm:$0xff]
        %v1748 = vld [vmem:[%s573 + $0x2c] sm:$0xff]
        %v1749 = vld [vmem:[%s573 + $0x34] sm:$0xff]
        %v1750 = vld [vmem:[%s573 + $0x3c] sm:$0xff]
        %v1751 = vld [vmem:[%s573 + $0x44] sm:$0xff]
        %v1752 = vld [vmem:[%s573 + $0x4c] sm:$0xff]
        %v1753 = vld [vmem:[%s573 + $0x54] sm:$0xff]
        %v1754 = vld [vmem:[%s573 + $0x5c] sm:$0xff]
        %v1755 = vld [vmem:[%s573 + $0x64] sm:$0xff]
        %v1756 = vld [vmem:[%s573 + $0x6c] sm:$0xff]
        %v1757 = vld [vmem:[%s573 + $0x74] sm:$0xff]
        %v1758 = vld [vmem:[%s573 + $0x7c] sm:$0xff]
        %v1759 = vld [vmem:[%s573 + $0x84] sm:$0xff]
        %v1760 = vld [vmem:[%s573 + $0x8c] sm:$0xff]
        %v1761 = vld [vmem:[%s573 + $0x94] sm:$0xff]
        %v1762 = vld [vmem:[%s573 + $0x9c] sm:$0xff]
        %v1763 = vld [vmem:[%s573 + $0xa4] sm:$0xff]
        %v1764 = vld [vmem:[%s573 + $0xac] sm:$0xff]
        %v1765 = vld [vmem:[%s573 + $0xb4] sm:$0xff]
        %v1766 = vld [vmem:[%s573 + $0xbc] sm:$0xff]
        %v1767 = vld [vmem:[%s573 + $0xc4] sm:$0xff]
        %v1768 = vld [vmem:[%s573 + $0xcc] sm:$0xff]
        %v1769 = vld [vmem:[%s573 + $0xd4] sm:$0xff]
        %v1770 = vld [vmem:[%s573 + $0xdc] sm:$0xff]
        %v1771 = vld [vmem:[%s573 + $0xe4] sm:$0xff]
        %v1772 = vld [vmem:[%s573 + $0xec] sm:$0xff]
        %v1773 = vld [vmem:[%s573 + $0xf4] sm:$0xff]
        %v1774 = vld [vmem:[%s573 + $0xfc] sm:$0xff]
        %v1775 = vld [vmem:[%s573 + $0x104] sm:$0xff]
        %v1776 = vld [vmem:[%s573 + $0x10c] sm:$0xff]
        %v1777 = vld [vmem:[%s573 + $0x114] sm:$0xff]
        %v1778 = vld [vmem:[%s573 + $0x11c] sm:$0xff]
        %v1779 = vld [vmem:[%s573 + $0x124] sm:$0xff]
        %v1780 = vld [vmem:[%s573 + $0x12c] sm:$0xff]
        %v1781 = vpack.c.bf16 %v1746, %v1745
        %v1782 = vpack.c.bf16 %v1748, %v1747
        %v1783 = vpack.c.bf16 %v1750, %v1749
        %v1784 = vpack.c.bf16 %v1752, %v1751
        %v1785 = vpack.c.bf16 %v1754, %v1753
        %v1786 = vpack.c.bf16 %v1756, %v1755
        %v1787 = vpack.c.bf16 %v1758, %v1757
        %v1788 = vpack.c.bf16 %v1760, %v1759
        %v1789 = vpack.c.bf16 %v1762, %v1761
        %v1790 = vpack.c.bf16 %v1764, %v1763
        %v1791 = vpack.c.bf16 %v1766, %v1765
        %v1792 = vpack.c.bf16 %v1768, %v1767
        %v1793 = vpack.c.bf16 %v1770, %v1769
        %v1794 = vpack.c.bf16 %v1772, %v1771
        %v1795 = vpack.c.bf16 %v1774, %v1773
        %v1796 = vpack.c.bf16 %v1776, %v1775
        %v1797 = vpack.c.bf16 %v1778, %v1777
        %v1798 = vpack.c.bf16 %v1780, %v1779
        %s1799 = scalar_lea.vmem %s1, 10
        %v1800 = vld [vmem:[%s1799] sm:$0x3]
        %v1802 = vsel %vm687, %v1781, 0
        %v1805 = vsel %vm687, %v1782, 0
        %v1808 = vsel %vm687, %v1783, 0
        %v1811 = vsel %vm687, %v1784, 0
        %v1814 = vsel %vm687, %v1785, 0
        %v1817 = vsel %vm687, %v1786, 0
        %v1820 = vsel %vm687, %v1787, 0
        %v1823 = vsel %vm687, %v1788, 0
        %v1826 = vsel %vm687, %v1789, 0
        %v1829 = vsel %vm687, %v1790, 0
        %v1832 = vsel %vm687, %v1791, 0
        %v1835 = vsel %vm687, %v1792, 0
        %v1838 = vsel %vm687, %v1793, 0
        %v1841 = vsel %vm687, %v1794, 0
        %v1844 = vsel %vm687, %v1795, 0
        %v1847 = vsel %vm687, %v1796, 0
        %v1850 = vsel %vm687, %v1797, 0
        %v1853 = vsel %vm687, %v1798, 0
        %v1856 = vsel %vm742, %v1800, 0
        %1858 = vmatpush.bf16.msra.mxu0 0
        %1859 = vmatpush.bf16.msra.mxu0 0
        %1860 = vmatpush.bf16.msra.mxu0 0
        %1861 = vmatpush.bf16.msra.mxu0 0
        %1862 = vmatpush.bf16.msra.mxu0 0
        %1863 = vmatpush.bf16.msra.mxu0 0
        %1864 = vmatpush.bf16.msra.mxu0 0
        %1865 = vmatpush.bf16.msra.mxu0 %v1856
        %1866 = vmatmul.bf16.gmra.mxu0 %v1802
        %v1867 = vpop.f32.mrf.mxu0
        %v1868 = vadd.f32 0.0, %v1867
        %v1869 = vpop.f32.mrf.mxu0
        %v1870 = vadd.f32 0.0, %v1869
        %1871 = vmatmul.bf16.gmra.mxu0 %v1805
        %v1872 = vpop.f32.mrf.mxu0
        %v1873 = vadd.f32 0.0, %v1872
        %v1874 = vpop.f32.mrf.mxu0
        %v1875 = vadd.f32 0.0, %v1874
        %1876 = vmatmul.bf16.gmra.mxu0 %v1808
        %v1877 = vpop.f32.mrf.mxu0
        %v1878 = vadd.f32 0.0, %v1877
        %v1879 = vpop.f32.mrf.mxu0
        %v1880 = vadd.f32 0.0, %v1879
        %1881 = vmatmul.bf16.gmra.mxu0 %v1811
        %v1882 = vpop.f32.mrf.mxu0
        %v1883 = vadd.f32 0.0, %v1882
        %v1884 = vpop.f32.mrf.mxu0
        %v1885 = vadd.f32 0.0, %v1884
        %1886 = vmatmul.bf16.gmra.mxu0 %v1814
        %v1887 = vpop.f32.mrf.mxu0
        %v1888 = vadd.f32 0.0, %v1887
        %v1889 = vpop.f32.mrf.mxu0
        %v1890 = vadd.f32 0.0, %v1889
        %1891 = vmatmul.bf16.gmra.mxu0 %v1817
        %v1892 = vpop.f32.mrf.mxu0
        %v1893 = vadd.f32 0.0, %v1892
        %v1894 = vpop.f32.mrf.mxu0
        %v1895 = vadd.f32 0.0, %v1894
        %1896 = vmatmul.bf16.gmra.mxu0 %v1820
        %v1897 = vpop.f32.mrf.mxu0
        %v1898 = vadd.f32 0.0, %v1897
        %v1899 = vpop.f32.mrf.mxu0
        %v1900 = vadd.f32 0.0, %v1899
        %1901 = vmatmul.bf16.gmra.mxu0 %v1823
        %v1902 = vpop.f32.mrf.mxu0
        %v1903 = vadd.f32 0.0, %v1902
        %v1904 = vpop.f32.mrf.mxu0
        %v1905 = vadd.f32 0.0, %v1904
        %1906 = vmatmul.bf16.gmra.mxu0 %v1826
        %v1907 = vpop.f32.mrf.mxu0
        %v1908 = vadd.f32 0.0, %v1907
        %v1909 = vpop.f32.mrf.mxu0
        %v1910 = vadd.f32 0.0, %v1909
        %1911 = vmatmul.bf16.gmra.mxu0 %v1829
        %v1912 = vpop.f32.mrf.mxu0
        %v1913 = vadd.f32 0.0, %v1912
        %v1914 = vpop.f32.mrf.mxu0
        %v1915 = vadd.f32 0.0, %v1914
        %1916 = vmatmul.bf16.gmra.mxu0 %v1832
        %v1917 = vpop.f32.mrf.mxu0
        %v1918 = vadd.f32 0.0, %v1917
        %v1919 = vpop.f32.mrf.mxu0
        %v1920 = vadd.f32 0.0, %v1919
        %1921 = vmatmul.bf16.gmra.mxu0 %v1835
        %v1922 = vpop.f32.mrf.mxu0
        %v1923 = vadd.f32 0.0, %v1922
        %v1924 = vpop.f32.mrf.mxu0
        %v1925 = vadd.f32 0.0, %v1924
        %1926 = vmatmul.bf16.gmra.mxu0 %v1838
        %v1927 = vpop.f32.mrf.mxu0
        %v1928 = vadd.f32 0.0, %v1927
        %v1929 = vpop.f32.mrf.mxu0
        %v1930 = vadd.f32 0.0, %v1929
        %1931 = vmatmul.bf16.gmra.mxu0 %v1841
        %v1932 = vpop.f32.mrf.mxu0
        %v1933 = vadd.f32 0.0, %v1932
        %v1934 = vpop.f32.mrf.mxu0
        %v1935 = vadd.f32 0.0, %v1934
        %1936 = vmatmul.bf16.gmra.mxu0 %v1844
        %v1937 = vpop.f32.mrf.mxu0
        %v1938 = vadd.f32 0.0, %v1937
        %v1939 = vpop.f32.mrf.mxu0
        %v1940 = vadd.f32 0.0, %v1939
        %1941 = vmatmul.bf16.gmra.mxu0 %v1847
        %v1942 = vpop.f32.mrf.mxu0
        %v1943 = vadd.f32 0.0, %v1942
        %v1944 = vpop.f32.mrf.mxu0
        %v1945 = vadd.f32 0.0, %v1944
        %1946 = vmatmul.bf16.gmra.mxu0 %v1850
        %v1947 = vpop.f32.mrf.mxu0
        %v1948 = vadd.f32 0.0, %v1947
        %v1949 = vpop.f32.mrf.mxu0
        %v1950 = vadd.f32 0.0, %v1949
        %1951 = vmatmul.bf16.gmra.mxu0 %v1853
        %v1952 = vpop.f32.mrf.mxu0
        %v1953 = vadd.f32 0.0, %v1952
        %v1954 = vpop.f32.mrf.mxu0
        %v1955 = vadd.f32 0.0, %v1954
        %1956 = vdwg.mxu0
        %v1957 = vadd.f32 %v1709, %v1868
        %v1958 = vadd.f32 %v1710, %v1870
        %v1959 = vadd.f32 %v1711, %v1873
        %v1960 = vadd.f32 %v1712, %v1875
        %v1961 = vadd.f32 %v1713, %v1878
        %v1962 = vadd.f32 %v1714, %v1880
        %v1963 = vadd.f32 %v1715, %v1883
        %v1964 = vadd.f32 %v1716, %v1885
        %v1965 = vadd.f32 %v1717, %v1888
        %v1966 = vadd.f32 %v1718, %v1890
        %v1967 = vadd.f32 %v1719, %v1893
        %v1968 = vadd.f32 %v1720, %v1895
        %v1969 = vadd.f32 %v1721, %v1898
        %v1970 = vadd.f32 %v1722, %v1900
        %v1971 = vadd.f32 %v1723, %v1903
        %v1972 = vadd.f32 %v1724, %v1905
        %v1973 = vadd.f32 %v1725, %v1908
        %v1974 = vadd.f32 %v1726, %v1910
        %v1975 = vadd.f32 %v1727, %v1913
        %v1976 = vadd.f32 %v1728, %v1915
        %v1977 = vadd.f32 %v1729, %v1918
        %v1978 = vadd.f32 %v1730, %v1920
        %v1979 = vadd.f32 %v1731, %v1923
        %v1980 = vadd.f32 %v1732, %v1925
        %v1981 = vadd.f32 %v1733, %v1928
        %v1982 = vadd.f32 %v1734, %v1930
        %v1983 = vadd.f32 %v1735, %v1933
        %v1984 = vadd.f32 %v1736, %v1935
        %v1985 = vadd.f32 %v1737, %v1938
        %v1986 = vadd.f32 %v1738, %v1940
        %v1987 = vadd.f32 %v1739, %v1943
        %v1988 = vadd.f32 %v1740, %v1945
        %v1989 = vadd.f32 %v1741, %v1948
        %v1990 = vadd.f32 %v1742, %v1950
        %v1991 = vadd.f32 %v1743, %v1953
        %v1992 = vadd.f32 %v1744, %v1955
        %v1993 = vld [vmem:[%s573 + $0x24] sm:$0xff]
        %v1994 = vld [vmem:[%s573 + $0x2c] sm:$0xff]
        %v1995 = vld [vmem:[%s573 + $0x34] sm:$0xff]
        %v1996 = vld [vmem:[%s573 + $0x3c] sm:$0xff]
        %v1997 = vld [vmem:[%s573 + $0x44] sm:$0xff]
        %v1998 = vld [vmem:[%s573 + $0x4c] sm:$0xff]
        %v1999 = vld [vmem:[%s573 + $0x54] sm:$0xff]
        %v2000 = vld [vmem:[%s573 + $0x5c] sm:$0xff]
        %v2001 = vld [vmem:[%s573 + $0x64] sm:$0xff]
        %v2002 = vld [vmem:[%s573 + $0x6c] sm:$0xff]
        %v2003 = vld [vmem:[%s573 + $0x74] sm:$0xff]
        %v2004 = vld [vmem:[%s573 + $0x7c] sm:$0xff]
        %v2005 = vld [vmem:[%s573 + $0x84] sm:$0xff]
        %v2006 = vld [vmem:[%s573 + $0x8c] sm:$0xff]
        %v2007 = vld [vmem:[%s573 + $0x94] sm:$0xff]
        %v2008 = vld [vmem:[%s573 + $0x9c] sm:$0xff]
        %v2009 = vld [vmem:[%s573 + $0xa4] sm:$0xff]
        %v2010 = vld [vmem:[%s573 + $0xac] sm:$0xff]
        %v2011 = vld [vmem:[%s573 + $0xb4] sm:$0xff]
        %v2012 = vld [vmem:[%s573 + $0xbc] sm:$0xff]
        %v2013 = vld [vmem:[%s573 + $0xc4] sm:$0xff]
        %v2014 = vld [vmem:[%s573 + $0xcc] sm:$0xff]
        %v2015 = vld [vmem:[%s573 + $0xd4] sm:$0xff]
        %v2016 = vld [vmem:[%s573 + $0xdc] sm:$0xff]
        %v2017 = vld [vmem:[%s573 + $0xe4] sm:$0xff]
        %v2018 = vld [vmem:[%s573 + $0xec] sm:$0xff]
        %v2019 = vld [vmem:[%s573 + $0xf4] sm:$0xff]
        %v2020 = vld [vmem:[%s573 + $0xfc] sm:$0xff]
        %v2021 = vld [vmem:[%s573 + $0x104] sm:$0xff]
        %v2022 = vld [vmem:[%s573 + $0x10c] sm:$0xff]
        %v2023 = vld [vmem:[%s573 + $0x114] sm:$0xff]
        %v2024 = vld [vmem:[%s573 + $0x11c] sm:$0xff]
        %v2025 = vld [vmem:[%s573 + $0x124] sm:$0xff]
        %v2026 = vld [vmem:[%s573 + $0x12c] sm:$0xff]
        %v2027 = vld [vmem:[%s573 + $0x134] sm:$0xff]
        %v2028 = vld [vmem:[%s573 + $0x13c] sm:$0xff]
        %v2029 = vpack.c.bf16 %v1994, %v1993
        %v2030 = vpack.c.bf16 %v1996, %v1995
        %v2031 = vpack.c.bf16 %v1998, %v1997
        %v2032 = vpack.c.bf16 %v2000, %v1999
        %v2033 = vpack.c.bf16 %v2002, %v2001
        %v2034 = vpack.c.bf16 %v2004, %v2003
        %v2035 = vpack.c.bf16 %v2006, %v2005
        %v2036 = vpack.c.bf16 %v2008, %v2007
        %v2037 = vpack.c.bf16 %v2010, %v2009
        %v2038 = vpack.c.bf16 %v2012, %v2011
        %v2039 = vpack.c.bf16 %v2014, %v2013
        %v2040 = vpack.c.bf16 %v2016, %v2015
        %v2041 = vpack.c.bf16 %v2018, %v2017
        %v2042 = vpack.c.bf16 %v2020, %v2019
        %v2043 = vpack.c.bf16 %v2022, %v2021
        %v2044 = vpack.c.bf16 %v2024, %v2023
        %v2045 = vpack.c.bf16 %v2026, %v2025
        %v2046 = vpack.c.bf16 %v2028, %v2027
        %s2047 = scalar_lea.vmem %s1, 12
        %v2048 = vld [vmem:[%s2047] sm:$0x3]
        %v2050 = vsel %vm687, %v2029, 0
        %v2053 = vsel %vm687, %v2030, 0
        %v2056 = vsel %vm687, %v2031, 0
        %v2059 = vsel %vm687, %v2032, 0
        %v2062 = vsel %vm687, %v2033, 0
        %v2065 = vsel %vm687, %v2034, 0
        %v2068 = vsel %vm687, %v2035, 0
        %v2071 = vsel %vm687, %v2036, 0
        %v2074 = vsel %vm687, %v2037, 0
        %v2077 = vsel %vm687, %v2038, 0
        %v2080 = vsel %vm687, %v2039, 0
        %v2083 = vsel %vm687, %v2040, 0
        %v2086 = vsel %vm687, %v2041, 0
        %v2089 = vsel %vm687, %v2042, 0
        %v2092 = vsel %vm687, %v2043, 0
        %v2095 = vsel %vm687, %v2044, 0
        %v2098 = vsel %vm687, %v2045, 0
        %v2101 = vsel %vm687, %v2046, 0
        %v2104 = vsel %vm742, %v2048, 0
        %2106 = vmatpush.bf16.msra.mxu0 0
        %2107 = vmatpush.bf16.msra.mxu0 0
        %2108 = vmatpush.bf16.msra.mxu0 0
        %2109 = vmatpush.bf16.msra.mxu0 0
        %2110 = vmatpush.bf16.msra.mxu0 0
        %2111 = vmatpush.bf16.msra.mxu0 0
        %2112 = vmatpush.bf16.msra.mxu0 0
        %2113 = vmatpush.bf16.msra.mxu0 %v2104
        %2114 = vmatmul.bf16.gmra.mxu0 %v2050
        %v2115 = vpop.f32.mrf.mxu0
        %v2116 = vadd.f32 0.0, %v2115
        %v2117 = vpop.f32.mrf.mxu0
        %v2118 = vadd.f32 0.0, %v2117
        %2119 = vmatmul.bf16.gmra.mxu0 %v2053
        %v2120 = vpop.f32.mrf.mxu0
        %v2121 = vadd.f32 0.0, %v2120
        %v2122 = vpop.f32.mrf.mxu0
        %v2123 = vadd.f32 0.0, %v2122
        %2124 = vmatmul.bf16.gmra.mxu0 %v2056
        %v2125 = vpop.f32.mrf.mxu0
        %v2126 = vadd.f32 0.0, %v2125
        %v2127 = vpop.f32.mrf.mxu0
        %v2128 = vadd.f32 0.0, %v2127
        %2129 = vmatmul.bf16.gmra.mxu0 %v2059
        %v2130 = vpop.f32.mrf.mxu0
        %v2131 = vadd.f32 0.0, %v2130
        %v2132 = vpop.f32.mrf.mxu0
        %v2133 = vadd.f32 0.0, %v2132
        %2134 = vmatmul.bf16.gmra.mxu0 %v2062
        %v2135 = vpop.f32.mrf.mxu0
        %v2136 = vadd.f32 0.0, %v2135
        %v2137 = vpop.f32.mrf.mxu0
        %v2138 = vadd.f32 0.0, %v2137
        %2139 = vmatmul.bf16.gmra.mxu0 %v2065
        %v2140 = vpop.f32.mrf.mxu0
        %v2141 = vadd.f32 0.0, %v2140
        %v2142 = vpop.f32.mrf.mxu0
        %v2143 = vadd.f32 0.0, %v2142
        %2144 = vmatmul.bf16.gmra.mxu0 %v2068
        %v2145 = vpop.f32.mrf.mxu0
        %v2146 = vadd.f32 0.0, %v2145
        %v2147 = vpop.f32.mrf.mxu0
        %v2148 = vadd.f32 0.0, %v2147
        %2149 = vmatmul.bf16.gmra.mxu0 %v2071
        %v2150 = vpop.f32.mrf.mxu0
        %v2151 = vadd.f32 0.0, %v2150
        %v2152 = vpop.f32.mrf.mxu0
        %v2153 = vadd.f32 0.0, %v2152
        %2154 = vmatmul.bf16.gmra.mxu0 %v2074
        %v2155 = vpop.f32.mrf.mxu0
        %v2156 = vadd.f32 0.0, %v2155
        %v2157 = vpop.f32.mrf.mxu0
        %v2158 = vadd.f32 0.0, %v2157
        %2159 = vmatmul.bf16.gmra.mxu0 %v2077
        %v2160 = vpop.f32.mrf.mxu0
        %v2161 = vadd.f32 0.0, %v2160
        %v2162 = vpop.f32.mrf.mxu0
        %v2163 = vadd.f32 0.0, %v2162
        %2164 = vmatmul.bf16.gmra.mxu0 %v2080
        %v2165 = vpop.f32.mrf.mxu0
        %v2166 = vadd.f32 0.0, %v2165
        %v2167 = vpop.f32.mrf.mxu0
        %v2168 = vadd.f32 0.0, %v2167
        %2169 = vmatmul.bf16.gmra.mxu0 %v2083
        %v2170 = vpop.f32.mrf.mxu0
        %v2171 = vadd.f32 0.0, %v2170
        %v2172 = vpop.f32.mrf.mxu0
        %v2173 = vadd.f32 0.0, %v2172
        %2174 = vmatmul.bf16.gmra.mxu0 %v2086
        %v2175 = vpop.f32.mrf.mxu0
        %v2176 = vadd.f32 0.0, %v2175
        %v2177 = vpop.f32.mrf.mxu0
        %v2178 = vadd.f32 0.0, %v2177
        %2179 = vmatmul.bf16.gmra.mxu0 %v2089
        %v2180 = vpop.f32.mrf.mxu0
        %v2181 = vadd.f32 0.0, %v2180
        %v2182 = vpop.f32.mrf.mxu0
        %v2183 = vadd.f32 0.0, %v2182
        %2184 = vmatmul.bf16.gmra.mxu0 %v2092
        %v2185 = vpop.f32.mrf.mxu0
        %v2186 = vadd.f32 0.0, %v2185
        %v2187 = vpop.f32.mrf.mxu0
        %v2188 = vadd.f32 0.0, %v2187
        %2189 = vmatmul.bf16.gmra.mxu0 %v2095
        %v2190 = vpop.f32.mrf.mxu0
        %v2191 = vadd.f32 0.0, %v2190
        %v2192 = vpop.f32.mrf.mxu0
        %v2193 = vadd.f32 0.0, %v2192
        %2194 = vmatmul.bf16.gmra.mxu0 %v2098
        %v2195 = vpop.f32.mrf.mxu0
        %v2196 = vadd.f32 0.0, %v2195
        %v2197 = vpop.f32.mrf.mxu0
        %v2198 = vadd.f32 0.0, %v2197
        %2199 = vmatmul.bf16.gmra.mxu0 %v2101
        %v2200 = vpop.f32.mrf.mxu0
        %v2201 = vadd.f32 0.0, %v2200
        %v2202 = vpop.f32.mrf.mxu0
        %v2203 = vadd.f32 0.0, %v2202
        %2204 = vdwg.mxu0
        %v2205 = vadd.f32 %v1957, %v2116
        %v2206 = vadd.f32 %v1958, %v2118
        %v2207 = vadd.f32 %v1959, %v2121
        %v2208 = vadd.f32 %v1960, %v2123
        %v2209 = vadd.f32 %v1961, %v2126
        %v2210 = vadd.f32 %v1962, %v2128
        %v2211 = vadd.f32 %v1963, %v2131
        %v2212 = vadd.f32 %v1964, %v2133
        %v2213 = vadd.f32 %v1965, %v2136
        %v2214 = vadd.f32 %v1966, %v2138
        %v2215 = vadd.f32 %v1967, %v2141
        %v2216 = vadd.f32 %v1968, %v2143
        %v2217 = vadd.f32 %v1969, %v2146
        %v2218 = vadd.f32 %v1970, %v2148
        %v2219 = vadd.f32 %v1971, %v2151
        %v2220 = vadd.f32 %v1972, %v2153
        %v2221 = vadd.f32 %v1973, %v2156
        %v2222 = vadd.f32 %v1974, %v2158
        %v2223 = vadd.f32 %v1975, %v2161
        %v2224 = vadd.f32 %v1976, %v2163
        %v2225 = vadd.f32 %v1977, %v2166
        %v2226 = vadd.f32 %v1978, %v2168
        %v2227 = vadd.f32 %v1979, %v2171
        %v2228 = vadd.f32 %v1980, %v2173
        %v2229 = vadd.f32 %v1981, %v2176
        %v2230 = vadd.f32 %v1982, %v2178
        %v2231 = vadd.f32 %v1983, %v2181
        %v2232 = vadd.f32 %v1984, %v2183
        %v2233 = vadd.f32 %v1985, %v2186
        %v2234 = vadd.f32 %v1986, %v2188
        %v2235 = vadd.f32 %v1987, %v2191
        %v2236 = vadd.f32 %v1988, %v2193
        %v2237 = vadd.f32 %v1989, %v2196
        %v2238 = vadd.f32 %v1990, %v2198
        %v2239 = vadd.f32 %v1991, %v2201
        %v2240 = vadd.f32 %v1992, %v2203
        %v2241 = vld [vmem:[%s573 + $0x25] sm:$0xff]
        %v2242 = vld [vmem:[%s573 + $0x2d] sm:$0xff]
        %v2243 = vld [vmem:[%s573 + $0x35] sm:$0xff]
        %v2244 = vld [vmem:[%s573 + $0x3d] sm:$0xff]
        %v2245 = vld [vmem:[%s573 + $0x45] sm:$0xff]
        %v2246 = vld [vmem:[%s573 + $0x4d] sm:$0xff]
        %v2247 = vld [vmem:[%s573 + $0x55] sm:$0xff]
        %v2248 = vld [vmem:[%s573 + $0x5d] sm:$0xff]
        %v2249 = vld [vmem:[%s573 + $0x65] sm:$0xff]
        %v2250 = vld [vmem:[%s573 + $0x6d] sm:$0xff]
        %v2251 = vld [vmem:[%s573 + $0x75] sm:$0xff]
        %v2252 = vld [vmem:[%s573 + $0x7d] sm:$0xff]
        %v2253 = vld [vmem:[%s573 + $0x85] sm:$0xff]
        %v2254 = vld [vmem:[%s573 + $0x8d] sm:$0xff]
        %v2255 = vld [vmem:[%s573 + $0x95] sm:$0xff]
        %v2256 = vld [vmem:[%s573 + $0x9d] sm:$0xff]
        %v2257 = vld [vmem:[%s573 + $0xa5] sm:$0xff]
        %v2258 = vld [vmem:[%s573 + $0xad] sm:$0xff]
        %v2259 = vld [vmem:[%s573 + $0xb5] sm:$0xff]
        %v2260 = vld [vmem:[%s573 + $0xbd] sm:$0xff]
        %v2261 = vld [vmem:[%s573 + $0xc5] sm:$0xff]
        %v2262 = vld [vmem:[%s573 + $0xcd] sm:$0xff]
        %v2263 = vld [vmem:[%s573 + $0xd5] sm:$0xff]
        %v2264 = vld [vmem:[%s573 + $0xdd] sm:$0xff]
        %v2265 = vld [vmem:[%s573 + $0xe5] sm:$0xff]
        %v2266 = vld [vmem:[%s573 + $0xed] sm:$0xff]
        %v2267 = vld [vmem:[%s573 + $0xf5] sm:$0xff]
        %v2268 = vld [vmem:[%s573 + $0xfd] sm:$0xff]
        %v2269 = vld [vmem:[%s573 + $0x105] sm:$0xff]
        %v2270 = vld [vmem:[%s573 + $0x10d] sm:$0xff]
        %v2271 = vld [vmem:[%s573 + $0x115] sm:$0xff]
        %v2272 = vld [vmem:[%s573 + $0x11d] sm:$0xff]
        %v2273 = vld [vmem:[%s573 + $0x125] sm:$0xff]
        %v2274 = vld [vmem:[%s573 + $0x12d] sm:$0xff]
        %v2275 = vld [vmem:[%s573 + $0x135] sm:$0xff]
        %v2276 = vld [vmem:[%s573 + $0x13d] sm:$0xff]
        %v2277 = vpack.c.bf16 %v2242, %v2241
        %v2278 = vpack.c.bf16 %v2244, %v2243
        %v2279 = vpack.c.bf16 %v2246, %v2245
        %v2280 = vpack.c.bf16 %v2248, %v2247
        %v2281 = vpack.c.bf16 %v2250, %v2249
        %v2282 = vpack.c.bf16 %v2252, %v2251
        %v2283 = vpack.c.bf16 %v2254, %v2253
        %v2284 = vpack.c.bf16 %v2256, %v2255
        %v2285 = vpack.c.bf16 %v2258, %v2257
        %v2286 = vpack.c.bf16 %v2260, %v2259
        %v2287 = vpack.c.bf16 %v2262, %v2261
        %v2288 = vpack.c.bf16 %v2264, %v2263
        %v2289 = vpack.c.bf16 %v2266, %v2265
        %v2290 = vpack.c.bf16 %v2268, %v2267
        %v2291 = vpack.c.bf16 %v2270, %v2269
        %v2292 = vpack.c.bf16 %v2272, %v2271
        %v2293 = vpack.c.bf16 %v2274, %v2273
        %v2294 = vpack.c.bf16 %v2276, %v2275
        %s2295 = scalar_lea.vmem %s1, 14
        %v2296 = vld [vmem:[%s2295] sm:$0x3]
        %v2298 = vsel %vm687, %v2277, 0
        %v2301 = vsel %vm687, %v2278, 0
        %v2304 = vsel %vm687, %v2279, 0
        %v2307 = vsel %vm687, %v2280, 0
        %v2310 = vsel %vm687, %v2281, 0
        %v2313 = vsel %vm687, %v2282, 0
        %v2316 = vsel %vm687, %v2283, 0
        %v2319 = vsel %vm687, %v2284, 0
        %v2322 = vsel %vm687, %v2285, 0
        %v2325 = vsel %vm687, %v2286, 0
        %v2328 = vsel %vm687, %v2287, 0
        %v2331 = vsel %vm687, %v2288, 0
        %v2334 = vsel %vm687, %v2289, 0
        %v2337 = vsel %vm687, %v2290, 0
        %v2340 = vsel %vm687, %v2291, 0
        %v2343 = vsel %vm687, %v2292, 0
        %v2346 = vsel %vm687, %v2293, 0
        %v2349 = vsel %vm687, %v2294, 0
        %v2352 = vsel %vm742, %v2296, 0
        %2354 = vmatpush.bf16.msra.mxu0 0
        %2355 = vmatpush.bf16.msra.mxu0 0
        %2356 = vmatpush.bf16.msra.mxu0 0
        %2357 = vmatpush.bf16.msra.mxu0 0
        %2358 = vmatpush.bf16.msra.mxu0 0
        %2359 = vmatpush.bf16.msra.mxu0 0
        %2360 = vmatpush.bf16.msra.mxu0 0
        %2361 = vmatpush.bf16.msra.mxu0 %v2352
        %2362 = vmatmul.bf16.gmra.mxu0 %v2298
        %v2363 = vpop.f32.mrf.mxu0
        %v2364 = vadd.f32 0.0, %v2363
        %v2365 = vpop.f32.mrf.mxu0
        %v2366 = vadd.f32 0.0, %v2365
        %2367 = vmatmul.bf16.gmra.mxu0 %v2301
        %v2368 = vpop.f32.mrf.mxu0
        %v2369 = vadd.f32 0.0, %v2368
        %v2370 = vpop.f32.mrf.mxu0
        %v2371 = vadd.f32 0.0, %v2370
        %2372 = vmatmul.bf16.gmra.mxu0 %v2304
        %v2373 = vpop.f32.mrf.mxu0
        %v2374 = vadd.f32 0.0, %v2373
        %v2375 = vpop.f32.mrf.mxu0
        %v2376 = vadd.f32 0.0, %v2375
        %2377 = vmatmul.bf16.gmra.mxu0 %v2307
        %v2378 = vpop.f32.mrf.mxu0
        %v2379 = vadd.f32 0.0, %v2378
        %v2380 = vpop.f32.mrf.mxu0
        %v2381 = vadd.f32 0.0, %v2380
        %2382 = vmatmul.bf16.gmra.mxu0 %v2310
        %v2383 = vpop.f32.mrf.mxu0
        %v2384 = vadd.f32 0.0, %v2383
        %v2385 = vpop.f32.mrf.mxu0
        %v2386 = vadd.f32 0.0, %v2385
        %2387 = vmatmul.bf16.gmra.mxu0 %v2313
        %v2388 = vpop.f32.mrf.mxu0
        %v2389 = vadd.f32 0.0, %v2388
        %v2390 = vpop.f32.mrf.mxu0
        %v2391 = vadd.f32 0.0, %v2390
        %2392 = vmatmul.bf16.gmra.mxu0 %v2316
        %v2393 = vpop.f32.mrf.mxu0
        %v2394 = vadd.f32 0.0, %v2393
        %v2395 = vpop.f32.mrf.mxu0
        %v2396 = vadd.f32 0.0, %v2395
        %2397 = vmatmul.bf16.gmra.mxu0 %v2319
        %v2398 = vpop.f32.mrf.mxu0
        %v2399 = vadd.f32 0.0, %v2398
        %v2400 = vpop.f32.mrf.mxu0
        %v2401 = vadd.f32 0.0, %v2400
        %2402 = vmatmul.bf16.gmra.mxu0 %v2322
        %v2403 = vpop.f32.mrf.mxu0
        %v2404 = vadd.f32 0.0, %v2403
        %v2405 = vpop.f32.mrf.mxu0
        %v2406 = vadd.f32 0.0, %v2405
        %2407 = vmatmul.bf16.gmra.mxu0 %v2325
        %v2408 = vpop.f32.mrf.mxu0
        %v2409 = vadd.f32 0.0, %v2408
        %v2410 = vpop.f32.mrf.mxu0
        %v2411 = vadd.f32 0.0, %v2410
        %2412 = vmatmul.bf16.gmra.mxu0 %v2328
        %v2413 = vpop.f32.mrf.mxu0
        %v2414 = vadd.f32 0.0, %v2413
        %v2415 = vpop.f32.mrf.mxu0
        %v2416 = vadd.f32 0.0, %v2415
        %2417 = vmatmul.bf16.gmra.mxu0 %v2331
        %v2418 = vpop.f32.mrf.mxu0
        %v2419 = vadd.f32 0.0, %v2418
        %v2420 = vpop.f32.mrf.mxu0
        %v2421 = vadd.f32 0.0, %v2420
        %2422 = vmatmul.bf16.gmra.mxu0 %v2334
        %v2423 = vpop.f32.mrf.mxu0
        %v2424 = vadd.f32 0.0, %v2423
        %v2425 = vpop.f32.mrf.mxu0
        %v2426 = vadd.f32 0.0, %v2425
        %2427 = vmatmul.bf16.gmra.mxu0 %v2337
        %v2428 = vpop.f32.mrf.mxu0
        %v2429 = vadd.f32 0.0, %v2428
        %v2430 = vpop.f32.mrf.mxu0
        %v2431 = vadd.f32 0.0, %v2430
        %2432 = vmatmul.bf16.gmra.mxu0 %v2340
        %v2433 = vpop.f32.mrf.mxu0
        %v2434 = vadd.f32 0.0, %v2433
        %v2435 = vpop.f32.mrf.mxu0
        %v2436 = vadd.f32 0.0, %v2435
        %2437 = vmatmul.bf16.gmra.mxu0 %v2343
        %v2438 = vpop.f32.mrf.mxu0
        %v2439 = vadd.f32 0.0, %v2438
        %v2440 = vpop.f32.mrf.mxu0
        %v2441 = vadd.f32 0.0, %v2440
        %2442 = vmatmul.bf16.gmra.mxu0 %v2346
        %v2443 = vpop.f32.mrf.mxu0
        %v2444 = vadd.f32 0.0, %v2443
        %v2445 = vpop.f32.mrf.mxu0
        %v2446 = vadd.f32 0.0, %v2445
        %2447 = vmatmul.bf16.gmra.mxu0 %v2349
        %v2448 = vpop.f32.mrf.mxu0
        %v2449 = vadd.f32 0.0, %v2448
        %v2450 = vpop.f32.mrf.mxu0
        %v2451 = vadd.f32 0.0, %v2450
        %2452 = vdwg.mxu0
        %v2453 = vadd.f32 %v2205, %v2364
        %v2454 = vadd.f32 %v2206, %v2366
        %v2455 = vadd.f32 %v2207, %v2369
        %v2456 = vadd.f32 %v2208, %v2371
        %v2457 = vadd.f32 %v2209, %v2374
        %v2458 = vadd.f32 %v2210, %v2376
        %v2459 = vadd.f32 %v2211, %v2379
        %v2460 = vadd.f32 %v2212, %v2381
        %v2461 = vadd.f32 %v2213, %v2384
        %v2462 = vadd.f32 %v2214, %v2386
        %v2463 = vadd.f32 %v2215, %v2389
        %v2464 = vadd.f32 %v2216, %v2391
        %v2465 = vadd.f32 %v2217, %v2394
        %v2466 = vadd.f32 %v2218, %v2396
        %v2467 = vadd.f32 %v2219, %v2399
        %v2468 = vadd.f32 %v2220, %v2401
        %v2469 = vadd.f32 %v2221, %v2404
        %v2470 = vadd.f32 %v2222, %v2406
        %v2471 = vadd.f32 %v2223, %v2409
        %v2472 = vadd.f32 %v2224, %v2411
        %v2473 = vadd.f32 %v2225, %v2414
        %v2474 = vadd.f32 %v2226, %v2416
        %v2475 = vadd.f32 %v2227, %v2419
        %v2476 = vadd.f32 %v2228, %v2421
        %v2477 = vadd.f32 %v2229, %v2424
        %v2478 = vadd.f32 %v2230, %v2426
        %v2479 = vadd.f32 %v2231, %v2429
        %v2480 = vadd.f32 %v2232, %v2431
        %v2481 = vadd.f32 %v2233, %v2434
        %v2482 = vadd.f32 %v2234, %v2436
        %v2483 = vadd.f32 %v2235, %v2439
        %v2484 = vadd.f32 %v2236, %v2441
        %v2485 = vadd.f32 %v2237, %v2444
        %v2486 = vadd.f32 %v2238, %v2446
        %v2487 = vadd.f32 %v2239, %v2449
        %v2488 = vadd.f32 %v2240, %v2451
        %v2489 = vld [vmem:[%s573 + $0x26] sm:$0xff]
        %v2490 = vld [vmem:[%s573 + $0x2e] sm:$0xff]
        %v2491 = vld [vmem:[%s573 + $0x36] sm:$0xff]
        %v2492 = vld [vmem:[%s573 + $0x3e] sm:$0xff]
        %v2493 = vld [vmem:[%s573 + $0x46] sm:$0xff]
        %v2494 = vld [vmem:[%s573 + $0x4e] sm:$0xff]
        %v2495 = vld [vmem:[%s573 + $0x56] sm:$0xff]
        %v2496 = vld [vmem:[%s573 + $0x5e] sm:$0xff]
        %v2497 = vld [vmem:[%s573 + $0x66] sm:$0xff]
        %v2498 = vld [vmem:[%s573 + $0x6e] sm:$0xff]
        %v2499 = vld [vmem:[%s573 + $0x76] sm:$0xff]
        %v2500 = vld [vmem:[%s573 + $0x7e] sm:$0xff]
        %v2501 = vld [vmem:[%s573 + $0x86] sm:$0xff]
        %v2502 = vld [vmem:[%s573 + $0x8e] sm:$0xff]
        %v2503 = vld [vmem:[%s573 + $0x96] sm:$0xff]
        %v2504 = vld [vmem:[%s573 + $0x9e] sm:$0xff]
        %v2505 = vld [vmem:[%s573 + $0xa6] sm:$0xff]
        %v2506 = vld [vmem:[%s573 + $0xae] sm:$0xff]
        %v2507 = vld [vmem:[%s573 + $0xb6] sm:$0xff]
        %v2508 = vld [vmem:[%s573 + $0xbe] sm:$0xff]
        %v2509 = vld [vmem:[%s573 + $0xc6] sm:$0xff]
        %v2510 = vld [vmem:[%s573 + $0xce] sm:$0xff]
        %v2511 = vld [vmem:[%s573 + $0xd6] sm:$0xff]
        %v2512 = vld [vmem:[%s573 + $0xde] sm:$0xff]
        %v2513 = vld [vmem:[%s573 + $0xe6] sm:$0xff]
        %v2514 = vld [vmem:[%s573 + $0xee] sm:$0xff]
        %v2515 = vld [vmem:[%s573 + $0xf6] sm:$0xff]
        %v2516 = vld [vmem:[%s573 + $0xfe] sm:$0xff]
        %v2517 = vld [vmem:[%s573 + $0x106] sm:$0xff]
        %v2518 = vld [vmem:[%s573 + $0x10e] sm:$0xff]
        %v2519 = vld [vmem:[%s573 + $0x116] sm:$0xff]
        %v2520 = vld [vmem:[%s573 + $0x11e] sm:$0xff]
        %v2521 = vld [vmem:[%s573 + $0x126] sm:$0xff]
        %v2522 = vld [vmem:[%s573 + $0x12e] sm:$0xff]
        %v2523 = vld [vmem:[%s573 + $0x136] sm:$0xff]
        %v2524 = vld [vmem:[%s573 + $0x13e] sm:$0xff]
        %v2525 = vpack.c.bf16 %v2490, %v2489
        %v2526 = vpack.c.bf16 %v2492, %v2491
        %v2527 = vpack.c.bf16 %v2494, %v2493
        %v2528 = vpack.c.bf16 %v2496, %v2495
        %v2529 = vpack.c.bf16 %v2498, %v2497
        %v2530 = vpack.c.bf16 %v2500, %v2499
        %v2531 = vpack.c.bf16 %v2502, %v2501
        %v2532 = vpack.c.bf16 %v2504, %v2503
        %v2533 = vpack.c.bf16 %v2506, %v2505
        %v2534 = vpack.c.bf16 %v2508, %v2507
        %v2535 = vpack.c.bf16 %v2510, %v2509
        %v2536 = vpack.c.bf16 %v2512, %v2511
        %v2537 = vpack.c.bf16 %v2514, %v2513
        %v2538 = vpack.c.bf16 %v2516, %v2515
        %v2539 = vpack.c.bf16 %v2518, %v2517
        %v2540 = vpack.c.bf16 %v2520, %v2519
        %v2541 = vpack.c.bf16 %v2522, %v2521
        %v2542 = vpack.c.bf16 %v2524, %v2523
        %s2543 = scalar_lea.vmem %s1, 16
        %v2544 = vld [vmem:[%s2543] sm:$0x3]
        %v2546 = vsel %vm687, %v2525, 0
        %v2549 = vsel %vm687, %v2526, 0
        %v2552 = vsel %vm687, %v2527, 0
        %v2555 = vsel %vm687, %v2528, 0
        %v2558 = vsel %vm687, %v2529, 0
        %v2561 = vsel %vm687, %v2530, 0
        %v2564 = vsel %vm687, %v2531, 0
        %v2567 = vsel %vm687, %v2532, 0
        %v2570 = vsel %vm687, %v2533, 0
        %v2573 = vsel %vm687, %v2534, 0
        %v2576 = vsel %vm687, %v2535, 0
        %v2579 = vsel %vm687, %v2536, 0
        %v2582 = vsel %vm687, %v2537, 0
        %v2585 = vsel %vm687, %v2538, 0
        %v2588 = vsel %vm687, %v2539, 0
        %v2591 = vsel %vm687, %v2540, 0
        %v2594 = vsel %vm687, %v2541, 0
        %v2597 = vsel %vm687, %v2542, 0
        %v2600 = vsel %vm742, %v2544, 0
        %2602 = vmatpush.bf16.msra.mxu0 0
        %2603 = vmatpush.bf16.msra.mxu0 0
        %2604 = vmatpush.bf16.msra.mxu0 0
        %2605 = vmatpush.bf16.msra.mxu0 0
        %2606 = vmatpush.bf16.msra.mxu0 0
        %2607 = vmatpush.bf16.msra.mxu0 0
        %2608 = vmatpush.bf16.msra.mxu0 0
        %2609 = vmatpush.bf16.msra.mxu0 %v2600
        %2610 = vmatmul.bf16.gmra.mxu0 %v2546
        %v2611 = vpop.f32.mrf.mxu0
        %v2612 = vadd.f32 0.0, %v2611
        %v2613 = vpop.f32.mrf.mxu0
        %v2614 = vadd.f32 0.0, %v2613
        %2615 = vmatmul.bf16.gmra.mxu0 %v2549
        %v2616 = vpop.f32.mrf.mxu0
        %v2617 = vadd.f32 0.0, %v2616
        %v2618 = vpop.f32.mrf.mxu0
        %v2619 = vadd.f32 0.0, %v2618
        %2620 = vmatmul.bf16.gmra.mxu0 %v2552
        %v2621 = vpop.f32.mrf.mxu0
        %v2622 = vadd.f32 0.0, %v2621
        %v2623 = vpop.f32.mrf.mxu0
        %v2624 = vadd.f32 0.0, %v2623
        %2625 = vmatmul.bf16.gmra.mxu0 %v2555
        %v2626 = vpop.f32.mrf.mxu0
        %v2627 = vadd.f32 0.0, %v2626
        %v2628 = vpop.f32.mrf.mxu0
        %v2629 = vadd.f32 0.0, %v2628
        %2630 = vmatmul.bf16.gmra.mxu0 %v2558
        %v2631 = vpop.f32.mrf.mxu0
        %v2632 = vadd.f32 0.0, %v2631
        %v2633 = vpop.f32.mrf.mxu0
        %v2634 = vadd.f32 0.0, %v2633
        %2635 = vmatmul.bf16.gmra.mxu0 %v2561
        %v2636 = vpop.f32.mrf.mxu0
        %v2637 = vadd.f32 0.0, %v2636
        %v2638 = vpop.f32.mrf.mxu0
        %v2639 = vadd.f32 0.0, %v2638
        %2640 = vmatmul.bf16.gmra.mxu0 %v2564
        %v2641 = vpop.f32.mrf.mxu0
        %v2642 = vadd.f32 0.0, %v2641
        %v2643 = vpop.f32.mrf.mxu0
        %v2644 = vadd.f32 0.0, %v2643
        %2645 = vmatmul.bf16.gmra.mxu0 %v2567
        %v2646 = vpop.f32.mrf.mxu0
        %v2647 = vadd.f32 0.0, %v2646
        %v2648 = vpop.f32.mrf.mxu0
        %v2649 = vadd.f32 0.0, %v2648
        %2650 = vmatmul.bf16.gmra.mxu0 %v2570
        %v2651 = vpop.f32.mrf.mxu0
        %v2652 = vadd.f32 0.0, %v2651
        %v2653 = vpop.f32.mrf.mxu0
        %v2654 = vadd.f32 0.0, %v2653
        %2655 = vmatmul.bf16.gmra.mxu0 %v2573
        %v2656 = vpop.f32.mrf.mxu0
        %v2657 = vadd.f32 0.0, %v2656
        %v2658 = vpop.f32.mrf.mxu0
        %v2659 = vadd.f32 0.0, %v2658
        %2660 = vmatmul.bf16.gmra.mxu0 %v2576
        %v2661 = vpop.f32.mrf.mxu0
        %v2662 = vadd.f32 0.0, %v2661
        %v2663 = vpop.f32.mrf.mxu0
        %v2664 = vadd.f32 0.0, %v2663
        %2665 = vmatmul.bf16.gmra.mxu0 %v2579
        %v2666 = vpop.f32.mrf.mxu0
        %v2667 = vadd.f32 0.0, %v2666
        %v2668 = vpop.f32.mrf.mxu0
        %v2669 = vadd.f32 0.0, %v2668
        %2670 = vmatmul.bf16.gmra.mxu0 %v2582
        %v2671 = vpop.f32.mrf.mxu0
        %v2672 = vadd.f32 0.0, %v2671
        %v2673 = vpop.f32.mrf.mxu0
        %v2674 = vadd.f32 0.0, %v2673
        %2675 = vmatmul.bf16.gmra.mxu0 %v2585
        %v2676 = vpop.f32.mrf.mxu0
        %v2677 = vadd.f32 0.0, %v2676
        %v2678 = vpop.f32.mrf.mxu0
        %v2679 = vadd.f32 0.0, %v2678
        %2680 = vmatmul.bf16.gmra.mxu0 %v2588
        %v2681 = vpop.f32.mrf.mxu0
        %v2682 = vadd.f32 0.0, %v2681
        %v2683 = vpop.f32.mrf.mxu0
        %v2684 = vadd.f32 0.0, %v2683
        %2685 = vmatmul.bf16.gmra.mxu0 %v2591
        %v2686 = vpop.f32.mrf.mxu0
        %v2687 = vadd.f32 0.0, %v2686
        %v2688 = vpop.f32.mrf.mxu0
        %v2689 = vadd.f32 0.0, %v2688
        %2690 = vmatmul.bf16.gmra.mxu0 %v2594
        %v2691 = vpop.f32.mrf.mxu0
        %v2692 = vadd.f32 0.0, %v2691
        %v2693 = vpop.f32.mrf.mxu0
        %v2694 = vadd.f32 0.0, %v2693
        %2695 = vmatmul.bf16.gmra.mxu0 %v2597
        %v2696 = vpop.f32.mrf.mxu0
        %v2697 = vadd.f32 0.0, %v2696
        %v2698 = vpop.f32.mrf.mxu0
        %v2699 = vadd.f32 0.0, %v2698
        %2700 = vdwg.mxu0
        %v2701 = vadd.f32 %v2453, %v2612
        %v2702 = vadd.f32 %v2454, %v2614
        %v2703 = vadd.f32 %v2455, %v2617
        %v2704 = vadd.f32 %v2456, %v2619
        %v2705 = vadd.f32 %v2457, %v2622
        %v2706 = vadd.f32 %v2458, %v2624
        %v2707 = vadd.f32 %v2459, %v2627
        %v2708 = vadd.f32 %v2460, %v2629
        %v2709 = vadd.f32 %v2461, %v2632
        %v2710 = vadd.f32 %v2462, %v2634
        %v2711 = vadd.f32 %v2463, %v2637
        %v2712 = vadd.f32 %v2464, %v2639
        %v2713 = vadd.f32 %v2465, %v2642
        %v2714 = vadd.f32 %v2466, %v2644
        %v2715 = vadd.f32 %v2467, %v2647
        %v2716 = vadd.f32 %v2468, %v2649
        %v2717 = vadd.f32 %v2469, %v2652
        %v2718 = vadd.f32 %v2470, %v2654
        %v2719 = vadd.f32 %v2471, %v2657
        %v2720 = vadd.f32 %v2472, %v2659
        %v2721 = vadd.f32 %v2473, %v2662
        %v2722 = vadd.f32 %v2474, %v2664
        %v2723 = vadd.f32 %v2475, %v2667
        %v2724 = vadd.f32 %v2476, %v2669
        %v2725 = vadd.f32 %v2477, %v2672
        %v2726 = vadd.f32 %v2478, %v2674
        %v2727 = vadd.f32 %v2479, %v2677
        %v2728 = vadd.f32 %v2480, %v2679
        %v2729 = vadd.f32 %v2481, %v2682
        %v2730 = vadd.f32 %v2482, %v2684
        %v2731 = vadd.f32 %v2483, %v2687
        %v2732 = vadd.f32 %v2484, %v2689
        %v2733 = vadd.f32 %v2485, %v2692
        %v2734 = vadd.f32 %v2486, %v2694
        %v2735 = vadd.f32 %v2487, %v2697
        %v2736 = vadd.f32 %v2488, %v2699
        %v2737 = vld [vmem:[%s2] sm:$0x1]
        %v2739 = vperm.slane %v2737, 0
        %v2741 = vmul.f32 %v2701, %v2739
        %v2742 = vmul.f32 %v2702, %v2739
        %v2743 = vmul.f32 %v2703, %v2739
        %v2744 = vmul.f32 %v2704, %v2739
        %v2745 = vmul.f32 %v2705, %v2739
        %v2746 = vmul.f32 %v2706, %v2739
        %v2747 = vmul.f32 %v2707, %v2739
        %v2748 = vmul.f32 %v2708, %v2739
        %v2749 = vmul.f32 %v2709, %v2739
        %v2750 = vmul.f32 %v2710, %v2739
        %v2751 = vmul.f32 %v2711, %v2739
        %v2752 = vmul.f32 %v2712, %v2739
        %v2753 = vmul.f32 %v2713, %v2739
        %v2754 = vmul.f32 %v2714, %v2739
        %v2755 = vmul.f32 %v2715, %v2739
        %v2756 = vmul.f32 %v2716, %v2739
        %v2757 = vmul.f32 %v2717, %v2739
        %v2758 = vmul.f32 %v2718, %v2739
        %v2759 = vmul.f32 %v2719, %v2739
        %v2760 = vmul.f32 %v2720, %v2739
        %v2761 = vmul.f32 %v2721, %v2739
        %v2762 = vmul.f32 %v2722, %v2739
        %v2763 = vmul.f32 %v2723, %v2739
        %v2764 = vmul.f32 %v2724, %v2739
        %v2765 = vmul.f32 %v2725, %v2739
        %v2766 = vmul.f32 %v2726, %v2739
        %v2767 = vmul.f32 %v2727, %v2739
        %v2768 = vmul.f32 %v2728, %v2739
        %v2769 = vmul.f32 %v2729, %v2739
        %v2770 = vmul.f32 %v2730, %v2739
        %v2771 = vmul.f32 %v2731, %v2739
        %v2772 = vmul.f32 %v2732, %v2739
        %v2773 = vmul.f32 %v2733, %v2739
        %v2774 = vmul.f32 %v2734, %v2739
        %v2775 = vmul.f32 %v2735, %v2739
        %v2776 = vmul.f32 %v2736, %v2739
        %v2777 = vld [vmem:[%s3] sm:$0x1]
        %v2779 = vperm.slane %v2777, 0
        %v2781 = vadd.f32 %v2741, %v2779
        %v2782 = vadd.f32 %v2742, %v2779
        %v2783 = vadd.f32 %v2743, %v2779
        %v2784 = vadd.f32 %v2744, %v2779
        %v2785 = vadd.f32 %v2745, %v2779
        %v2786 = vadd.f32 %v2746, %v2779
        %v2787 = vadd.f32 %v2747, %v2779
        %v2788 = vadd.f32 %v2748, %v2779
        %v2789 = vadd.f32 %v2749, %v2779
        %v2790 = vadd.f32 %v2750, %v2779
        %v2791 = vadd.f32 %v2751, %v2779
        %v2792 = vadd.f32 %v2752, %v2779
        %v2793 = vadd.f32 %v2753, %v2779
        %v2794 = vadd.f32 %v2754, %v2779
        %v2795 = vadd.f32 %v2755, %v2779
        %v2796 = vadd.f32 %v2756, %v2779
        %v2797 = vadd.f32 %v2757, %v2779
        %v2798 = vadd.f32 %v2758, %v2779
        %v2799 = vadd.f32 %v2759, %v2779
        %v2800 = vadd.f32 %v2760, %v2779
        %v2801 = vadd.f32 %v2761, %v2779
        %v2802 = vadd.f32 %v2762, %v2779
        %v2803 = vadd.f32 %v2763, %v2779
        %v2804 = vadd.f32 %v2764, %v2779
        %v2805 = vadd.f32 %v2765, %v2779
        %v2806 = vadd.f32 %v2766, %v2779
        %v2807 = vadd.f32 %v2767, %v2779
        %v2808 = vadd.f32 %v2768, %v2779
        %v2809 = vadd.f32 %v2769, %v2779
        %v2810 = vadd.f32 %v2770, %v2779
        %v2811 = vadd.f32 %v2771, %v2779
        %v2812 = vadd.f32 %v2772, %v2779
        %v2813 = vadd.f32 %v2773, %v2779
        %v2814 = vadd.f32 %v2774, %v2779
        %v2815 = vadd.f32 %v2775, %v2779
        %v2816 = vadd.f32 %v2776, %v2779
        %vm2817 = vcmp.ge.f32.partialorder %v2781, 0.0
        %vm2818 = vcmp.ge.f32.partialorder %v2782, 0.0
        %vm2819 = vcmp.ge.f32.partialorder %v2783, 0.0
        %vm2820 = vcmp.ge.f32.partialorder %v2784, 0.0
        %vm2821 = vcmp.ge.f32.partialorder %v2785, 0.0
        %vm2822 = vcmp.ge.f32.partialorder %v2786, 0.0
        %vm2823 = vcmp.ge.f32.partialorder %v2787, 0.0
        %vm2824 = vcmp.ge.f32.partialorder %v2788, 0.0
        %vm2825 = vcmp.ge.f32.partialorder %v2789, 0.0
        %vm2826 = vcmp.ge.f32.partialorder %v2790, 0.0
        %vm2827 = vcmp.ge.f32.partialorder %v2791, 0.0
        %vm2828 = vcmp.ge.f32.partialorder %v2792, 0.0
        %vm2829 = vcmp.ge.f32.partialorder %v2793, 0.0
        %vm2830 = vcmp.ge.f32.partialorder %v2794, 0.0
        %vm2831 = vcmp.ge.f32.partialorder %v2795, 0.0
        %vm2832 = vcmp.ge.f32.partialorder %v2796, 0.0
        %vm2833 = vcmp.ge.f32.partialorder %v2797, 0.0
        %vm2834 = vcmp.ge.f32.partialorder %v2798, 0.0
        %vm2835 = vcmp.ge.f32.partialorder %v2799, 0.0
        %vm2836 = vcmp.ge.f32.partialorder %v2800, 0.0
        %vm2837 = vcmp.ge.f32.partialorder %v2801, 0.0
        %vm2838 = vcmp.ge.f32.partialorder %v2802, 0.0
        %vm2839 = vcmp.ge.f32.partialorder %v2803, 0.0
        %vm2840 = vcmp.ge.f32.partialorder %v2804, 0.0
        %vm2841 = vcmp.ge.f32.partialorder %v2805, 0.0
        %vm2842 = vcmp.ge.f32.partialorder %v2806, 0.0
        %vm2843 = vcmp.ge.f32.partialorder %v2807, 0.0
        %vm2844 = vcmp.ge.f32.partialorder %v2808, 0.0
        %vm2845 = vcmp.ge.f32.partialorder %v2809, 0.0
        %vm2846 = vcmp.ge.f32.partialorder %v2810, 0.0
        %vm2847 = vcmp.ge.f32.partialorder %v2811, 0.0
        %vm2848 = vcmp.ge.f32.partialorder %v2812, 0.0
        %vm2849 = vcmp.ge.f32.partialorder %v2813, 0.0
        %vm2850 = vcmp.ge.f32.partialorder %v2814, 0.0
        %vm2851 = vcmp.ge.f32.partialorder %v2815, 0.0
        %vm2852 = vcmp.ge.f32.partialorder %v2816, 0.0
        %v2853 = vmul.f32 %v2781, 0.01
        %v2854 = vmul.f32 %v2782, 0.01
        %v2855 = vmul.f32 %v2783, 0.01
        %v2856 = vmul.f32 %v2784, 0.01
        %v2857 = vmul.f32 %v2785, 0.01
        %v2858 = vmul.f32 %v2786, 0.01
        %v2859 = vmul.f32 %v2787, 0.01
        %v2860 = vmul.f32 %v2788, 0.01
        %v2861 = vmul.f32 %v2789, 0.01
        %v2862 = vmul.f32 %v2790, 0.01
        %v2863 = vmul.f32 %v2791, 0.01
        %v2864 = vmul.f32 %v2792, 0.01
        %v2865 = vmul.f32 %v2793, 0.01
        %v2866 = vmul.f32 %v2794, 0.01
        %v2867 = vmul.f32 %v2795, 0.01
        %v2868 = vmul.f32 %v2796, 0.01
        %v2869 = vmul.f32 %v2797, 0.01
        %v2870 = vmul.f32 %v2798, 0.01
        %v2871 = vmul.f32 %v2799, 0.01
        %v2872 = vmul.f32 %v2800, 0.01
        %v2873 = vmul.f32 %v2801, 0.01
        %v2874 = vmul.f32 %v2802, 0.01
        %v2875 = vmul.f32 %v2803, 0.01
        %v2876 = vmul.f32 %v2804, 0.01
        %v2877 = vmul.f32 %v2805, 0.01
        %v2878 = vmul.f32 %v2806, 0.01
        %v2879 = vmul.f32 %v2807, 0.01
        %v2880 = vmul.f32 %v2808, 0.01
        %v2881 = vmul.f32 %v2809, 0.01
        %v2882 = vmul.f32 %v2810, 0.01
        %v2883 = vmul.f32 %v2811, 0.01
        %v2884 = vmul.f32 %v2812, 0.01
        %v2885 = vmul.f32 %v2813, 0.01
        %v2886 = vmul.f32 %v2814, 0.01
        %v2887 = vmul.f32 %v2815, 0.01
        %v2888 = vmul.f32 %v2816, 0.01
        %v2889 = vsel %vm2817, %v2781, %v2853
        %v2890 = vsel %vm2818, %v2782, %v2854
        %v2891 = vsel %vm2819, %v2783, %v2855
        %v2892 = vsel %vm2820, %v2784, %v2856
        %v2893 = vsel %vm2821, %v2785, %v2857
        %v2894 = vsel %vm2822, %v2786, %v2858
        %v2895 = vsel %vm2823, %v2787, %v2859
        %v2896 = vsel %vm2824, %v2788, %v2860
        %v2897 = vsel %vm2825, %v2789, %v2861
        %v2898 = vsel %vm2826, %v2790, %v2862
        %v2899 = vsel %vm2827, %v2791, %v2863
        %v2900 = vsel %vm2828, %v2792, %v2864
        %v2901 = vsel %vm2829, %v2793, %v2865
        %v2902 = vsel %vm2830, %v2794, %v2866
        %v2903 = vsel %vm2831, %v2795, %v2867
        %v2904 = vsel %vm2832, %v2796, %v2868
        %v2905 = vsel %vm2833, %v2797, %v2869
        %v2906 = vsel %vm2834, %v2798, %v2870
        %v2907 = vsel %vm2835, %v2799, %v2871
        %v2908 = vsel %vm2836, %v2800, %v2872
        %v2909 = vsel %vm2837, %v2801, %v2873
        %v2910 = vsel %vm2838, %v2802, %v2874
        %v2911 = vsel %vm2839, %v2803, %v2875
        %v2912 = vsel %vm2840, %v2804, %v2876
        %v2913 = vsel %vm2841, %v2805, %v2877
        %v2914 = vsel %vm2842, %v2806, %v2878
        %v2915 = vsel %vm2843, %v2807, %v2879
        %v2916 = vsel %vm2844, %v2808, %v2880
        %v2917 = vsel %vm2845, %v2809, %v2881
        %v2918 = vsel %vm2846, %v2810, %v2882
        %v2919 = vsel %vm2847, %v2811, %v2883
        %v2920 = vsel %vm2848, %v2812, %v2884
        %v2921 = vsel %vm2849, %v2813, %v2885
        %v2922 = vsel %vm2850, %v2814, %v2886
        %v2923 = vsel %vm2851, %v2815, %v2887
        %v2924 = vsel %vm2852, %v2816, %v2888
        %vm2925 = vcmask 64512
        %2926 = vst.msk [vmem:[#allocation2] sm:$0xff] %vm2925, %v2889
        %2927 = vst.msk [vmem:[#allocation2 + $0x8] sm:$0xff] %vm2925, %v2890
        %2928 = vst.msk [vmem:[#allocation2 + $0x10] sm:$0xff] %vm2925, %v2891
        %2929 = vst.msk [vmem:[#allocation2 + $0x18] sm:$0xff] %vm2925, %v2892
        %2930 = vst.msk [vmem:[#allocation2 + $0x20] sm:$0xff] %vm2925, %v2893
        %2931 = vst.msk [vmem:[#allocation2 + $0x28] sm:$0xff] %vm2925, %v2894
        %2932 = vst.msk [vmem:[#allocation2 + $0x30] sm:$0xff] %vm2925, %v2895
        %2933 = vst.msk [vmem:[#allocation2 + $0x38] sm:$0xff] %vm2925, %v2896
        %2934 = vst.msk [vmem:[#allocation2 + $0x40] sm:$0xff] %vm2925, %v2897
        %2935 = vst.msk [vmem:[#allocation2 + $0x48] sm:$0xff] %vm2925, %v2898
        %2936 = vst.msk [vmem:[#allocation2 + $0x50] sm:$0xff] %vm2925, %v2899
        %2937 = vst.msk [vmem:[#allocation2 + $0x58] sm:$0xff] %vm2925, %v2900
        %2938 = vst.msk [vmem:[#allocation2 + $0x60] sm:$0xff] %vm2925, %v2901
        %2939 = vst.msk [vmem:[#allocation2 + $0x68] sm:$0xff] %vm2925, %v2902
        %2940 = vst.msk [vmem:[#allocation2 + $0x70] sm:$0xff] %vm2925, %v2903
        %2941 = vst.msk [vmem:[#allocation2 + $0x78] sm:$0xff] %vm2925, %v2904
        %2942 = vst.msk [vmem:[#allocation2 + $0x80] sm:$0xff] %vm2925, %v2905
        %2943 = vst.msk [vmem:[#allocation2 + $0x88] sm:$0xff] %vm2925, %v2906
        %2944 = vst.msk [vmem:[#allocation2 + $0x90] sm:$0xff] %vm2925, %v2907
        %2945 = vst.msk [vmem:[#allocation2 + $0x98] sm:$0xff] %vm2925, %v2908
        %2946 = vst.msk [vmem:[#allocation2 + $0xa0] sm:$0xff] %vm2925, %v2909
        %2947 = vst.msk [vmem:[#allocation2 + $0xa8] sm:$0xff] %vm2925, %v2910
        %2948 = vst.msk [vmem:[#allocation2 + $0xb0] sm:$0xff] %vm2925, %v2911
        %2949 = vst.msk [vmem:[#allocation2 + $0xb8] sm:$0xff] %vm2925, %v2912
        %2950 = vst.msk [vmem:[#allocation2 + $0xc0] sm:$0xff] %vm2925, %v2913
        %2951 = vst.msk [vmem:[#allocation2 + $0xc8] sm:$0xff] %vm2925, %v2914
        %2952 = vst.msk [vmem:[#allocation2 + $0xd0] sm:$0xff] %vm2925, %v2915
        %2953 = vst.msk [vmem:[#allocation2 + $0xd8] sm:$0xff] %vm2925, %v2916
        %2954 = vst.msk [vmem:[#allocation2 + $0xe0] sm:$0xff] %vm2925, %v2917
        %2955 = vst.msk [vmem:[#allocation2 + $0xe8] sm:$0xff] %vm2925, %v2918
        %2956 = vst.msk [vmem:[#allocation2 + $0xf0] sm:$0xff] %vm2925, %v2919
        %2957 = vst.msk [vmem:[#allocation2 + $0xf8] sm:$0xff] %vm2925, %v2920
        %2958 = vst.msk [vmem:[#allocation2 + $0x100] sm:$0xff] %vm2925, %v2921
        %2959 = vst.msk [vmem:[#allocation2 + $0x108] sm:$0xff] %vm2925, %v2922
        %2960 = vst.msk [vmem:[#allocation2 + $0x110] sm:$0xff] %vm2925, %v2923
        %2961 = vst.msk [vmem:[#allocation2 + $0x118] sm:$0xff] %vm2925, %v2924
        %2962 = vst.msk [vmem:[#allocation4] sm:$0xff] %vm2925, 0.0
        %2963 = vst.msk [vmem:[#allocation4 + $0x8] sm:$0xff] %vm2925, 0.0
        %2964 = vst.msk [vmem:[#allocation4 + $0x10] sm:$0xff] %vm2925, 0.0
        %2965 = vst.msk [vmem:[#allocation4 + $0x18] sm:$0xff] %vm2925, 0.0
        %2966 = vst.msk [vmem:[#allocation4 + $0x20] sm:$0xff] %vm2925, 0.0
        %2967 = vst.msk [vmem:[#allocation4 + $0x28] sm:$0xff] %vm2925, 0.0
        %2968 = vst.msk [vmem:[#allocation4 + $0x30] sm:$0xff] %vm2925, 0.0
        %2969 = vst.msk [vmem:[#allocation4 + $0x38] sm:$0xff] %vm2925, 0.0
        %2970 = vst.msk [vmem:[#allocation4 + $0x40] sm:$0xff] %vm2925, 0.0
        %2971 = vst.msk [vmem:[#allocation4 + $0x48] sm:$0xff] %vm2925, 0.0
        %2972 = vst.msk [vmem:[#allocation4 + $0x50] sm:$0xff] %vm2925, 0.0
        %2973 = vst.msk [vmem:[#allocation4 + $0x58] sm:$0xff] %vm2925, 0.0
        %2974 = vst.msk [vmem:[#allocation4 + $0x60] sm:$0xff] %vm2925, 0.0
        %v2975 = vlaneseq
        %v2976 = vshrl.u32 %v2975, 7
        %v2977 = vlaneseq
        %v2978 = vand.u32 %v2977, 127
        %v2979 = vmul.u32 %v2976, 2
        %vm2980 = vcmp.eq.s32.totalorder %v2978, %v2979
        %v2981 = vsel %vm2980, 1, 0
        %v2982 = vcvt.s32.f32 %v2981
        %v2983 = vld [vmem:[#allocation2] sm:$0xff]
        %v2984 = vld [vmem:[#allocation2 + $0x8] sm:$0x7f]
        %v2985 = vld [vmem:[#allocation2 + $0x1] sm:$0xff]
        %v2986 = vld [vmem:[#allocation2 + $0x9] sm:$0x7f]
        %v2987 = vmax.f32 %v2983, %v2985
        %v2988 = vmax.f32 %v2984, %v2986
        %v2989 = vld [vmem:[#allocation2 + $0x12] sm:$0xff]
        %v2990 = vld [vmem:[#allocation2 + $0x1a] sm:$0x7f]
        %v2991 = vld [vmem:[#allocation2 + $0x13] sm:$0xff]
        %v2992 = vld [vmem:[#allocation2 + $0x1b] sm:$0x7f]
        %v2993 = vmax.f32 %v2989, %v2991
        %v2994 = vmax.f32 %v2990, %v2992
        %v2995 = vmax.f32 %v2987, %v2993
        %v2996 = vmax.f32 %v2988, %v2994
        %vm2997 = vcmask 121856
        %v2999 = vsel %vm2997, %v2982, 0
        %vm3001 = vcmask 1046528
        %v3003 = vsel %vm3001, %v2996, 0
        %3005 = vmatpush.msra.mxu0 0.0
        %3006 = vmatpush.msra.mxu0 0.0
        %3007 = vmatpush.msra.mxu0 0.0
        %3008 = vmatpush.msra.mxu0 0.0
        %3009 = vmatpush.msra.mxu0 0.0
        %3010 = vmatpush.msra.mxu0 0.0
        %3011 = vmatpush.msra.mxu0 0.0
        %3012 = vmatpush.msra.mxu0 0.0
        %3013 = vmatpush.msra.mxu0 0.0
        %3014 = vmatpush.msra.mxu0 0.0
        %3015 = vmatpush.msra.mxu0 0.0
        %3016 = vmatpush.msra.mxu0 0.0
        %3017 = vmatpush.msra.mxu0 0.0
        %3018 = vmatpush.msra.mxu0 0.0
        %3019 = vmatpush.msra.mxu0 %v3003
        %3020 = vmatpush.msra.mxu0 %v2995
        %3021 = vmatmul.f32.gmra.mxu0 %v2999
        %v3022 = vpop.f32.mrf.mxu0
        %v3023 = vadd.f32 0.0, %v3022
        %3024 = vdwg.mxu0
        %3025 = vst.msk [vmem:[#allocation4 + $0xb] sm:$0xff] %vm2925, %v3023
        %v3026 = vld [vmem:[#allocation2 + $0x24] sm:$0xff]
        %v3027 = vld [vmem:[#allocation2 + $0x2c] sm:$0x7f]
        %v3028 = vld [vmem:[#allocation2 + $0x25] sm:$0xff]
        %v3029 = vld [vmem:[#allocation2 + $0x2d] sm:$0x7f]
        %v3030 = vmax.f32 %v3026, %v3028
        %v3031 = vmax.f32 %v3027, %v3029
        %v3032 = vld [vmem:[#allocation2 + $0x36] sm:$0xff]
        %v3033 = vld [vmem:[#allocation2 + $0x3e] sm:$0x7f]
        %v3034 = vld [vmem:[#allocation2 + $0x37] sm:$0xff]
        %v3035 = vld [vmem:[#allocation2 + $0x3f] sm:$0x7f]
        %v3036 = vmax.f32 %v3032, %v3034
        %v3037 = vmax.f32 %v3033, %v3035
        %v3038 = vmax.f32 %v3030, %v3036
        %v3039 = vmax.f32 %v3031, %v3037
        %v3041 = vsel %vm3001, %v3039, 0
        %3043 = vmatpush.msra.mxu0 0.0
        %3044 = vmatpush.msra.mxu0 0.0
        %3045 = vmatpush.msra.mxu0 0.0
        %3046 = vmatpush.msra.mxu0 0.0
        %3047 = vmatpush.msra.mxu0 0.0
        %3048 = vmatpush.msra.mxu0 0.0
        %3049 = vmatpush.msra.mxu0 0.0
        %3050 = vmatpush.msra.mxu0 0.0
        %3051 = vmatpush.msra.mxu0 0.0
        %3052 = vmatpush.msra.mxu0 0.0
        %3053 = vmatpush.msra.mxu0 0.0
        %3054 = vmatpush.msra.mxu0 0.0
        %3055 = vmatpush.msra.mxu0 0.0
        %3056 = vmatpush.msra.mxu0 0.0
        %3057 = vmatpush.msra.mxu0 %v3041
        %3058 = vmatpush.msra.mxu0 %v3038
        %3059 = vmatmul.f32.gmra.mxu0 %v2999
        %v3060 = vpop.f32.mrf.mxu0
        %v3061 = vadd.f32 0.0, %v3060
        %3062 = vdwg.mxu0
        %3063 = vst.msk [vmem:[#allocation4 + $0x15] sm:$0xff] %vm2925, %v3061
        %v3064 = vld [vmem:[#allocation2 + $0x48] sm:$0xff]
        %v3065 = vld [vmem:[#allocation2 + $0x50] sm:$0x7f]
        %v3066 = vld [vmem:[#allocation2 + $0x49] sm:$0xff]
        %v3067 = vld [vmem:[#allocation2 + $0x51] sm:$0x7f]
        %v3068 = vmax.f32 %v3064, %v3066
        %v3069 = vmax.f32 %v3065, %v3067
        %v3070 = vld [vmem:[#allocation2 + $0x5a] sm:$0xff]
        %v3071 = vld [vmem:[#allocation2 + $0x62] sm:$0x7f]
        %v3072 = vld [vmem:[#allocation2 + $0x5b] sm:$0xff]
        %v3073 = vld [vmem:[#allocation2 + $0x63] sm:$0x7f]
        %v3074 = vmax.f32 %v3070, %v3072
        %v3075 = vmax.f32 %v3071, %v3073
        %v3076 = vmax.f32 %v3068, %v3074
        %v3077 = vmax.f32 %v3069, %v3075
        %v3079 = vsel %vm3001, %v3077, 0
        %3081 = vmatpush.msra.mxu0 0.0
        %3082 = vmatpush.msra.mxu0 0.0
        %3083 = vmatpush.msra.mxu0 0.0
        %3084 = vmatpush.msra.mxu0 0.0
        %3085 = vmatpush.msra.mxu0 0.0
        %3086 = vmatpush.msra.mxu0 0.0
        %3087 = vmatpush.msra.mxu0 0.0
        %3088 = vmatpush.msra.mxu0 0.0
        %3089 = vmatpush.msra.mxu0 0.0
        %3090 = vmatpush.msra.mxu0 0.0
        %3091 = vmatpush.msra.mxu0 0.0
        %3092 = vmatpush.msra.mxu0 0.0
        %3093 = vmatpush.msra.mxu0 0.0
        %3094 = vmatpush.msra.mxu0 0.0
        %3095 = vmatpush.msra.mxu0 %v3079
        %3096 = vmatpush.msra.mxu0 %v3076
        %3097 = vmatmul.f32.gmra.mxu0 %v2999
        %v3098 = vpop.f32.mrf.mxu0
        %v3099 = vadd.f32 0.0, %v3098
        %3100 = vdwg.mxu0
        %3101 = vst.msk [vmem:[#allocation4 + $0x1f] sm:$0xff] %vm2925, %v3099
        %v3102 = vld [vmem:[#allocation2 + $0x6c] sm:$0xff]
        %v3103 = vld [vmem:[#allocation2 + $0x74] sm:$0x7f]
        %v3104 = vld [vmem:[#allocation2 + $0x6d] sm:$0xff]
        %v3105 = vld [vmem:[#allocation2 + $0x75] sm:$0x7f]
        %v3106 = vmax.f32 %v3102, %v3104
        %v3107 = vmax.f32 %v3103, %v3105
        %v3108 = vld [vmem:[#allocation2 + $0x7e] sm:$0xff]
        %v3109 = vld [vmem:[#allocation2 + $0x86] sm:$0x7f]
        %v3110 = vld [vmem:[#allocation2 + $0x7f] sm:$0xff]
        %v3111 = vld [vmem:[#allocation2 + $0x87] sm:$0x7f]
        %v3112 = vmax.f32 %v3108, %v3110
        %v3113 = vmax.f32 %v3109, %v3111
        %v3114 = vmax.f32 %v3106, %v3112
        %v3115 = vmax.f32 %v3107, %v3113
        %v3117 = vsel %vm3001, %v3115, 0
        %3119 = vmatpush.msra.mxu0 0.0
        %3120 = vmatpush.msra.mxu0 0.0
        %3121 = vmatpush.msra.mxu0 0.0
        %3122 = vmatpush.msra.mxu0 0.0
        %3123 = vmatpush.msra.mxu0 0.0
        %3124 = vmatpush.msra.mxu0 0.0
        %3125 = vmatpush.msra.mxu0 0.0
        %3126 = vmatpush.msra.mxu0 0.0
        %3127 = vmatpush.msra.mxu0 0.0
        %3128 = vmatpush.msra.mxu0 0.0
        %3129 = vmatpush.msra.mxu0 0.0
        %3130 = vmatpush.msra.mxu0 0.0
        %3131 = vmatpush.msra.mxu0 0.0
        %3132 = vmatpush.msra.mxu0 0.0
        %3133 = vmatpush.msra.mxu0 %v3117
        %3134 = vmatpush.msra.mxu0 %v3114
        %3135 = vmatmul.f32.gmra.mxu0 %v2999
        %v3136 = vpop.f32.mrf.mxu0
        %v3137 = vadd.f32 0.0, %v3136
        %3138 = vdwg.mxu0
        %3139 = vst.msk [vmem:[#allocation4 + $0x29] sm:$0xff] %vm2925, %v3137
        %v3140 = vld [vmem:[#allocation2 + $0x90] sm:$0xff]
        %v3141 = vld [vmem:[#allocation2 + $0x98] sm:$0x7f]
        %v3142 = vld [vmem:[#allocation2 + $0x91] sm:$0xff]
        %v3143 = vld [vmem:[#allocation2 + $0x99] sm:$0x7f]
        %v3144 = vmax.f32 %v3140, %v3142
        %v3145 = vmax.f32 %v3141, %v3143
        %v3146 = vld [vmem:[#allocation2 + $0xa2] sm:$0xff]
        %v3147 = vld [vmem:[#allocation2 + $0xaa] sm:$0x7f]
        %v3148 = vld [vmem:[#allocation2 + $0xa3] sm:$0xff]
        %v3149 = vld [vmem:[#allocation2 + $0xab] sm:$0x7f]
        %v3150 = vmax.f32 %v3146, %v3148
        %v3151 = vmax.f32 %v3147, %v3149
        %v3152 = vmax.f32 %v3144, %v3150
        %v3153 = vmax.f32 %v3145, %v3151
        %v3155 = vsel %vm3001, %v3153, 0
        %3157 = vmatpush.msra.mxu0 0.0
        %3158 = vmatpush.msra.mxu0 0.0
        %3159 = vmatpush.msra.mxu0 0.0
        %3160 = vmatpush.msra.mxu0 0.0
        %3161 = vmatpush.msra.mxu0 0.0
        %3162 = vmatpush.msra.mxu0 0.0
        %3163 = vmatpush.msra.mxu0 0.0
        %3164 = vmatpush.msra.mxu0 0.0
        %3165 = vmatpush.msra.mxu0 0.0
        %3166 = vmatpush.msra.mxu0 0.0
        %3167 = vmatpush.msra.mxu0 0.0
        %3168 = vmatpush.msra.mxu0 0.0
        %3169 = vmatpush.msra.mxu0 0.0
        %3170 = vmatpush.msra.mxu0 0.0
        %3171 = vmatpush.msra.mxu0 %v3155
        %3172 = vmatpush.msra.mxu0 %v3152
        %3173 = vmatmul.f32.gmra.mxu0 %v2999
        %v3174 = vpop.f32.mrf.mxu0
        %v3175 = vadd.f32 0.0, %v3174
        %3176 = vdwg.mxu0
        %3177 = vst.msk [vmem:[#allocation4 + $0x33] sm:$0xff] %vm2925, %v3175
        %v3178 = vld [vmem:[#allocation2 + $0xb4] sm:$0xff]
        %v3179 = vld [vmem:[#allocation2 + $0xbc] sm:$0x7f]
        %v3180 = vld [vmem:[#allocation2 + $0xb5] sm:$0xff]
        %v3181 = vld [vmem:[#allocation2 + $0xbd] sm:$0x7f]
        %v3182 = vmax.f32 %v3178, %v3180
        %v3183 = vmax.f32 %v3179, %v3181
        %v3184 = vld [vmem:[#allocation2 + $0xc6] sm:$0xff]
        %v3185 = vld [vmem:[#allocation2 + $0xce] sm:$0x7f]
        %v3186 = vld [vmem:[#allocation2 + $0xc7] sm:$0xff]
        %v3187 = vld [vmem:[#allocation2 + $0xcf] sm:$0x7f]
        %v3188 = vmax.f32 %v3184, %v3186
        %v3189 = vmax.f32 %v3185, %v3187
        %v3190 = vmax.f32 %v3182, %v3188
        %v3191 = vmax.f32 %v3183, %v3189
        %v3193 = vsel %vm3001, %v3191, 0
        %3195 = vmatpush.msra.mxu0 0.0
        %3196 = vmatpush.msra.mxu0 0.0
        %3197 = vmatpush.msra.mxu0 0.0
        %3198 = vmatpush.msra.mxu0 0.0
        %3199 = vmatpush.msra.mxu0 0.0
        %3200 = vmatpush.msra.mxu0 0.0
        %3201 = vmatpush.msra.mxu0 0.0
        %3202 = vmatpush.msra.mxu0 0.0
        %3203 = vmatpush.msra.mxu0 0.0
        %3204 = vmatpush.msra.mxu0 0.0
        %3205 = vmatpush.msra.mxu0 0.0
        %3206 = vmatpush.msra.mxu0 0.0
        %3207 = vmatpush.msra.mxu0 0.0
        %3208 = vmatpush.msra.mxu0 0.0
        %3209 = vmatpush.msra.mxu0 %v3193
        %3210 = vmatpush.msra.mxu0 %v3190
        %3211 = vmatmul.f32.gmra.mxu0 %v2999
        %v3212 = vpop.f32.mrf.mxu0
        %v3213 = vadd.f32 0.0, %v3212
        %3214 = vdwg.mxu0
        %3215 = vst.msk [vmem:[#allocation4 + $0x3d] sm:$0xff] %vm2925, %v3213
        %v3216 = vld [vmem:[#allocation2 + $0xd8] sm:$0xff]
        %v3217 = vld [vmem:[#allocation2 + $0xe0] sm:$0x7f]
        %v3218 = vld [vmem:[#allocation2 + $0xd9] sm:$0xff]
        %v3219 = vld [vmem:[#allocation2 + $0xe1] sm:$0x7f]
        %v3220 = vmax.f32 %v3216, %v3218
        %v3221 = vmax.f32 %v3217, %v3219
        %v3222 = vld [vmem:[#allocation2 + $0xea] sm:$0xff]
        %v3223 = vld [vmem:[#allocation2 + $0xf2] sm:$0x7f]
        %v3224 = vld [vmem:[#allocation2 + $0xeb] sm:$0xff]
        %v3225 = vld [vmem:[#allocation2 + $0xf3] sm:$0x7f]
        %v3226 = vmax.f32 %v3222, %v3224
        %v3227 = vmax.f32 %v3223, %v3225
        %v3228 = vmax.f32 %v3220, %v3226
        %v3229 = vmax.f32 %v3221, %v3227
        %v3231 = vsel %vm3001, %v3229, 0
        %3233 = vmatpush.msra.mxu0 0.0
        %3234 = vmatpush.msra.mxu0 0.0
        %3235 = vmatpush.msra.mxu0 0.0
        %3236 = vmatpush.msra.mxu0 0.0
        %3237 = vmatpush.msra.mxu0 0.0
        %3238 = vmatpush.msra.mxu0 0.0
        %3239 = vmatpush.msra.mxu0 0.0
        %3240 = vmatpush.msra.mxu0 0.0
        %3241 = vmatpush.msra.mxu0 0.0
        %3242 = vmatpush.msra.mxu0 0.0
        %3243 = vmatpush.msra.mxu0 0.0
        %3244 = vmatpush.msra.mxu0 0.0
        %3245 = vmatpush.msra.mxu0 0.0
        %3246 = vmatpush.msra.mxu0 0.0
        %3247 = vmatpush.msra.mxu0 %v3231
        %3248 = vmatpush.msra.mxu0 %v3228
        %3249 = vmatmul.f32.gmra.mxu0 %v2999
        %v3250 = vpop.f32.mrf.mxu0
        %v3251 = vadd.f32 0.0, %v3250
        %3252 = vdwg.mxu0
        %3253 = vst.msk [vmem:[#allocation4 + $0x47] sm:$0xff] %vm2925, %v3251
        %v3254 = vld [vmem:[#allocation2 + $0xfc] sm:$0xff]
        %v3255 = vld [vmem:[#allocation2 + $0x104] sm:$0x7f]
        %v3256 = vld [vmem:[#allocation2 + $0xfd] sm:$0xff]
        %v3257 = vld [vmem:[#allocation2 + $0x105] sm:$0x7f]
        %v3258 = vmax.f32 %v3254, %v3256
        %v3259 = vmax.f32 %v3255, %v3257
        %v3260 = vld [vmem:[#allocation2 + $0x10e] sm:$0xff]
        %v3261 = vld [vmem:[#allocation2 + $0x116] sm:$0x7f]
        %v3262 = vld [vmem:[#allocation2 + $0x10f] sm:$0xff]
        %v3263 = vld [vmem:[#allocation2 + $0x117] sm:$0x7f]
        %v3264 = vmax.f32 %v3260, %v3262
        %v3265 = vmax.f32 %v3261, %v3263
        %v3266 = vmax.f32 %v3258, %v3264
        %v3267 = vmax.f32 %v3259, %v3265
        %v3269 = vsel %vm3001, %v3267, 0
        %3271 = vmatpush.msra.mxu0 0.0
        %3272 = vmatpush.msra.mxu0 0.0
        %3273 = vmatpush.msra.mxu0 0.0
        %3274 = vmatpush.msra.mxu0 0.0
        %3275 = vmatpush.msra.mxu0 0.0
        %3276 = vmatpush.msra.mxu0 0.0
        %3277 = vmatpush.msra.mxu0 0.0
        %3278 = vmatpush.msra.mxu0 0.0
        %3279 = vmatpush.msra.mxu0 0.0
        %3280 = vmatpush.msra.mxu0 0.0
        %3281 = vmatpush.msra.mxu0 0.0
        %3282 = vmatpush.msra.mxu0 0.0
        %3283 = vmatpush.msra.mxu0 0.0
        %3284 = vmatpush.msra.mxu0 0.0
        %3285 = vmatpush.msra.mxu0 %v3269
        %3286 = vmatpush.msra.mxu0 %v3266
        %3287 = vmatmul.f32.gmra.mxu0 %v2999
        %v3288 = vpop.f32.mrf.mxu0
        %v3289 = vadd.f32 0.0, %v3288
        %3290 = vdwg.mxu0
        %3291 = vst.msk [vmem:[#allocation4 + $0x51] sm:$0xff] %vm2925, %v3289
        %v3292 = vld [vmem:[#allocation4] sm:$0xff]
        %v3293 = vld [vmem:[#allocation4 + $0x8] sm:$0xff]
        %v3294 = vld [vmem:[#allocation4 + $0x10] sm:$0xff]
        %v3295 = vld [vmem:[#allocation4 + $0x18] sm:$0xff]
        %v3296 = vld [vmem:[#allocation4 + $0x20] sm:$0xff]
        %v3297 = vld [vmem:[#allocation4 + $0x28] sm:$0xff]
        %v3298 = vld [vmem:[#allocation4 + $0x30] sm:$0xff]
        %v3299 = vld [vmem:[#allocation4 + $0x38] sm:$0xff]
        %v3300 = vld [vmem:[#allocation4 + $0x40] sm:$0xff]
        %v3301 = vld [vmem:[#allocation4 + $0x48] sm:$0xff]
        %v3302 = vpack.c.bf16 %v3293, %v3292
        %v3303 = vpack.c.bf16 %v3295, %v3294
        %v3304 = vpack.c.bf16 %v3297, %v3296
        %v3305 = vpack.c.bf16 %v3299, %v3298
        %v3306 = vpack.c.bf16 %v3301, %v3300
        %v3307 = vld [vmem:[%s4] sm:$0xf]
        %v3308 = vld [vmem:[#allocation4 + $0x1] sm:$0xff]
        %v3309 = vld [vmem:[#allocation4 + $0x9] sm:$0xff]
        %v3310 = vld [vmem:[#allocation4 + $0x11] sm:$0xff]
        %v3311 = vld [vmem:[#allocation4 + $0x19] sm:$0xff]
        %v3312 = vld [vmem:[#allocation4 + $0x21] sm:$0xff]
        %v3313 = vld [vmem:[#allocation4 + $0x29] sm:$0xff]
        %v3314 = vld [vmem:[#allocation4 + $0x31] sm:$0xff]
        %v3315 = vld [vmem:[#allocation4 + $0x39] sm:$0xff]
        %v3316 = vld [vmem:[#allocation4 + $0x41] sm:$0xff]
        %v3317 = vld [vmem:[#allocation4 + $0x49] sm:$0xff]
        %v3318 = vpack.c.bf16 %v3309, %v3308
        %v3319 = vpack.c.bf16 %v3311, %v3310
        %v3320 = vpack.c.bf16 %v3313, %v3312
        %v3321 = vpack.c.bf16 %v3315, %v3314
        %v3322 = vpack.c.bf16 %v3317, %v3316
        %s3323 = scalar_lea.vmem %s4, 4
        %v3324 = vld [vmem:[%s3323] sm:$0xf]
        %v3326 = vsel %vm2925, %v3318, 0
        %v3329 = vsel %vm2925, %v3319, 0
        %v3332 = vsel %vm2925, %v3320, 0
        %v3335 = vsel %vm2925, %v3321, 0
        %v3338 = vsel %vm2925, %v3322, 0
        %vm3340 = vcmask 1043456
        %v3342 = vsel %vm3340, %v3324, 0
        %3344 = vmatpush.bf16.msra.mxu0 0
        %3345 = vmatpush.bf16.msra.mxu0 0
        %3346 = vmatpush.bf16.msra.mxu0 0
        %3347 = vmatpush.bf16.msra.mxu0 0
        %3348 = vmatpush.bf16.msra.mxu0 0
        %3349 = vmatpush.bf16.msra.mxu0 0
        %3350 = vmatpush.bf16.msra.mxu0 0
        %3351 = vmatpush.bf16.msra.mxu0 %v3342
        %3352 = vmatmul.bf16.gmra.mxu0 %v3326
        %v3353 = vpop.f32.mrf.mxu0
        %v3354 = vadd.f32 0.0, %v3353
        %v3355 = vpop.f32.mrf.mxu0
        %v3356 = vadd.f32 0.0, %v3355
        %3357 = vmatmul.bf16.gmra.mxu0 %v3329
        %v3358 = vpop.f32.mrf.mxu0
        %v3359 = vadd.f32 0.0, %v3358
        %v3360 = vpop.f32.mrf.mxu0
        %v3361 = vadd.f32 0.0, %v3360
        %3362 = vmatmul.bf16.gmra.mxu0 %v3332
        %v3363 = vpop.f32.mrf.mxu0
        %v3364 = vadd.f32 0.0, %v3363
        %v3365 = vpop.f32.mrf.mxu0
        %v3366 = vadd.f32 0.0, %v3365
        %3367 = vmatmul.bf16.gmra.mxu0 %v3335
        %v3368 = vpop.f32.mrf.mxu0
        %v3369 = vadd.f32 0.0, %v3368
        %v3370 = vpop.f32.mrf.mxu0
        %v3371 = vadd.f32 0.0, %v3370
        %3372 = vmatmul.bf16.gmra.mxu0 %v3338
        %v3373 = vpop.f32.mrf.mxu0
        %v3374 = vadd.f32 0.0, %v3373
        %v3375 = vpop.f32.mrf.mxu0
        %v3376 = vadd.f32 0.0, %v3375
        %3377 = vdwg.mxu0
        %v3379 = vsel %vm2925, %v3302, 0
        %v3382 = vsel %vm2925, %v3303, 0
        %v3385 = vsel %vm2925, %v3304, 0
        %v3388 = vsel %vm2925, %v3305, 0
        %v3391 = vsel %vm2925, %v3306, 0
        %v3394 = vsel %vm3340, %v3307, 0
        %3396 = vmatpush.bf16.msra.mxu0 0
        %3397 = vmatpush.bf16.msra.mxu0 0
        %3398 = vmatpush.bf16.msra.mxu0 0
        %3399 = vmatpush.bf16.msra.mxu0 0
        %3400 = vmatpush.bf16.msra.mxu0 0
        %3401 = vmatpush.bf16.msra.mxu0 0
        %3402 = vmatpush.bf16.msra.mxu0 0
        %3403 = vmatpush.bf16.msra.mxu0 %v3394
        %3404 = vmatmul.bf16.gmra.mxu0 %v3379
        %v3405 = vpop.f32.mrf.mxu0
        %v3406 = vadd.f32 %v3354, %v3405
        %v3407 = vpop.f32.mrf.mxu0
        %v3408 = vadd.f32 %v3356, %v3407
        %3409 = vmatmul.bf16.gmra.mxu0 %v3382
        %v3410 = vpop.f32.mrf.mxu0
        %v3411 = vadd.f32 %v3359, %v3410
        %v3412 = vpop.f32.mrf.mxu0
        %v3413 = vadd.f32 %v3361, %v3412
        %3414 = vmatmul.bf16.gmra.mxu0 %v3385
        %v3415 = vpop.f32.mrf.mxu0
        %v3416 = vadd.f32 %v3364, %v3415
        %v3417 = vpop.f32.mrf.mxu0
        %v3418 = vadd.f32 %v3366, %v3417
        %3419 = vmatmul.bf16.gmra.mxu0 %v3388
        %v3420 = vpop.f32.mrf.mxu0
        %v3421 = vadd.f32 %v3369, %v3420
        %v3422 = vpop.f32.mrf.mxu0
        %v3423 = vadd.f32 %v3371, %v3422
        %3424 = vmatmul.bf16.gmra.mxu0 %v3391
        %v3425 = vpop.f32.mrf.mxu0
        %v3426 = vadd.f32 %v3374, %v3425
        %v3427 = vpop.f32.mrf.mxu0
        %v3428 = vadd.f32 %v3376, %v3427
        %3429 = vdwg.mxu0
        %v3430 = vld [vmem:[#allocation4 + $0x2] sm:$0xff]
        %v3431 = vld [vmem:[#allocation4 + $0xa] sm:$0xff]
        %v3432 = vld [vmem:[#allocation4 + $0x12] sm:$0xff]
        %v3433 = vld [vmem:[#allocation4 + $0x1a] sm:$0xff]
        %v3434 = vld [vmem:[#allocation4 + $0x22] sm:$0xff]
        %v3435 = vld [vmem:[#allocation4 + $0x2a] sm:$0xff]
        %v3436 = vld [vmem:[#allocation4 + $0x32] sm:$0xff]
        %v3437 = vld [vmem:[#allocation4 + $0x3a] sm:$0xff]
        %v3438 = vld [vmem:[#allocation4 + $0x42] sm:$0xff]
        %v3439 = vld [vmem:[#allocation4 + $0x4a] sm:$0xff]
        %v3440 = vpack.c.bf16 %v3431, %v3430
        %v3441 = vpack.c.bf16 %v3433, %v3432
        %v3442 = vpack.c.bf16 %v3435, %v3434
        %v3443 = vpack.c.bf16 %v3437, %v3436
        %v3444 = vpack.c.bf16 %v3439, %v3438
        %s3445 = scalar_lea.vmem %s4, 8
        %v3446 = vld [vmem:[%s3445] sm:$0xf]
        %v3448 = vsel %vm2925, %v3440, 0
        %v3451 = vsel %vm2925, %v3441, 0
        %v3454 = vsel %vm2925, %v3442, 0
        %v3457 = vsel %vm2925, %v3443, 0
        %v3460 = vsel %vm2925, %v3444, 0
        %v3463 = vsel %vm3340, %v3446, 0
        %3465 = vmatpush.bf16.msra.mxu0 0
        %3466 = vmatpush.bf16.msra.mxu0 0
        %3467 = vmatpush.bf16.msra.mxu0 0
        %3468 = vmatpush.bf16.msra.mxu0 0
        %3469 = vmatpush.bf16.msra.mxu0 0
        %3470 = vmatpush.bf16.msra.mxu0 0
        %3471 = vmatpush.bf16.msra.mxu0 0
        %3472 = vmatpush.bf16.msra.mxu0 %v3463
        %3473 = vmatmul.bf16.gmra.mxu0 %v3448
        %v3474 = vpop.f32.mrf.mxu0
        %v3475 = vadd.f32 0.0, %v3474
        %v3476 = vpop.f32.mrf.mxu0
        %v3477 = vadd.f32 0.0, %v3476
        %3478 = vmatmul.bf16.gmra.mxu0 %v3451
        %v3479 = vpop.f32.mrf.mxu0
        %v3480 = vadd.f32 0.0, %v3479
        %v3481 = vpop.f32.mrf.mxu0
        %v3482 = vadd.f32 0.0, %v3481
        %3483 = vmatmul.bf16.gmra.mxu0 %v3454
        %v3484 = vpop.f32.mrf.mxu0
        %v3485 = vadd.f32 0.0, %v3484
        %v3486 = vpop.f32.mrf.mxu0
        %v3487 = vadd.f32 0.0, %v3486
        %3488 = vmatmul.bf16.gmra.mxu0 %v3457
        %v3489 = vpop.f32.mrf.mxu0
        %v3490 = vadd.f32 0.0, %v3489
        %v3491 = vpop.f32.mrf.mxu0
        %v3492 = vadd.f32 0.0, %v3491
        %3493 = vmatmul.bf16.gmra.mxu0 %v3460
        %v3494 = vpop.f32.mrf.mxu0
        %v3495 = vadd.f32 0.0, %v3494
        %v3496 = vpop.f32.mrf.mxu0
        %v3497 = vadd.f32 0.0, %v3496
        %3498 = vdwg.mxu0
        %v3499 = vadd.f32 %v3406, %v3475
        %v3500 = vadd.f32 %v3408, %v3477
        %v3501 = vadd.f32 %v3411, %v3480
        %v3502 = vadd.f32 %v3413, %v3482
        %v3503 = vadd.f32 %v3416, %v3485
        %v3504 = vadd.f32 %v3418, %v3487
        %v3505 = vadd.f32 %v3421, %v3490
        %v3506 = vadd.f32 %v3423, %v3492
        %v3507 = vadd.f32 %v3426, %v3495
        %v3508 = vadd.f32 %v3428, %v3497
        %v3509 = vld [vmem:[#allocation4 + $0xa] sm:$0xff]
        %v3510 = vld [vmem:[#allocation4 + $0x12] sm:$0xff]
        %v3511 = vld [vmem:[#allocation4 + $0x1a] sm:$0xff]
        %v3512 = vld [vmem:[#allocation4 + $0x22] sm:$0xff]
        %v3513 = vld [vmem:[#allocation4 + $0x2a] sm:$0xff]
        %v3514 = vld [vmem:[#allocation4 + $0x32] sm:$0xff]
        %v3515 = vld [vmem:[#allocation4 + $0x3a] sm:$0xff]
        %v3516 = vld [vmem:[#allocation4 + $0x42] sm:$0xff]
        %v3517 = vld [vmem:[#allocation4 + $0x4a] sm:$0xff]
        %v3518 = vld [vmem:[#allocation4 + $0x52] sm:$0xff]
        %v3519 = vpack.c.bf16 %v3510, %v3509
        %v3520 = vpack.c.bf16 %v3512, %v3511
        %v3521 = vpack.c.bf16 %v3514, %v3513
        %v3522 = vpack.c.bf16 %v3516, %v3515
        %v3523 = vpack.c.bf16 %v3518, %v3517
        %s3524 = scalar_lea.vmem %s4, 12
        %v3525 = vld [vmem:[%s3524] sm:$0xf]
        %v3527 = vsel %vm2925, %v3519, 0
        %v3530 = vsel %vm2925, %v3520, 0
        %v3533 = vsel %vm2925, %v3521, 0
        %v3536 = vsel %vm2925, %v3522, 0
        %v3539 = vsel %vm2925, %v3523, 0
        %v3542 = vsel %vm3340, %v3525, 0
        %3544 = vmatpush.bf16.msra.mxu0 0
        %3545 = vmatpush.bf16.msra.mxu0 0
        %3546 = vmatpush.bf16.msra.mxu0 0
        %3547 = vmatpush.bf16.msra.mxu0 0
        %3548 = vmatpush.bf16.msra.mxu0 0
        %3549 = vmatpush.bf16.msra.mxu0 0
        %3550 = vmatpush.bf16.msra.mxu0 0
        %3551 = vmatpush.bf16.msra.mxu0 %v3542
        %3552 = vmatmul.bf16.gmra.mxu0 %v3527
        %v3553 = vpop.f32.mrf.mxu0
        %v3554 = vadd.f32 0.0, %v3553
        %v3555 = vpop.f32.mrf.mxu0
        %v3556 = vadd.f32 0.0, %v3555
        %3557 = vmatmul.bf16.gmra.mxu0 %v3530
        %v3558 = vpop.f32.mrf.mxu0
        %v3559 = vadd.f32 0.0, %v3558
        %v3560 = vpop.f32.mrf.mxu0
        %v3561 = vadd.f32 0.0, %v3560
        %3562 = vmatmul.bf16.gmra.mxu0 %v3533
        %v3563 = vpop.f32.mrf.mxu0
        %v3564 = vadd.f32 0.0, %v3563
        %v3565 = vpop.f32.mrf.mxu0
        %v3566 = vadd.f32 0.0, %v3565
        %3567 = vmatmul.bf16.gmra.mxu0 %v3536
        %v3568 = vpop.f32.mrf.mxu0
        %v3569 = vadd.f32 0.0, %v3568
        %v3570 = vpop.f32.mrf.mxu0
        %v3571 = vadd.f32 0.0, %v3570
        %3572 = vmatmul.bf16.gmra.mxu0 %v3539
        %v3573 = vpop.f32.mrf.mxu0
        %v3574 = vadd.f32 0.0, %v3573
        %v3575 = vpop.f32.mrf.mxu0
        %v3576 = vadd.f32 0.0, %v3575
        %3577 = vdwg.mxu0
        %v3578 = vadd.f32 %v3499, %v3554
        %v3579 = vadd.f32 %v3500, %v3556
        %v3580 = vadd.f32 %v3501, %v3559
        %v3581 = vadd.f32 %v3502, %v3561
        %v3582 = vadd.f32 %v3503, %v3564
        %v3583 = vadd.f32 %v3504, %v3566
        %v3584 = vadd.f32 %v3505, %v3569
        %v3585 = vadd.f32 %v3506, %v3571
        %v3586 = vadd.f32 %v3507, %v3574
        %v3587 = vadd.f32 %v3508, %v3576
        %v3588 = vld [vmem:[#allocation4 + $0xb] sm:$0xff]
        %v3589 = vld [vmem:[#allocation4 + $0x13] sm:$0xff]
        %v3590 = vld [vmem:[#allocation4 + $0x1b] sm:$0xff]
        %v3591 = vld [vmem:[#allocation4 + $0x23] sm:$0xff]
        %v3592 = vld [vmem:[#allocation4 + $0x2b] sm:$0xff]
        %v3593 = vld [vmem:[#allocation4 + $0x33] sm:$0xff]
        %v3594 = vld [vmem:[#allocation4 + $0x3b] sm:$0xff]
        %v3595 = vld [vmem:[#allocation4 + $0x43] sm:$0xff]
        %v3596 = vld [vmem:[#allocation4 + $0x4b] sm:$0xff]
        %v3597 = vld [vmem:[#allocation4 + $0x53] sm:$0xff]
        %v3598 = vpack.c.bf16 %v3589, %v3588
        %v3599 = vpack.c.bf16 %v3591, %v3590
        %v3600 = vpack.c.bf16 %v3593, %v3592
        %v3601 = vpack.c.bf16 %v3595, %v3594
        %v3602 = vpack.c.bf16 %v3597, %v3596
        %s3603 = scalar_lea.vmem %s4, 16
        %v3604 = vld [vmem:[%s3603] sm:$0xf]
        %v3606 = vsel %vm2925, %v3598, 0
        %v3609 = vsel %vm2925, %v3599, 0
        %v3612 = vsel %vm2925, %v3600, 0
        %v3615 = vsel %vm2925, %v3601, 0
        %v3618 = vsel %vm2925, %v3602, 0
        %v3621 = vsel %vm3340, %v3604, 0
        %3623 = vmatpush.bf16.msra.mxu0 0
        %3624 = vmatpush.bf16.msra.mxu0 0
        %3625 = vmatpush.bf16.msra.mxu0 0
        %3626 = vmatpush.bf16.msra.mxu0 0
        %3627 = vmatpush.bf16.msra.mxu0 0
        %3628 = vmatpush.bf16.msra.mxu0 0
        %3629 = vmatpush.bf16.msra.mxu0 0
        %3630 = vmatpush.bf16.msra.mxu0 %v3621
        %3631 = vmatmul.bf16.gmra.mxu0 %v3606
        %v3632 = vpop.f32.mrf.mxu0
        %v3633 = vadd.f32 0.0, %v3632
        %v3634 = vpop.f32.mrf.mxu0
        %v3635 = vadd.f32 0.0, %v3634
        %3636 = vmatmul.bf16.gmra.mxu0 %v3609
        %v3637 = vpop.f32.mrf.mxu0
        %v3638 = vadd.f32 0.0, %v3637
        %v3639 = vpop.f32.mrf.mxu0
        %v3640 = vadd.f32 0.0, %v3639
        %3641 = vmatmul.bf16.gmra.mxu0 %v3612
        %v3642 = vpop.f32.mrf.mxu0
        %v3643 = vadd.f32 0.0, %v3642
        %v3644 = vpop.f32.mrf.mxu0
        %v3645 = vadd.f32 0.0, %v3644
        %3646 = vmatmul.bf16.gmra.mxu0 %v3615
        %v3647 = vpop.f32.mrf.mxu0
        %v3648 = vadd.f32 0.0, %v3647
        %v3649 = vpop.f32.mrf.mxu0
        %v3650 = vadd.f32 0.0, %v3649
        %3651 = vmatmul.bf16.gmra.mxu0 %v3618
        %v3652 = vpop.f32.mrf.mxu0
        %v3653 = vadd.f32 0.0, %v3652
        %v3654 = vpop.f32.mrf.mxu0
        %v3655 = vadd.f32 0.0, %v3654
        %3656 = vdwg.mxu0
        %v3657 = vadd.f32 %v3578, %v3633
        %v3658 = vadd.f32 %v3579, %v3635
        %v3659 = vadd.f32 %v3580, %v3638
        %v3660 = vadd.f32 %v3581, %v3640
        %v3661 = vadd.f32 %v3582, %v3643
        %v3662 = vadd.f32 %v3583, %v3645
        %v3663 = vadd.f32 %v3584, %v3648
        %v3664 = vadd.f32 %v3585, %v3650
        %v3665 = vadd.f32 %v3586, %v3653
        %v3666 = vadd.f32 %v3587, %v3655
        %v3667 = vld [vmem:[#allocation4 + $0xc] sm:$0xff]
        %v3668 = vld [vmem:[#allocation4 + $0x14] sm:$0xff]
        %v3669 = vld [vmem:[#allocation4 + $0x1c] sm:$0xff]
        %v3670 = vld [vmem:[#allocation4 + $0x24] sm:$0xff]
        %v3671 = vld [vmem:[#allocation4 + $0x2c] sm:$0xff]
        %v3672 = vld [vmem:[#allocation4 + $0x34] sm:$0xff]
        %v3673 = vld [vmem:[#allocation4 + $0x3c] sm:$0xff]
        %v3674 = vld [vmem:[#allocation4 + $0x44] sm:$0xff]
        %v3675 = vld [vmem:[#allocation4 + $0x4c] sm:$0xff]
        %v3676 = vld [vmem:[#allocation4 + $0x54] sm:$0xff]
        %v3677 = vpack.c.bf16 %v3668, %v3667
        %v3678 = vpack.c.bf16 %v3670, %v3669
        %v3679 = vpack.c.bf16 %v3672, %v3671
        %v3680 = vpack.c.bf16 %v3674, %v3673
        %v3681 = vpack.c.bf16 %v3676, %v3675
        %s3682 = scalar_lea.vmem %s4, 20
        %v3683 = vld [vmem:[%s3682] sm:$0xf]
        %v3685 = vsel %vm2925, %v3677, 0
        %v3688 = vsel %vm2925, %v3678, 0
        %v3691 = vsel %vm2925, %v3679, 0
        %v3694 = vsel %vm2925, %v3680, 0
        %v3697 = vsel %vm2925, %v3681, 0
        %v3700 = vsel %vm3340, %v3683, 0
        %3702 = vmatpush.bf16.msra.mxu0 0
        %3703 = vmatpush.bf16.msra.mxu0 0
        %3704 = vmatpush.bf16.msra.mxu0 0
        %3705 = vmatpush.bf16.msra.mxu0 0
        %3706 = vmatpush.bf16.msra.mxu0 0
        %3707 = vmatpush.bf16.msra.mxu0 0
        %3708 = vmatpush.bf16.msra.mxu0 0
        %3709 = vmatpush.bf16.msra.mxu0 %v3700
        %3710 = vmatmul.bf16.gmra.mxu0 %v3685
        %v3711 = vpop.f32.mrf.mxu0
        %v3712 = vadd.f32 0.0, %v3711
        %v3713 = vpop.f32.mrf.mxu0
        %v3714 = vadd.f32 0.0, %v3713
        %3715 = vmatmul.bf16.gmra.mxu0 %v3688
        %v3716 = vpop.f32.mrf.mxu0
        %v3717 = vadd.f32 0.0, %v3716
        %v3718 = vpop.f32.mrf.mxu0
        %v3719 = vadd.f32 0.0, %v3718
        %3720 = vmatmul.bf16.gmra.mxu0 %v3691
        %v3721 = vpop.f32.mrf.mxu0
        %v3722 = vadd.f32 0.0, %v3721
        %v3723 = vpop.f32.mrf.mxu0
        %v3724 = vadd.f32 0.0, %v3723
        %3725 = vmatmul.bf16.gmra.mxu0 %v3694
        %v3726 = vpop.f32.mrf.mxu0
        %v3727 = vadd.f32 0.0, %v3726
        %v3728 = vpop.f32.mrf.mxu0
        %v3729 = vadd.f32 0.0, %v3728
        %3730 = vmatmul.bf16.gmra.mxu0 %v3697
        %v3731 = vpop.f32.mrf.mxu0
        %v3732 = vadd.f32 0.0, %v3731
        %v3733 = vpop.f32.mrf.mxu0
        %v3734 = vadd.f32 0.0, %v3733
        %3735 = vdwg.mxu0
        %v3736 = vadd.f32 %v3657, %v3712
        %v3737 = vadd.f32 %v3658, %v3714
        %v3738 = vadd.f32 %v3659, %v3717
        %v3739 = vadd.f32 %v3660, %v3719
        %v3740 = vadd.f32 %v3661, %v3722
        %v3741 = vadd.f32 %v3662, %v3724
        %v3742 = vadd.f32 %v3663, %v3727
        %v3743 = vadd.f32 %v3664, %v3729
        %v3744 = vadd.f32 %v3665, %v3732
        %v3745 = vadd.f32 %v3666, %v3734
        %v3746 = vld [vmem:[#allocation4 + $0x14] sm:$0xff]
        %v3747 = vld [vmem:[#allocation4 + $0x1c] sm:$0xff]
        %v3748 = vld [vmem:[#allocation4 + $0x24] sm:$0xff]
        %v3749 = vld [vmem:[#allocation4 + $0x2c] sm:$0xff]
        %v3750 = vld [vmem:[#allocation4 + $0x34] sm:$0xff]
        %v3751 = vld [vmem:[#allocation4 + $0x3c] sm:$0xff]
        %v3752 = vld [vmem:[#allocation4 + $0x44] sm:$0xff]
        %v3753 = vld [vmem:[#allocation4 + $0x4c] sm:$0xff]
        %v3754 = vld [vmem:[#allocation4 + $0x54] sm:$0xff]
        %v3755 = vld [vmem:[#allocation4 + $0x5c] sm:$0xff]
        %v3756 = vpack.c.bf16 %v3747, %v3746
        %v3757 = vpack.c.bf16 %v3749, %v3748
        %v3758 = vpack.c.bf16 %v3751, %v3750
        %v3759 = vpack.c.bf16 %v3753, %v3752
        %v3760 = vpack.c.bf16 %v3755, %v3754
        %s3761 = scalar_lea.vmem %s4, 24
        %v3762 = vld [vmem:[%s3761] sm:$0xf]
        %v3764 = vsel %vm2925, %v3756, 0
        %v3767 = vsel %vm2925, %v3757, 0
        %v3770 = vsel %vm2925, %v3758, 0
        %v3773 = vsel %vm2925, %v3759, 0
        %v3776 = vsel %vm2925, %v3760, 0
        %v3779 = vsel %vm3340, %v3762, 0
        %3781 = vmatpush.bf16.msra.mxu0 0
        %3782 = vmatpush.bf16.msra.mxu0 0
        %3783 = vmatpush.bf16.msra.mxu0 0
        %3784 = vmatpush.bf16.msra.mxu0 0
        %3785 = vmatpush.bf16.msra.mxu0 0
        %3786 = vmatpush.bf16.msra.mxu0 0
        %3787 = vmatpush.bf16.msra.mxu0 0
        %3788 = vmatpush.bf16.msra.mxu0 %v3779
        %3789 = vmatmul.bf16.gmra.mxu0 %v3764
        %v3790 = vpop.f32.mrf.mxu0
        %v3791 = vadd.f32 0.0, %v3790
        %v3792 = vpop.f32.mrf.mxu0
        %v3793 = vadd.f32 0.0, %v3792
        %3794 = vmatmul.bf16.gmra.mxu0 %v3767
        %v3795 = vpop.f32.mrf.mxu0
        %v3796 = vadd.f32 0.0, %v3795
        %v3797 = vpop.f32.mrf.mxu0
        %v3798 = vadd.f32 0.0, %v3797
        %3799 = vmatmul.bf16.gmra.mxu0 %v3770
        %v3800 = vpop.f32.mrf.mxu0
        %v3801 = vadd.f32 0.0, %v3800
        %v3802 = vpop.f32.mrf.mxu0
        %v3803 = vadd.f32 0.0, %v3802
        %3804 = vmatmul.bf16.gmra.mxu0 %v3773
        %v3805 = vpop.f32.mrf.mxu0
        %v3806 = vadd.f32 0.0, %v3805
        %v3807 = vpop.f32.mrf.mxu0
        %v3808 = vadd.f32 0.0, %v3807
        %3809 = vmatmul.bf16.gmra.mxu0 %v3776
        %v3810 = vpop.f32.mrf.mxu0
        %v3811 = vadd.f32 0.0, %v3810
        %v3812 = vpop.f32.mrf.mxu0
        %v3813 = vadd.f32 0.0, %v3812
        %3814 = vdwg.mxu0
        %v3815 = vadd.f32 %v3736, %v3791
        %v3816 = vadd.f32 %v3737, %v3793
        %v3817 = vadd.f32 %v3738, %v3796
        %v3818 = vadd.f32 %v3739, %v3798
        %v3819 = vadd.f32 %v3740, %v3801
        %v3820 = vadd.f32 %v3741, %v3803
        %v3821 = vadd.f32 %v3742, %v3806
        %v3822 = vadd.f32 %v3743, %v3808
        %v3823 = vadd.f32 %v3744, %v3811
        %v3824 = vadd.f32 %v3745, %v3813
        %v3825 = vld [vmem:[#allocation4 + $0x15] sm:$0xff]
        %v3826 = vld [vmem:[#allocation4 + $0x1d] sm:$0xff]
        %v3827 = vld [vmem:[#allocation4 + $0x25] sm:$0xff]
        %v3828 = vld [vmem:[#allocation4 + $0x2d] sm:$0xff]
        %v3829 = vld [vmem:[#allocation4 + $0x35] sm:$0xff]
        %v3830 = vld [vmem:[#allocation4 + $0x3d] sm:$0xff]
        %v3831 = vld [vmem:[#allocation4 + $0x45] sm:$0xff]
        %v3832 = vld [vmem:[#allocation4 + $0x4d] sm:$0xff]
        %v3833 = vld [vmem:[#allocation4 + $0x55] sm:$0xff]
        %v3834 = vld [vmem:[#allocation4 + $0x5d] sm:$0xff]
        %v3835 = vpack.c.bf16 %v3826, %v3825
        %v3836 = vpack.c.bf16 %v3828, %v3827
        %v3837 = vpack.c.bf16 %v3830, %v3829
        %v3838 = vpack.c.bf16 %v3832, %v3831
        %v3839 = vpack.c.bf16 %v3834, %v3833
        %s3840 = scalar_lea.vmem %s4, 28
        %v3841 = vld [vmem:[%s3840] sm:$0xf]
        %v3843 = vsel %vm2925, %v3835, 0
        %v3846 = vsel %vm2925, %v3836, 0
        %v3849 = vsel %vm2925, %v3837, 0
        %v3852 = vsel %vm2925, %v3838, 0
        %v3855 = vsel %vm2925, %v3839, 0
        %v3858 = vsel %vm3340, %v3841, 0
        %3860 = vmatpush.bf16.msra.mxu0 0
        %3861 = vmatpush.bf16.msra.mxu0 0
        %3862 = vmatpush.bf16.msra.mxu0 0
        %3863 = vmatpush.bf16.msra.mxu0 0
        %3864 = vmatpush.bf16.msra.mxu0 0
        %3865 = vmatpush.bf16.msra.mxu0 0
        %3866 = vmatpush.bf16.msra.mxu0 0
        %3867 = vmatpush.bf16.msra.mxu0 %v3858
        %3868 = vmatmul.bf16.gmra.mxu0 %v3843
        %v3869 = vpop.f32.mrf.mxu0
        %v3870 = vadd.f32 0.0, %v3869
        %v3871 = vpop.f32.mrf.mxu0
        %v3872 = vadd.f32 0.0, %v3871
        %3873 = vmatmul.bf16.gmra.mxu0 %v3846
        %v3874 = vpop.f32.mrf.mxu0
        %v3875 = vadd.f32 0.0, %v3874
        %v3876 = vpop.f32.mrf.mxu0
        %v3877 = vadd.f32 0.0, %v3876
        %3878 = vmatmul.bf16.gmra.mxu0 %v3849
        %v3879 = vpop.f32.mrf.mxu0
        %v3880 = vadd.f32 0.0, %v3879
        %v3881 = vpop.f32.mrf.mxu0
        %v3882 = vadd.f32 0.0, %v3881
        %3883 = vmatmul.bf16.gmra.mxu0 %v3852
        %v3884 = vpop.f32.mrf.mxu0
        %v3885 = vadd.f32 0.0, %v3884
        %v3886 = vpop.f32.mrf.mxu0
        %v3887 = vadd.f32 0.0, %v3886
        %3888 = vmatmul.bf16.gmra.mxu0 %v3855
        %v3889 = vpop.f32.mrf.mxu0
        %v3890 = vadd.f32 0.0, %v3889
        %v3891 = vpop.f32.mrf.mxu0
        %v3892 = vadd.f32 0.0, %v3891
        %3893 = vdwg.mxu0
        %v3894 = vadd.f32 %v3815, %v3870
        %v3895 = vadd.f32 %v3816, %v3872
        %v3896 = vadd.f32 %v3817, %v3875
        %v3897 = vadd.f32 %v3818, %v3877
        %v3898 = vadd.f32 %v3819, %v3880
        %v3899 = vadd.f32 %v3820, %v3882
        %v3900 = vadd.f32 %v3821, %v3885
        %v3901 = vadd.f32 %v3822, %v3887
        %v3902 = vadd.f32 %v3823, %v3890
        %v3903 = vadd.f32 %v3824, %v3892
        %v3904 = vld [vmem:[#allocation4 + $0x16] sm:$0xff]
        %v3905 = vld [vmem:[#allocation4 + $0x1e] sm:$0xff]
        %v3906 = vld [vmem:[#allocation4 + $0x26] sm:$0xff]
        %v3907 = vld [vmem:[#allocation4 + $0x2e] sm:$0xff]
        %v3908 = vld [vmem:[#allocation4 + $0x36] sm:$0xff]
        %v3909 = vld [vmem:[#allocation4 + $0x3e] sm:$0xff]
        %v3910 = vld [vmem:[#allocation4 + $0x46] sm:$0xff]
        %v3911 = vld [vmem:[#allocation4 + $0x4e] sm:$0xff]
        %v3912 = vld [vmem:[#allocation4 + $0x56] sm:$0xff]
        %v3913 = vld [vmem:[#allocation4 + $0x5e] sm:$0xff]
        %v3914 = vpack.c.bf16 %v3905, %v3904
        %v3915 = vpack.c.bf16 %v3907, %v3906
        %v3916 = vpack.c.bf16 %v3909, %v3908
        %v3917 = vpack.c.bf16 %v3911, %v3910
        %v3918 = vpack.c.bf16 %v3913, %v3912
        %s3919 = scalar_lea.vmem %s4, 32
        %v3920 = vld [vmem:[%s3919] sm:$0xf]
        %v3922 = vsel %vm2925, %v3914, 0
        %v3925 = vsel %vm2925, %v3915, 0
        %v3928 = vsel %vm2925, %v3916, 0
        %v3931 = vsel %vm2925, %v3917, 0
        %v3934 = vsel %vm2925, %v3918, 0
        %v3937 = vsel %vm3340, %v3920, 0
        %3939 = vmatpush.bf16.msra.mxu0 0
        %3940 = vmatpush.bf16.msra.mxu0 0
        %3941 = vmatpush.bf16.msra.mxu0 0
        %3942 = vmatpush.bf16.msra.mxu0 0
        %3943 = vmatpush.bf16.msra.mxu0 0
        %3944 = vmatpush.bf16.msra.mxu0 0
        %3945 = vmatpush.bf16.msra.mxu0 0
        %3946 = vmatpush.bf16.msra.mxu0 %v3937
        %3947 = vmatmul.bf16.gmra.mxu0 %v3922
        %v3948 = vpop.f32.mrf.mxu0
        %v3949 = vadd.f32 0.0, %v3948
        %v3950 = vpop.f32.mrf.mxu0
        %v3951 = vadd.f32 0.0, %v3950
        %3952 = vmatmul.bf16.gmra.mxu0 %v3925
        %v3953 = vpop.f32.mrf.mxu0
        %v3954 = vadd.f32 0.0, %v3953
        %v3955 = vpop.f32.mrf.mxu0
        %v3956 = vadd.f32 0.0, %v3955
        %3957 = vmatmul.bf16.gmra.mxu0 %v3928
        %v3958 = vpop.f32.mrf.mxu0
        %v3959 = vadd.f32 0.0, %v3958
        %v3960 = vpop.f32.mrf.mxu0
        %v3961 = vadd.f32 0.0, %v3960
        %3962 = vmatmul.bf16.gmra.mxu0 %v3931
        %v3963 = vpop.f32.mrf.mxu0
        %v3964 = vadd.f32 0.0, %v3963
        %v3965 = vpop.f32.mrf.mxu0
        %v3966 = vadd.f32 0.0, %v3965
        %3967 = vmatmul.bf16.gmra.mxu0 %v3934
        %v3968 = vpop.f32.mrf.mxu0
        %v3969 = vadd.f32 0.0, %v3968
        %v3970 = vpop.f32.mrf.mxu0
        %v3971 = vadd.f32 0.0, %v3970
        %3972 = vdwg.mxu0
        %v3973 = vadd.f32 %v3894, %v3949
        %v3974 = vadd.f32 %v3895, %v3951
        %v3975 = vadd.f32 %v3896, %v3954
        %v3976 = vadd.f32 %v3897, %v3956
        %v3977 = vadd.f32 %v3898, %v3959
        %v3978 = vadd.f32 %v3899, %v3961
        %v3979 = vadd.f32 %v3900, %v3964
        %v3980 = vadd.f32 %v3901, %v3966
        %v3981 = vadd.f32 %v3902, %v3969
        %v3982 = vadd.f32 %v3903, %v3971
        %v3983 = vld [vmem:[%s5] sm:$0x1]
        %v3985 = vperm.slane %v3983, 0
        %v3987 = vmul.f32 %v3973, %v3985
        %v3988 = vmul.f32 %v3974, %v3985
        %v3989 = vmul.f32 %v3975, %v3985
        %v3990 = vmul.f32 %v3976, %v3985
        %v3991 = vmul.f32 %v3977, %v3985
        %v3992 = vmul.f32 %v3978, %v3985
        %v3993 = vmul.f32 %v3979, %v3985
        %v3994 = vmul.f32 %v3980, %v3985
        %v3995 = vmul.f32 %v3981, %v3985
        %v3996 = vmul.f32 %v3982, %v3985
        %v3997 = vld [vmem:[%s6] sm:$0x1]
        %v3999 = vperm.slane %v3997, 0
        %v4001 = vadd.f32 %v3987, %v3999
        %v4002 = vadd.f32 %v3988, %v3999
        %v4003 = vadd.f32 %v3989, %v3999
        %v4004 = vadd.f32 %v3990, %v3999
        %v4005 = vadd.f32 %v3991, %v3999
        %v4006 = vadd.f32 %v3992, %v3999
        %v4007 = vadd.f32 %v3993, %v3999
        %v4008 = vadd.f32 %v3994, %v3999
        %v4009 = vadd.f32 %v3995, %v3999
        %v4010 = vadd.f32 %v3996, %v3999
        %vm4011 = vcmp.ge.f32.partialorder %v4001, 0.0
        %vm4012 = vcmp.ge.f32.partialorder %v4002, 0.0
        %vm4013 = vcmp.ge.f32.partialorder %v4003, 0.0
        %vm4014 = vcmp.ge.f32.partialorder %v4004, 0.0
        %vm4015 = vcmp.ge.f32.partialorder %v4005, 0.0
        %vm4016 = vcmp.ge.f32.partialorder %v4006, 0.0
        %vm4017 = vcmp.ge.f32.partialorder %v4007, 0.0
        %vm4018 = vcmp.ge.f32.partialorder %v4008, 0.0
        %vm4019 = vcmp.ge.f32.partialorder %v4009, 0.0
        %vm4020 = vcmp.ge.f32.partialorder %v4010, 0.0
        %v4021 = vmul.f32 %v4001, 0.01
        %v4022 = vmul.f32 %v4002, 0.01
        %v4023 = vmul.f32 %v4003, 0.01
        %v4024 = vmul.f32 %v4004, 0.01
        %v4025 = vmul.f32 %v4005, 0.01
        %v4026 = vmul.f32 %v4006, 0.01
        %v4027 = vmul.f32 %v4007, 0.01
        %v4028 = vmul.f32 %v4008, 0.01
        %v4029 = vmul.f32 %v4009, 0.01
        %v4030 = vmul.f32 %v4010, 0.01
        %v4031 = vsel %vm4011, %v4001, %v4021
        %v4032 = vsel %vm4012, %v4002, %v4022
        %v4033 = vsel %vm4013, %v4003, %v4023
        %v4034 = vsel %vm4014, %v4004, %v4024
        %v4035 = vsel %vm4015, %v4005, %v4025
        %v4036 = vsel %vm4016, %v4006, %v4026
        %v4037 = vsel %vm4017, %v4007, %v4027
        %v4038 = vsel %vm4018, %v4008, %v4028
        %v4039 = vsel %vm4019, %v4009, %v4029
        %v4040 = vsel %vm4020, %v4010, %v4030
        %vm4041 = vcmask 130048
        %4042 = vst.msk [vmem:[#allocation3] sm:$0xff] %vm4041, %v4031
        %4043 = vst.msk [vmem:[#allocation3 + $0x8] sm:$0xff] %vm4041, %v4032
        %4044 = vst.msk [vmem:[#allocation3 + $0x10] sm:$0xff] %vm4041, %v4033
        %4045 = vst.msk [vmem:[#allocation3 + $0x18] sm:$0xff] %vm4041, %v4034
        %4046 = vst.msk [vmem:[#allocation3 + $0x20] sm:$0xff] %vm4041, %v4035
        %4047 = vst.msk [vmem:[#allocation3 + $0x28] sm:$0xff] %vm4041, %v4036
        %4048 = vst.msk [vmem:[#allocation3 + $0x30] sm:$0xff] %vm4041, %v4037
        %4049 = vst.msk [vmem:[#allocation3 + $0x38] sm:$0xff] %vm4041, %v4038
        %4050 = vst.msk [vmem:[#allocation3 + $0x40] sm:$0xff] %vm4041, %v4039
        %4051 = vst.msk [vmem:[#allocation3 + $0x48] sm:$0xff] %vm4041, %v4040
        %v4052 = vld [vmem:[#allocation3] sm:$0x1]
        %v4053 = vld [vmem:[#allocation3 + $0x1] sm:$0x1]
        %v4054 = vmax.f32 %v4052, %v4053
        %v4055 = vld [vmem:[#allocation3 + $0xa] sm:$0x1]
        %v4056 = vld [vmem:[#allocation3 + $0xb] sm:$0x1]
        %v4057 = vmax.f32 %v4055, %v4056
        %v4058 = vmax.f32 %v4054, %v4057
        %v4059 = vlaneseq
        %vm4060 = vcmp.ge.s32.totalorder %v4059, 0
        %vm4061 = vcmp.lt.s32.totalorder %v4059, 16
        %vm4062 = vmand %vm4060, %vm4061
        %4063 = vst.msk [vmem:[#allocation5] sm:$0x1] %vm4062, %v4058
        %v4064 = vld [vmem:[#allocation3 + $0x2] sm:$0x1]
        %v4065 = vld [vmem:[#allocation3 + $0x3] sm:$0x1]
        %v4066 = vmax.f32 %v4064, %v4065
        %v4067 = vld [vmem:[#allocation3 + $0xc] sm:$0x1]
        %v4068 = vld [vmem:[#allocation3 + $0xd] sm:$0x1]
        %v4069 = vmax.f32 %v4067, %v4068
        %v4070 = vmax.f32 %v4066, %v4069
        %4072 = vrot.lane.b32.xlu0 %v4070, 16
        %v4073 = vpop.permute.xlu0 %4072
        %vm4075 = vcmp.ge.s32.totalorder %v4059, 16
        %vm4076 = vcmp.lt.s32.totalorder %v4059, 32
        %vm4077 = vmand %vm4075, %vm4076
        %4078 = vst.msk [vmem:[#allocation5] sm:$0x1] %vm4077, %v4073
        %v4079 = vld [vmem:[#allocation3 + $0x4] sm:$0x1]
        %v4080 = vld [vmem:[#allocation3 + $0x5] sm:$0x1]
        %v4081 = vmax.f32 %v4079, %v4080
        %v4082 = vld [vmem:[#allocation3 + $0xe] sm:$0x1]
        %v4083 = vld [vmem:[#allocation3 + $0xf] sm:$0x1]
        %v4084 = vmax.f32 %v4082, %v4083
        %v4085 = vmax.f32 %v4081, %v4084
        %4087 = vrot.lane.b32.xlu0 %v4085, 32
        %v4088 = vpop.permute.xlu0 %4087
        %vm4090 = vcmp.ge.s32.totalorder %v4059, 32
        %vm4091 = vcmp.lt.s32.totalorder %v4059, 48
        %vm4092 = vmand %vm4090, %vm4091
        %4093 = vst.msk [vmem:[#allocation5] sm:$0x1] %vm4092, %v4088
        %v4094 = vld [vmem:[#allocation3 + $0x6] sm:$0x1]
        %v4095 = vld [vmem:[#allocation3 + $0x7] sm:$0x1]
        %v4096 = vmax.f32 %v4094, %v4095
        %v4097 = vld [vmem:[#allocation3 + $0x10] sm:$0x1]
        %v4098 = vld [vmem:[#allocation3 + $0x11] sm:$0x1]
        %v4099 = vmax.f32 %v4097, %v4098
        %v4100 = vmax.f32 %v4096, %v4099
        %4102 = vrot.lane.b32.xlu0 %v4100, 48
        %v4103 = vpop.permute.xlu0 %4102
        %vm4105 = vcmp.ge.s32.totalorder %v4059, 48
        %vm4106 = vcmp.lt.s32.totalorder %v4059, 64
        %vm4107 = vmand %vm4105, %vm4106
        %4108 = vst.msk [vmem:[#allocation5] sm:$0x1] %vm4107, %v4103
        %v4109 = vld [vmem:[#allocation3 + $0x14] sm:$0x1]
        %v4110 = vld [vmem:[#allocation3 + $0x15] sm:$0x1]
        %v4111 = vmax.f32 %v4109, %v4110
        %v4112 = vld [vmem:[#allocation3 + $0x1e] sm:$0x1]
        %v4113 = vld [vmem:[#allocation3 + $0x1f] sm:$0x1]
        %v4114 = vmax.f32 %v4112, %v4113
        %v4115 = vmax.f32 %v4111, %v4114
        %4117 = vrot.lane.b32.xlu0 %v4115, 64
        %v4118 = vpop.permute.xlu0 %4117
        %vm4120 = vcmp.ge.s32.totalorder %v4059, 64
        %vm4121 = vcmp.lt.s32.totalorder %v4059, 80
        %vm4122 = vmand %vm4120, %vm4121
        %4123 = vst.msk [vmem:[#allocation5] sm:$0x1] %vm4122, %v4118
        %v4124 = vld [vmem:[#allocation3 + $0x16] sm:$0x1]
        %v4125 = vld [vmem:[#allocation3 + $0x17] sm:$0x1]
        %v4126 = vmax.f32 %v4124, %v4125
        %v4127 = vld [vmem:[#allocation3 + $0x20] sm:$0x1]
        %v4128 = vld [vmem:[#allocation3 + $0x21] sm:$0x1]
        %v4129 = vmax.f32 %v4127, %v4128
        %v4130 = vmax.f32 %v4126, %v4129
        %4132 = vrot.lane.b32.xlu0 %v4130, 80
        %v4133 = vpop.permute.xlu0 %4132
        %vm4135 = vcmp.ge.s32.totalorder %v4059, 80
        %vm4136 = vcmp.lt.s32.totalorder %v4059, 96
        %vm4137 = vmand %vm4135, %vm4136
        %4138 = vst.msk [vmem:[#allocation5] sm:$0x1] %vm4137, %v4133
        %v4139 = vld [vmem:[#allocation3 + $0x18] sm:$0x1]
        %v4140 = vld [vmem:[#allocation3 + $0x19] sm:$0x1]
        %v4141 = vmax.f32 %v4139, %v4140
        %v4142 = vld [vmem:[#allocation3 + $0x22] sm:$0x1]
        %v4143 = vld [vmem:[#allocation3 + $0x23] sm:$0x1]
        %v4144 = vmax.f32 %v4142, %v4143
        %v4145 = vmax.f32 %v4141, %v4144
        %4147 = vrot.lane.b32.xlu0 %v4145, 96
        %v4148 = vpop.permute.xlu0 %4147
        %vm4150 = vcmp.ge.s32.totalorder %v4059, 96
        %vm4151 = vcmp.lt.s32.totalorder %v4059, 112
        %vm4152 = vmand %vm4150, %vm4151
        %4153 = vst.msk [vmem:[#allocation5] sm:$0x1] %vm4152, %v4148
        %v4154 = vld [vmem:[#allocation3 + $0x1a] sm:$0x1]
        %v4155 = vld [vmem:[#allocation3 + $0x1b] sm:$0x1]
        %v4156 = vmax.f32 %v4154, %v4155
        %v4157 = vld [vmem:[#allocation3 + $0x24] sm:$0x1]
        %v4158 = vld [vmem:[#allocation3 + $0x25] sm:$0x1]
        %v4159 = vmax.f32 %v4157, %v4158
        %v4160 = vmax.f32 %v4156, %v4159
        %4162 = vrot.lane.b32.xlu0 %v4160, 112
        %v4163 = vpop.permute.xlu0 %4162
        %vm4165 = vcmp.ge.s32.totalorder %v4059, 112
        %vm4166 = vcmp.lt.s32.totalorder %v4059, 128
        %vm4167 = vmand %vm4165, %vm4166
        %4168 = vst.msk [vmem:[#allocation5] sm:$0x1] %vm4167, %v4163
        %v4169 = vld [vmem:[#allocation3 + $0x28] sm:$0x1]
        %v4170 = vld [vmem:[#allocation3 + $0x29] sm:$0x1]
        %v4171 = vmax.f32 %v4169, %v4170
        %v4172 = vld [vmem:[#allocation3 + $0x32] sm:$0x1]
        %v4173 = vld [vmem:[#allocation3 + $0x33] sm:$0x1]
        %v4174 = vmax.f32 %v4172, %v4173
        %v4175 = vmax.f32 %v4171, %v4174
        %4176 = vst.msk [vmem:[#allocation5 + $0x1] sm:$0x1] %vm4062, %v4175
        %v4177 = vld [vmem:[#allocation3 + $0x2a] sm:$0x1]
        %v4178 = vld [vmem:[#allocation3 + $0x2b] sm:$0x1]
        %v4179 = vmax.f32 %v4177, %v4178
        %v4180 = vld [vmem:[#allocation3 + $0x34] sm:$0x1]
        %v4181 = vld [vmem:[#allocation3 + $0x35] sm:$0x1]
        %v4182 = vmax.f32 %v4180, %v4181
        %v4183 = vmax.f32 %v4179, %v4182
        %4185 = vrot.lane.b32.xlu0 %v4183, 16
        %v4186 = vpop.permute.xlu0 %4185
        %4188 = vst.msk [vmem:[#allocation5 + $0x1] sm:$0x1] %vm4077, %v4186
        %v4189 = vld [vmem:[#allocation3 + $0x2c] sm:$0x1]
        %v4190 = vld [vmem:[#allocation3 + $0x2d] sm:$0x1]
        %v4191 = vmax.f32 %v4189, %v4190
        %v4192 = vld [vmem:[#allocation3 + $0x36] sm:$0x1]
        %v4193 = vld [vmem:[#allocation3 + $0x37] sm:$0x1]
        %v4194 = vmax.f32 %v4192, %v4193
        %v4195 = vmax.f32 %v4191, %v4194
        %4197 = vrot.lane.b32.xlu0 %v4195, 32
        %v4198 = vpop.permute.xlu0 %4197
        %4200 = vst.msk [vmem:[#allocation5 + $0x1] sm:$0x1] %vm4092, %v4198
        %v4201 = vld [vmem:[#allocation3 + $0x2e] sm:$0x1]
        %v4202 = vld [vmem:[#allocation3 + $0x2f] sm:$0x1]
        %v4203 = vmax.f32 %v4201, %v4202
        %v4204 = vld [vmem:[#allocation3 + $0x38] sm:$0x1]
        %v4205 = vld [vmem:[#allocation3 + $0x39] sm:$0x1]
        %v4206 = vmax.f32 %v4204, %v4205
        %v4207 = vmax.f32 %v4203, %v4206
        %4209 = vrot.lane.b32.xlu0 %v4207, 48
        %v4210 = vpop.permute.xlu0 %4209
        %4212 = vst.msk [vmem:[#allocation5 + $0x1] sm:$0x1] %vm4107, %v4210
        %v4213 = vld [vmem:[#allocation3 + $0x3c] sm:$0x1]
        %v4214 = vld [vmem:[#allocation3 + $0x3d] sm:$0x1]
        %v4215 = vmax.f32 %v4213, %v4214
        %v4216 = vld [vmem:[#allocation3 + $0x46] sm:$0x1]
        %v4217 = vld [vmem:[#allocation3 + $0x47] sm:$0x1]
        %v4218 = vmax.f32 %v4216, %v4217
        %v4219 = vmax.f32 %v4215, %v4218
        %4221 = vrot.lane.b32.xlu0 %v4219, 64
        %v4222 = vpop.permute.xlu0 %4221
        %4224 = vst.msk [vmem:[#allocation5 + $0x1] sm:$0x1] %vm4122, %v4222
        %v4225 = vld [vmem:[#allocation3 + $0x3e] sm:$0x1]
        %v4226 = vld [vmem:[#allocation3 + $0x3f] sm:$0x1]
        %v4227 = vmax.f32 %v4225, %v4226
        %v4228 = vld [vmem:[#allocation3 + $0x48] sm:$0x1]
        %v4229 = vld [vmem:[#allocation3 + $0x49] sm:$0x1]
        %v4230 = vmax.f32 %v4228, %v4229
        %v4231 = vmax.f32 %v4227, %v4230
        %4233 = vrot.lane.b32.xlu0 %v4231, 80
        %v4234 = vpop.permute.xlu0 %4233
        %4236 = vst.msk [vmem:[#allocation5 + $0x1] sm:$0x1] %vm4137, %v4234
        %v4237 = vld [vmem:[#allocation3 + $0x40] sm:$0x1]
        %v4238 = vld [vmem:[#allocation3 + $0x41] sm:$0x1]
        %v4239 = vmax.f32 %v4237, %v4238
        %v4240 = vld [vmem:[#allocation3 + $0x4a] sm:$0x1]
        %v4241 = vld [vmem:[#allocation3 + $0x4b] sm:$0x1]
        %v4242 = vmax.f32 %v4240, %v4241
        %v4243 = vmax.f32 %v4239, %v4242
        %4245 = vrot.lane.b32.xlu0 %v4243, 96
        %v4246 = vpop.permute.xlu0 %4245
        %4248 = vst.msk [vmem:[#allocation5 + $0x1] sm:$0x1] %vm4152, %v4246
        %v4249 = vld [vmem:[#allocation3 + $0x42] sm:$0x1]
        %v4250 = vld [vmem:[#allocation3 + $0x43] sm:$0x1]
        %v4251 = vmax.f32 %v4249, %v4250
        %v4252 = vld [vmem:[#allocation3 + $0x4c] sm:$0x1]
        %v4253 = vld [vmem:[#allocation3 + $0x4d] sm:$0x1]
        %v4254 = vmax.f32 %v4252, %v4253
        %v4255 = vmax.f32 %v4251, %v4254
        %4257 = vrot.lane.b32.xlu0 %v4255, 112
        %v4258 = vpop.permute.xlu0 %4257
        %4260 = vst.msk [vmem:[#allocation5 + $0x1] sm:$0x1] %vm4167, %v4258
        %v4261 = vld [vmem:[#allocation5] sm:$0x3]
        %v4263 = vperm.slane %v4261, 0
        %v4264 = vperm.slane %v4261, 1
        %v4267 = vpack.c.bf16 %v4263, %v4263
        %v4268 = vpack.c.bf16 %v4264, %v4264
        %v4269 = vld [vmem:[%s7] sm:$0xf]
        %v4270 = vld [vmem:[%s7 + $0x4] sm:$0xf]
        %v4271 = vld [vmem:[%s7 + $0x8] sm:$0xf]
        %v4272 = vld [vmem:[%s7 + $0xc] sm:$0xf]
        %v4273 = vld [vmem:[%s7 + $0x10] sm:$0xf]
        %v4274 = vld [vmem:[%s7 + $0x14] sm:$0xf]
        %v4275 = vld [vmem:[%s7 + $0x18] sm:$0xf]
        %v4276 = vld [vmem:[%s7 + $0x1c] sm:$0xf]
        %v4277 = vld [vmem:[%s7 + $0x20] sm:$0xf]
        %v4278 = vld [vmem:[%s7 + $0x24] sm:$0xf]
        %v4279 = vld [vmem:[%s7 + $0x28] sm:$0xf]
        %v4280 = vld [vmem:[%s7 + $0x2c] sm:$0xf]
        %v4281 = vld [vmem:[%s7 + $0x30] sm:$0xf]
        %v4282 = vld [vmem:[%s7 + $0x34] sm:$0xf]
        %v4283 = vld [vmem:[%s7 + $0x38] sm:$0xf]
        %v4284 = vld [vmem:[%s7 + $0x3c] sm:$0xf]
        %v4285 = vld [vmem:[%s7 + $0x40] sm:$0xf]
        %v4286 = vld [vmem:[%s7 + $0x44] sm:$0xf]
        %v4287 = vld [vmem:[%s7 + $0x48] sm:$0xf]
        %v4288 = vld [vmem:[%s7 + $0x4c] sm:$0xf]
        %v4289 = vld [vmem:[%s7 + $0x50] sm:$0xf]
        %v4290 = vld [vmem:[%s7 + $0x54] sm:$0xf]
        %v4291 = vld [vmem:[%s7 + $0x58] sm:$0xf]
        %v4292 = vld [vmem:[%s7 + $0x5c] sm:$0xf]
        %v4293 = vld [vmem:[%s7 + $0x60] sm:$0xf]
        %v4294 = vld [vmem:[%s7 + $0x64] sm:$0xf]
        %v4295 = vld [vmem:[%s7 + $0x68] sm:$0xf]
        %v4296 = vld [vmem:[%s7 + $0x6c] sm:$0xf]
        %v4297 = vld [vmem:[%s7 + $0x70] sm:$0xf]
        %v4298 = vld [vmem:[%s7 + $0x74] sm:$0xf]
        %v4299 = vld [vmem:[%s7 + $0x78] sm:$0xf]
        %v4300 = vld [vmem:[%s7 + $0x7c] sm:$0xf]
        %v4301 = vld [vmem:[%s10] sm:$0x1]
        %v4334 = vunpack.c.l.b16 %v4269
        %v4335 = vunpack.c.l.b16 %v4270
        %v4336 = vunpack.c.l.b16 %v4271
        %v4337 = vunpack.c.l.b16 %v4272
        %v4338 = vunpack.c.l.b16 %v4273
        %v4339 = vunpack.c.l.b16 %v4274
        %v4340 = vunpack.c.l.b16 %v4275
        %v4341 = vunpack.c.l.b16 %v4276
        %v4342 = vunpack.c.l.b16 %v4277
        %v4343 = vunpack.c.l.b16 %v4278
        %v4344 = vunpack.c.l.b16 %v4279
        %v4345 = vunpack.c.l.b16 %v4280
        %v4346 = vunpack.c.l.b16 %v4281
        %v4347 = vunpack.c.l.b16 %v4282
        %v4348 = vunpack.c.l.b16 %v4283
        %v4349 = vunpack.c.l.b16 %v4284
        %v4350 = vunpack.c.l.b16 %v4285
        %v4351 = vunpack.c.l.b16 %v4286
        %v4352 = vunpack.c.l.b16 %v4287
        %v4353 = vunpack.c.l.b16 %v4288
        %v4354 = vunpack.c.l.b16 %v4289
        %v4355 = vunpack.c.l.b16 %v4290
        %v4356 = vunpack.c.l.b16 %v4291
        %v4357 = vunpack.c.l.b16 %v4292
        %v4358 = vunpack.c.l.b16 %v4293
        %v4359 = vunpack.c.l.b16 %v4294
        %v4360 = vunpack.c.l.b16 %v4295
        %v4361 = vunpack.c.l.b16 %v4296
        %v4362 = vunpack.c.l.b16 %v4297
        %v4363 = vunpack.c.l.b16 %v4298
        %v4364 = vunpack.c.l.b16 %v4299
        %v4365 = vunpack.c.l.b16 %v4300
        %v4366 = vpack.c.b16 %v4335, %v4334
        %v4367 = vpack.c.b16 %v4337, %v4336
        %v4368 = vpack.c.b16 %v4339, %v4338
        %v4369 = vpack.c.b16 %v4341, %v4340
        %v4370 = vpack.c.b16 %v4343, %v4342
        %v4371 = vpack.c.b16 %v4345, %v4344
        %v4372 = vpack.c.b16 %v4347, %v4346
        %v4373 = vpack.c.b16 %v4349, %v4348
        %v4374 = vpack.c.b16 %v4351, %v4350
        %v4375 = vpack.c.b16 %v4353, %v4352
        %v4376 = vpack.c.b16 %v4355, %v4354
        %v4377 = vpack.c.b16 %v4357, %v4356
        %v4378 = vpack.c.b16 %v4359, %v4358
        %v4379 = vpack.c.b16 %v4361, %v4360
        %v4380 = vpack.c.b16 %v4363, %v4362
        %v4381 = vpack.c.b16 %v4365, %v4364
        %4398 = vmatpush.bf16.msra.mxu0 %v4373
        %4399 = vmatpush.bf16.msra.mxu0 %v4372
        %4400 = vmatpush.bf16.msra.mxu0 %v4371
        %4401 = vmatpush.bf16.msra.mxu0 %v4370
        %4402 = vmatpush.bf16.msra.mxu0 %v4369
        %4403 = vmatpush.bf16.msra.mxu0 %v4368
        %4404 = vmatpush.bf16.msra.mxu0 %v4367
        %4405 = vmatpush.bf16.msra.mxu0 %v4366
        %4406 = vmatmul.bf16.gmra.mxu0 %v4267
        %v4407 = vpop.f32.mrf.mxu0
        %v4408 = vadd.f32 %v4301, %v4407
        %v4409 = vpop.f32.mrf.mxu0
        %4410 = vdwg.mxu0
        %4411 = vmatpush.bf16.msra.mxu0 %v4381
        %4412 = vmatpush.bf16.msra.mxu0 %v4380
        %4413 = vmatpush.bf16.msra.mxu0 %v4379
        %4414 = vmatpush.bf16.msra.mxu0 %v4378
        %4415 = vmatpush.bf16.msra.mxu0 %v4377
        %4416 = vmatpush.bf16.msra.mxu0 %v4376
        %4417 = vmatpush.bf16.msra.mxu0 %v4375
        %4418 = vmatpush.bf16.msra.mxu0 %v4374
        %4419 = vmatmul.bf16.gmra.mxu0 %v4268
        %v4420 = vpop.f32.mrf.mxu0
        %v4421 = vadd.f32 %v4408, %v4420
        %v4422 = vpop.f32.mrf.mxu0
        %4423 = vdwg.mxu0
        %v4424 = vld [vmem:[%s8] sm:$0xf]
        %v4425 = vld [vmem:[%s8 + $0x4] sm:$0xf]
        %v4426 = vld [vmem:[%s8 + $0x8] sm:$0xf]
        %v4427 = vld [vmem:[%s8 + $0xc] sm:$0xf]
        %v4428 = vld [vmem:[%s8 + $0x10] sm:$0xf]
        %v4429 = vld [vmem:[%s8 + $0x14] sm:$0xf]
        %v4430 = vld [vmem:[%s8 + $0x18] sm:$0xf]
        %v4431 = vld [vmem:[%s8 + $0x1c] sm:$0xf]
        %v4432 = vld [vmem:[%s8 + $0x20] sm:$0xf]
        %v4433 = vld [vmem:[%s8 + $0x24] sm:$0xf]
        %v4434 = vld [vmem:[%s8 + $0x28] sm:$0xf]
        %v4435 = vld [vmem:[%s8 + $0x2c] sm:$0xf]
        %v4436 = vld [vmem:[%s8 + $0x30] sm:$0xf]
        %v4437 = vld [vmem:[%s8 + $0x34] sm:$0xf]
        %v4438 = vld [vmem:[%s8 + $0x38] sm:$0xf]
        %v4439 = vld [vmem:[%s8 + $0x3c] sm:$0xf]
        %v4440 = vld [vmem:[%s8 + $0x40] sm:$0xf]
        %v4441 = vld [vmem:[%s8 + $0x44] sm:$0xf]
        %v4442 = vld [vmem:[%s8 + $0x48] sm:$0xf]
        %v4443 = vld [vmem:[%s8 + $0x4c] sm:$0xf]
        %v4444 = vld [vmem:[%s8 + $0x50] sm:$0xf]
        %v4445 = vld [vmem:[%s8 + $0x54] sm:$0xf]
        %v4446 = vld [vmem:[%s8 + $0x58] sm:$0xf]
        %v4447 = vld [vmem:[%s8 + $0x5c] sm:$0xf]
        %v4448 = vld [vmem:[%s8 + $0x60] sm:$0xf]
        %v4449 = vld [vmem:[%s8 + $0x64] sm:$0xf]
        %v4450 = vld [vmem:[%s8 + $0x68] sm:$0xf]
        %v4451 = vld [vmem:[%s8 + $0x6c] sm:$0xf]
        %v4452 = vld [vmem:[%s8 + $0x70] sm:$0xf]
        %v4453 = vld [vmem:[%s8 + $0x74] sm:$0xf]
        %v4454 = vld [vmem:[%s8 + $0x78] sm:$0xf]
        %v4455 = vld [vmem:[%s8 + $0x7c] sm:$0xf]
        %v4456 = vld [vmem:[%s11] sm:$0x1]
        %v4489 = vunpack.c.l.b16 %v4424
        %v4490 = vunpack.c.l.b16 %v4425
        %v4491 = vunpack.c.l.b16 %v4426
        %v4492 = vunpack.c.l.b16 %v4427
        %v4493 = vunpack.c.l.b16 %v4428
        %v4494 = vunpack.c.l.b16 %v4429
        %v4495 = vunpack.c.l.b16 %v4430
        %v4496 = vunpack.c.l.b16 %v4431
        %v4497 = vunpack.c.l.b16 %v4432
        %v4498 = vunpack.c.l.b16 %v4433
        %v4499 = vunpack.c.l.b16 %v4434
        %v4500 = vunpack.c.l.b16 %v4435
        %v4501 = vunpack.c.l.b16 %v4436
        %v4502 = vunpack.c.l.b16 %v4437
        %v4503 = vunpack.c.l.b16 %v4438
        %v4504 = vunpack.c.l.b16 %v4439
        %v4505 = vunpack.c.l.b16 %v4440
        %v4506 = vunpack.c.l.b16 %v4441
        %v4507 = vunpack.c.l.b16 %v4442
        %v4508 = vunpack.c.l.b16 %v4443
        %v4509 = vunpack.c.l.b16 %v4444
        %v4510 = vunpack.c.l.b16 %v4445
        %v4511 = vunpack.c.l.b16 %v4446
        %v4512 = vunpack.c.l.b16 %v4447
        %v4513 = vunpack.c.l.b16 %v4448
        %v4514 = vunpack.c.l.b16 %v4449
        %v4515 = vunpack.c.l.b16 %v4450
        %v4516 = vunpack.c.l.b16 %v4451
        %v4517 = vunpack.c.l.b16 %v4452
        %v4518 = vunpack.c.l.b16 %v4453
        %v4519 = vunpack.c.l.b16 %v4454
        %v4520 = vunpack.c.l.b16 %v4455
        %v4521 = vpack.c.b16 %v4490, %v4489
        %v4522 = vpack.c.b16 %v4492, %v4491
        %v4523 = vpack.c.b16 %v4494, %v4493
        %v4524 = vpack.c.b16 %v4496, %v4495
        %v4525 = vpack.c.b16 %v4498, %v4497
        %v4526 = vpack.c.b16 %v4500, %v4499
        %v4527 = vpack.c.b16 %v4502, %v4501
        %v4528 = vpack.c.b16 %v4504, %v4503
        %v4529 = vpack.c.b16 %v4506, %v4505
        %v4530 = vpack.c.b16 %v4508, %v4507
        %v4531 = vpack.c.b16 %v4510, %v4509
        %v4532 = vpack.c.b16 %v4512, %v4511
        %v4533 = vpack.c.b16 %v4514, %v4513
        %v4534 = vpack.c.b16 %v4516, %v4515
        %v4535 = vpack.c.b16 %v4518, %v4517
        %v4536 = vpack.c.b16 %v4520, %v4519
        %4553 = vmatpush.bf16.msra.mxu0 %v4528
        %4554 = vmatpush.bf16.msra.mxu0 %v4527
        %4555 = vmatpush.bf16.msra.mxu0 %v4526
        %4556 = vmatpush.bf16.msra.mxu0 %v4525
        %4557 = vmatpush.bf16.msra.mxu0 %v4524
        %4558 = vmatpush.bf16.msra.mxu0 %v4523
        %4559 = vmatpush.bf16.msra.mxu0 %v4522
        %4560 = vmatpush.bf16.msra.mxu0 %v4521
        %4561 = vmatmul.bf16.gmra.mxu0 %v4267
        %v4562 = vpop.f32.mrf.mxu0
        %v4563 = vadd.f32 %v4456, %v4562
        %v4564 = vpop.f32.mrf.mxu0
        %4565 = vdwg.mxu0
        %4566 = vmatpush.bf16.msra.mxu0 %v4536
        %4567 = vmatpush.bf16.msra.mxu0 %v4535
        %4568 = vmatpush.bf16.msra.mxu0 %v4534
        %4569 = vmatpush.bf16.msra.mxu0 %v4533
        %4570 = vmatpush.bf16.msra.mxu0 %v4532
        %4571 = vmatpush.bf16.msra.mxu0 %v4531
        %4572 = vmatpush.bf16.msra.mxu0 %v4530
        %4573 = vmatpush.bf16.msra.mxu0 %v4529
        %4574 = vmatmul.bf16.gmra.mxu0 %v4268
        %v4575 = vpop.f32.mrf.mxu0
        %v4576 = vadd.f32 %v4563, %v4575
        %v4577 = vpop.f32.mrf.mxu0
        %4578 = vdwg.mxu0
        %v4579 = vld [vmem:[%s9] sm:$0xf]
        %v4580 = vld [vmem:[%s9 + $0x4] sm:$0xf]
        %v4581 = vld [vmem:[%s9 + $0x8] sm:$0xf]
        %v4582 = vld [vmem:[%s9 + $0xc] sm:$0xf]
        %v4583 = vld [vmem:[%s9 + $0x10] sm:$0xf]
        %v4584 = vld [vmem:[%s9 + $0x14] sm:$0xf]
        %v4585 = vld [vmem:[%s9 + $0x18] sm:$0xf]
        %v4586 = vld [vmem:[%s9 + $0x1c] sm:$0xf]
        %v4587 = vld [vmem:[%s9 + $0x20] sm:$0xf]
        %v4588 = vld [vmem:[%s9 + $0x24] sm:$0xf]
        %v4589 = vld [vmem:[%s9 + $0x28] sm:$0xf]
        %v4590 = vld [vmem:[%s9 + $0x2c] sm:$0xf]
        %v4591 = vld [vmem:[%s9 + $0x30] sm:$0xf]
        %v4592 = vld [vmem:[%s9 + $0x34] sm:$0xf]
        %v4593 = vld [vmem:[%s9 + $0x38] sm:$0xf]
        %v4594 = vld [vmem:[%s9 + $0x3c] sm:$0xf]
        %v4595 = vld [vmem:[%s9 + $0x40] sm:$0xf]
        %v4596 = vld [vmem:[%s9 + $0x44] sm:$0xf]
        %v4597 = vld [vmem:[%s9 + $0x48] sm:$0xf]
        %v4598 = vld [vmem:[%s9 + $0x4c] sm:$0xf]
        %v4599 = vld [vmem:[%s9 + $0x50] sm:$0xf]
        %v4600 = vld [vmem:[%s9 + $0x54] sm:$0xf]
        %v4601 = vld [vmem:[%s9 + $0x58] sm:$0xf]
        %v4602 = vld [vmem:[%s9 + $0x5c] sm:$0xf]
        %v4603 = vld [vmem:[%s9 + $0x60] sm:$0xf]
        %v4604 = vld [vmem:[%s9 + $0x64] sm:$0xf]
        %v4605 = vld [vmem:[%s9 + $0x68] sm:$0xf]
        %v4606 = vld [vmem:[%s9 + $0x6c] sm:$0xf]
        %v4607 = vld [vmem:[%s9 + $0x70] sm:$0xf]
        %v4608 = vld [vmem:[%s9 + $0x74] sm:$0xf]
        %v4609 = vld [vmem:[%s9 + $0x78] sm:$0xf]
        %v4610 = vld [vmem:[%s9 + $0x7c] sm:$0xf]
        %v4611 = vld [vmem:[%s12] sm:$0x1]
        %v4644 = vunpack.c.l.b16 %v4579
        %v4645 = vunpack.c.l.b16 %v4580
        %v4646 = vunpack.c.l.b16 %v4581
        %v4647 = vunpack.c.l.b16 %v4582
        %v4648 = vunpack.c.l.b16 %v4583
        %v4649 = vunpack.c.l.b16 %v4584
        %v4650 = vunpack.c.l.b16 %v4585
        %v4651 = vunpack.c.l.b16 %v4586
        %v4652 = vunpack.c.l.b16 %v4587
        %v4653 = vunpack.c.l.b16 %v4588
        %v4654 = vunpack.c.l.b16 %v4589
        %v4655 = vunpack.c.l.b16 %v4590
        %v4656 = vunpack.c.l.b16 %v4591
        %v4657 = vunpack.c.l.b16 %v4592
        %v4658 = vunpack.c.l.b16 %v4593
        %v4659 = vunpack.c.l.b16 %v4594
        %v4660 = vunpack.c.l.b16 %v4595
        %v4661 = vunpack.c.l.b16 %v4596
        %v4662 = vunpack.c.l.b16 %v4597
        %v4663 = vunpack.c.l.b16 %v4598
        %v4664 = vunpack.c.l.b16 %v4599
        %v4665 = vunpack.c.l.b16 %v4600
        %v4666 = vunpack.c.l.b16 %v4601
        %v4667 = vunpack.c.l.b16 %v4602
        %v4668 = vunpack.c.l.b16 %v4603
        %v4669 = vunpack.c.l.b16 %v4604
        %v4670 = vunpack.c.l.b16 %v4605
        %v4671 = vunpack.c.l.b16 %v4606
        %v4672 = vunpack.c.l.b16 %v4607
        %v4673 = vunpack.c.l.b16 %v4608
        %v4674 = vunpack.c.l.b16 %v4609
        %v4675 = vunpack.c.l.b16 %v4610
        %v4676 = vpack.c.b16 %v4645, %v4644
        %v4677 = vpack.c.b16 %v4647, %v4646
        %v4678 = vpack.c.b16 %v4649, %v4648
        %v4679 = vpack.c.b16 %v4651, %v4650
        %v4680 = vpack.c.b16 %v4653, %v4652
        %v4681 = vpack.c.b16 %v4655, %v4654
        %v4682 = vpack.c.b16 %v4657, %v4656
        %v4683 = vpack.c.b16 %v4659, %v4658
        %v4684 = vpack.c.b16 %v4661, %v4660
        %v4685 = vpack.c.b16 %v4663, %v4662
        %v4686 = vpack.c.b16 %v4665, %v4664
        %v4687 = vpack.c.b16 %v4667, %v4666
        %v4688 = vpack.c.b16 %v4669, %v4668
        %v4689 = vpack.c.b16 %v4671, %v4670
        %v4690 = vpack.c.b16 %v4673, %v4672
        %v4691 = vpack.c.b16 %v4675, %v4674
        %4708 = vmatpush.bf16.msra.mxu0 %v4683
        %4709 = vmatpush.bf16.msra.mxu0 %v4682
        %4710 = vmatpush.bf16.msra.mxu0 %v4681
        %4711 = vmatpush.bf16.msra.mxu0 %v4680
        %4712 = vmatpush.bf16.msra.mxu0 %v4679
        %4713 = vmatpush.bf16.msra.mxu0 %v4678
        %4714 = vmatpush.bf16.msra.mxu0 %v4677
        %4715 = vmatpush.bf16.msra.mxu0 %v4676
        %4716 = vmatmul.bf16.gmra.mxu0 %v4267
        %v4717 = vpop.f32.mrf.mxu0
        %v4718 = vadd.f32 %v4611, %v4717
        %v4719 = vpop.f32.mrf.mxu0
        %4720 = vdwg.mxu0
        %4721 = vmatpush.bf16.msra.mxu0 %v4691
        %4722 = vmatpush.bf16.msra.mxu0 %v4690
        %4723 = vmatpush.bf16.msra.mxu0 %v4689
        %4724 = vmatpush.bf16.msra.mxu0 %v4688
        %4725 = vmatpush.bf16.msra.mxu0 %v4687
        %4726 = vmatpush.bf16.msra.mxu0 %v4686
        %4727 = vmatpush.bf16.msra.mxu0 %v4685
        %4728 = vmatpush.bf16.msra.mxu0 %v4684
        %4729 = vmatmul.bf16.gmra.mxu0 %v4268
        %v4730 = vpop.f32.mrf.mxu0
        %v4731 = vadd.f32 %v4718, %v4730
        %v4732 = vpop.f32.mrf.mxu0
        %4733 = vdwg.mxu0
        %v4734 = vxor.u32 %v4421, 2147483648
        %v4735 = vmul.f32 %v4734, 1.442695
        %v4736 = vpow.pop %v4735
        %v4737 = vadd.f32 %v4736, 1.0
        %v4738 = vrcp.pop %v4737
        %v4739 = vmul.f32 %v4737, %v4738
        %v4740 = vsub.f32 1.0, %v4739
        %v4741 = vmul.f32 %v4738, %v4740
        %v4742 = vadd.f32 %v4738, %v4741
        %vm4743 = vweird.f32 %v4737
        %vm4744 = vweird.f32 %v4738
        %vm4745 = vmor %vm4743, %vm4744
        %v4746 = vsel %vm4745, %v4738, %v4742
        %v4747 = vand.u32 2147483647, %v4737
        %vm4748 = vcmp.eq.f32.partialorder %v4747, 8.507059e+37
        %v4749 = vand.u32 %v4737, 2147483648
        %v4750 = vor.u32 1.1754944e-38, %v4749
        %v4751 = vsel %vm4748, %v4750, %v4746
        %v4752 = vmul.f32 1.0, %v4751
        %v4753 = vtanh.pop %v4576
        %v4754 = vmul.f32 %v4752, %v4753
        %v4755 = vxor.u32 %v4731, 2147483648
        %v4756 = vmul.f32 %v4755, 1.442695
        %v4757 = vpow.pop %v4756
        %v4758 = vadd.f32 %v4757, 1.0
        %v4759 = vrcp.pop %v4758
        %v4760 = vmul.f32 %v4758, %v4759
        %v4761 = vsub.f32 1.0, %v4760
        %v4762 = vmul.f32 %v4759, %v4761
        %v4763 = vadd.f32 %v4759, %v4762
        %vm4764 = vweird.f32 %v4758
        %vm4765 = vweird.f32 %v4759
        %vm4766 = vmor %vm4764, %vm4765
        %v4767 = vsel %vm4766, %v4759, %v4763
        %v4768 = vand.u32 2147483647, %v4758
        %vm4769 = vcmp.eq.f32.partialorder %v4768, 8.507059e+37
        %v4770 = vand.u32 %v4758, 2147483648
        %v4771 = vor.u32 1.1754944e-38, %v4770
        %v4772 = vsel %vm4769, %v4771, %v4767
        %v4773 = vmul.f32 1.0, %v4772
        %v4774 = vtanh.pop %v4754
        %v4775 = vmul.f32 %v4773, %v4774
        %v4776 = vpack.c.bf16 %v4775, %v4775
        %v4777 = vld [vmem:[%s13] sm:$0xf]
        %v4778 = vld [vmem:[%s13 + $0x4] sm:$0xf]
        %v4779 = vld [vmem:[%s13 + $0x8] sm:$0xf]
        %v4780 = vld [vmem:[%s13 + $0xc] sm:$0xf]
        %v4785 = vunpack.c.l.b16 %v4777
        %v4786 = vunpack.c.l.b16 %v4778
        %v4787 = vunpack.c.l.b16 %v4779
        %v4788 = vunpack.c.l.b16 %v4780
        %v4789 = vpack.c.b16 %v4786, %v4785
        %v4790 = vpack.c.b16 %v4788, %v4787
        %vm4793 = vcmask 261120
        %v4795 = vsel %vm4793, %v4776, 0
        %4797 = vmatpush.bf16.msra.mxu0 0
        %4798 = vmatpush.bf16.msra.mxu0 0
        %4799 = vmatpush.bf16.msra.mxu0 0
        %4800 = vmatpush.bf16.msra.mxu0 0
        %4801 = vmatpush.bf16.msra.mxu0 0
        %4802 = vmatpush.bf16.msra.mxu0 0
        %4803 = vmatpush.bf16.msra.mxu0 %v4790
        %4804 = vmatpush.bf16.msra.mxu0 %v4789
        %4805 = vmatmul.bf16.gmra.mxu0 %v4795
        %v4806 = vpop.f32.mrf.mxu0
        %v4807 = vadd.f32 0.0, %v4806
        %v4808 = vpop.f32.mrf.mxu0
        %4809 = vdwg.mxu0
        %v4810 = vld [vmem:[%s14] sm:$0x1]
        %v4811 = vmul.f32 %v4807, %v4810
        %v4812 = vld [vmem:[%s15] sm:$0x1]
        %v4813 = vadd.f32 %v4811, %v4812
        %vm4814 = vcmp.ge.f32.partialorder %v4813, 0.0
        %v4815 = vmul.f32 %v4813, 0.01
        %v4816 = vsel %vm4814, %v4813, %v4815
        %v4817 = vpack.c.bf16 %v4816, %v4816
        %v4818 = vld [vmem:[%s16] sm:$0xf]
        %v4819 = vld [vmem:[%s16 + $0x4] sm:$0xf]
        %v4820 = vld [vmem:[%s16 + $0x8] sm:$0xf]
        %v4821 = vld [vmem:[%s16 + $0xc] sm:$0xf]
        %v4822 = vld [vmem:[%s17] sm:$0x1]
        %v4827 = vunpack.c.l.b16 %v4818
        %v4828 = vunpack.c.l.b16 %v4819
        %v4829 = vunpack.c.l.b16 %v4820
        %v4830 = vunpack.c.l.b16 %v4821
        %v4831 = vpack.c.b16 %v4828, %v4827
        %v4832 = vpack.c.b16 %v4830, %v4829
        %v4836 = vsel %vm4793, %v4817, 0
        %4838 = vmatpush.bf16.msra.mxu0 0
        %4839 = vmatpush.bf16.msra.mxu0 0
        %4840 = vmatpush.bf16.msra.mxu0 0
        %4841 = vmatpush.bf16.msra.mxu0 0
        %4842 = vmatpush.bf16.msra.mxu0 0
        %4843 = vmatpush.bf16.msra.mxu0 0
        %4844 = vmatpush.bf16.msra.mxu0 %v4832
        %4845 = vmatpush.bf16.msra.mxu0 %v4831
        %4846 = vmatmul.bf16.gmra.mxu0 %v4836
        %v4847 = vpop.f32.mrf.mxu0
        %v4848 = vadd.f32 %v4822, %v4847
        %v4849 = vpop.f32.mrf.mxu0
        %4850 = vdwg.mxu0
        %vm4851 = vcmask 73728
        %v4852 = vsel %vm4851, %v4848, -inf
        %4853 = vmax.xlane.f32.xlu0 %v4852
        %v4854 = vpop.xlane.xlu0 %4853
        %v4855 = vsub.f32 %v4848, %v4854
        %v4856 = vmul.f32 %v4855, 1.442695
        %v4857 = vpow.pop %v4856
        %v4858 = vsel %vm4851, %v4857, 0.0
        %4859 = vadd.xlane.f32.xlu0 %v4858
        %v4860 = vpop.xlane.xlu0 %4859
        %v4861 = vlog2.pop %v4860
        %v4862 = vmul.f32 %v4861, 0.6931472
        %v4863 = vsub.f32 %v4855, %v4862
        %4864 = vst.msk [vmem:[%s568] sm:$0x1] %vm4851, %v4863
        %s4865 = sand.u32 %s423, 1
        %s4866 = scalar_lea.sflag [#allocation7], %s4865
        %s4867 = sand.u32 %s423, 1
        %s4868 = scalar_lea.vmem [#allocation6], %s4867
        // Predicated region
        $region93: #{forward.1} parent=91 // pred_check
          %p4869 = pneg %p433
        $region94: #{forward.1} parent=91 // pred_check_branch
          %4871 = sbr.rel (%p4869) target = $region96
        $region95: #{forward.1} parent=91 // pred_region
          %4873 = vsyncadd %s4866, 0
          %s4874 = scalar_lea.hbm %s18, %s32
          %s4876 = sshll.u32 %s4868, 4
          %s4877 = int_to_ptr.vmem [resolvable:$true] %s4876
          %s4878 = sshll.u32 %s4874, 4
          %s4879 = int_to_ptr.hbm [resolvable:$true] %s4878
          %4881 = dma.vmem_to_hbm [thread:$0]  %s4877, 16, %s4879, %s4866
        $region96: #{forward.1} parent=91 // pred_fallthru
          _
      $region92: #{forward.1} parent=5 // pred_fallthru
        _
      %p4882 = scmp.le.s32.totalorder 2, %s27
      // Predicated region
      $region97: #{forward.1} parent=5 // pred_check
        %p4883 = pneg %p4882
      $region98: #{forward.1} parent=5 // pred_check_branch
        %4885 = sbr.rel (%p4883) target = $region100
      $region99: #{forward.1} parent=5 // pred_region
        %s4886 = ssub.s32 %s27, 2
        // Predicated region
        $region101: #{forward.1} parent=99 // pred_check
          %p4887 = pneg %p439
        $region102: #{forward.1} parent=99 // pred_check_branch
          %4889 = sbr.rel (%p4887) target = $region104
        $region103: #{forward.1} parent=99 // pred_region
          %s4890 = sand.u32 %s424, 1
          %s4891 = scalar_lea.sflag [#allocation7], %s4890
          %s4892 = sand.u32 %s424, 1
          %s4893 = scalar_lea.vmem [#allocation6], %s4892
          %4895 = dma.done %s4891, 16
        $region104: #{forward.1} parent=99 // pred_fallthru
          _
      $region100: #{forward.1} parent=5 // pred_fallthru
        _
    $region6: #{forward.1} parent=1 // loop_footer
      %s31 = sadd.s32 1, %s27
    $region7: #{forward.1} parent=1 // loop_footer_branch
      %26 = sbr.rel target = $region3
    $region8: #{forward.1} parent=1 // loop_exit
      _
    %4896 = vsyncpa [#allocation7], 1
    %s4897 = scalar_lea.sflag [#allocation7], 1
    %4898 = vsyncpa %s4897, 1

</llo_original>
